<compile_context>
chip_gen: v7x
topology: tpu7x:2x2x1
jax: 0.10.0
libtpu: 0.0.40
codegen_flags: <defaults>
</compile_context>

<pallas_src>
import jax
import jax.numpy as jnp
from jax import lax
from jax.experimental import pallas as pl
from jax.experimental.pallas import tpu as pltpu

SCALE_WEIGHT = 0.5 ** 0.5
WIDTH = 3  # cnn_kernel_width


def stacked_gated_conv_kernel(x_ref, w_ref, b_ref, o_ref, xpad_s):
    """Fused stack of GatedConv residual blocks on one (bb, H, C) activation block.

    x_ref : (bb, H, C)    f32   activation block
    w_ref : (L, 3C, 2C)   bf16  per-layer conv weights, taps concatenated along K,
                                out|gate fused along the N (lane) axis
    b_ref : (L, 1, 2C)    f32   per-layer bias
    o_ref : (bb, H, C)    f32   output block
    xpad_s: (bb, H+2, C)  bf16  scratch holding the H-padded activation (zero halo)
    """
    bb, H, C = x_ref.shape
    L = w_ref.shape[0]

    # Conv2d padding=(1, 0) along H: only the two halo rows need zeroing; the body
    # rows (1..H) are overwritten every layer.
    zero_row = jnp.zeros((bb, 1, C), xpad_s.dtype)
    xpad_s[:, 0:1, :] = zero_row
    xpad_s[:, H + 1:H + 2, :] = zero_row

    def layer(l, x):
        # Cast to bf16 once, before the shifted views (halves im2col copy bytes).
        x_bf = x.astype(jnp.bfloat16)
        xpad_s[:, 1:H + 1, :] = x_bf
        # im2col along H: lane-concat the 3 shifted views -> single K = 3C matmul.
        xcat = jnp.concatenate(
            [xpad_s[:, 0:H, :], x_bf, xpad_s[:, 2:H + 2, :]], axis=-1
        ).reshape(bb * H, WIDTH * C)
        # Fused out|gate matmul: bf16 inputs, f32 accumulation on the MXU.
        acc = jnp.dot(xcat, w_ref[l], preferred_element_type=jnp.float32) + b_ref[l]
        gated = (acc[:, :C] * jax.nn.sigmoid(acc[:, C:])).reshape(bb, H, C)
        return (x + gated) * SCALE_WEIGHT  # residual + sqrt(0.5) scale, in f32

    x = x_ref[...].astype(jnp.float32)
    if L <= 4:
        for l in range(L):                 # short stacks: unrolled (LLO visibility)
            x = layer(l, x)
    else:
        x = lax.fori_loop(0, L, layer, x)  # deep stacks: bound vreg live ranges

    o_ref[...] = x.astype(o_ref.dtype)


# --------------------------------------------------------------------------- tiling


def _ru(x, m):
    return -(-x // m) * m


def _vmem_bytes_estimate(bb, H, C, L):
    """Honest per-grid-step VMEM footprint (with (8,128) tile padding)."""
    Cp, C2p, C3p = _ru(C, 128), _ru(2 * C, 128), _ru(3 * C, 128)
    Hp, Hp2 = _ru(H, 8), _ru(H + 2, 8)
    bhc_f32 = bb * Hp * Cp * 4
    bhc_bf16 = bb * Hp * Cp * 2
    io = 2 * 2 * bhc_f32                       # double-buffered input + output blocks
    scratch = bb * Hp2 * Cp * 2                # bf16 halo scratch
    work = (bhc_f32                            # resident f32 activation (residual)
            + bhc_bf16                         # bf16 cast of the activation
            + bb * Hp * C3p * 2                # im2col (bb*H, 3C) bf16
            + bb * Hp * C2p * 4                # f32 matmul accumulator (bb*H, 2C)
            + 2 * bhc_f32)                     # gating / residual temporaries
    weights = 2 * L * (_ru(WIDTH * C, 8) * C2p * 2 + 8 * C2p * 4)  # double-buffered
    return io + scratch + work + weights


def _vmem_capacity_bytes():
    try:
        return int(pltpu.get_tpu_info().vmem_capacity_bytes)
    except Exception:
        return 64 << 20  # conservative default (v7x per-TensorCore VMEM)


def _num_tensorcores():
    try:
        return max(1, int(getattr(jax.devices()[0], "num_cores", 1)))
    except Exception:
        return 1


def _choose_bb(B, H, C, L, budget_bytes, prefer_steps=1):
    """Largest divisor of B whose honest VMEM footprint fits the budget; prefer a
    step count that is a multiple of the TensorCore count when that costs < 2x in
    block size (v7x); otherwise take the single largest block (v5e/v6e)."""
    divs = [d for d in range(1, B + 1) if B % d == 0]
    fits = [d for d in divs if _vmem_bytes_estimate(d, H, C, L) <= budget_bytes]
    if not fits:
        return 1
    best = max(fits)
    if prefer_steps > 1:
        balanced = [d for d in fits if (B // d) % prefer_steps == 0]
        if balanced and 2 * max(balanced) >= best:
            best = max(balanced)
    return best


# ------------------------------------------------------------------------- wrappers


def pack_params(weights_pt, biases_pt):
    """PyTorch conv params -> fused kernel params.

    weights_pt[l]: (2C, C, WIDTH); biases_pt[l]: (2C,).
    Returns w (L, WIDTH*C, 2C) bf16 with w[l, k*C + c, o] = weights_pt[l][o, c, k]
    and b (L, 1, 2C) f32.  Out|gate stay fused along the last (lane) axis.
    """
    C = weights_pt[0].shape[1]
    w = jnp.stack([jnp.transpose(w_pt, (2, 1, 0)).reshape(WIDTH * C, 2 * C)
                   for w_pt in weights_pt]).astype(jnp.bfloat16)
    b = jnp.stack([b_pt.reshape(1, 2 * C) for b_pt in biases_pt]).astype(jnp.float32)
    return w, b


def stacked_cnn_forward_bhc(x_bhc, w, b, *, bb=None):
    """Core forward on activations already laid out as (B, H, C)."""
    B, H, C = x_bhc.shape
    L = w.shape[0]

    vmem_cap = _vmem_capacity_bytes()
    if bb is None:
        bb = _choose_bb(B, H, C, L, budget_bytes=(vmem_cap * 7) // 10,
                        prefer_steps=_num_tensorcores())
    assert B % bb == 0, (B, bb)

    est = _vmem_bytes_estimate(bb, H, C, L)
    vmem_limit = int(min((vmem_cap * 9) // 10, max(3 * est // 2, 32 << 20)))

    return pl.pallas_call(
        stacked_gated_conv_kernel,
        out_shape=jax.ShapeDtypeStruct((B, H, C), x_bhc.dtype),
        grid_spec=pltpu.PrefetchScalarGridSpec(
            num_scalar_prefetch=0,
            grid=(B // bb,),
            in_specs=[
                pl.BlockSpec((bb, H, C), lambda i: (i, 0, 0)),
                pl.BlockSpec((L, WIDTH * C, 2 * C), lambda i: (0, 0, 0)),
                pl.BlockSpec((L, 1, 2 * C), lambda i: (0, 0, 0)),
            ],
            out_specs=pl.BlockSpec((bb, H, C), lambda i: (i, 0, 0)),
            scratch_shapes=[pltpu.VMEM((bb, H + 2, C), jnp.bfloat16)],
        ),
        compiler_params=pltpu.CompilerParams(
            dimension_semantics=("parallel",),
            vmem_limit_bytes=vmem_limit,
        ),
    )(x_bhc, w, b)


def stacked_cnn_forward(x_nchw, weights_pt, biases_pt, *, bb=None):
    """StackedCNN.forward for PyTorch-layout NCHW input."""
    N, C, H, W = x_nchw.shape
    # NCHW -> (N, W, H, C) -> (B = N*W, H, C): each W column is an independent 1-D conv.
    x = jnp.transpose(x_nchw, (0, 3, 2, 1)).reshape(N * W, H, C)
    w, b = pack_params(weights_pt, biases_pt)
    out = stacked_cnn_forward_bhc(x, w, b, bb=bb)
    return jnp.transpose(out.reshape(N, W, H, C), (0, 3, 2, 1))


# ------------------------------------------------------------------ init & reference


def init_params(key, num_layers, C, width=WIDTH, dropout=0.2):
    # Mirrors GatedConv.__init__: conv weight (2C, C, width[, 1]) xavier_uniform with
    # gain sqrt(4*(1-dropout)); bias uniform(+-1/sqrt(fan_in)). (Trailing kernel dim of
    # size 1 is dropped.)
    gain = (4.0 * (1.0 - dropout)) ** 0.5
    fan_in = C * width
    fan_out = 2 * C * width
    w_bound = gain * (6.0 / (fan_in + fan_out)) ** 0.5
    b_bound = 1.0 / (fan_in ** 0.5)
    weights, biases = [], []
    for l in range(num_layers):
        kw, kb = jax.random.split(jax.random.fold_in(key, l))
        w = jax.random.uniform(kw, (2 * C, C, width), jnp.float32, -w_bound, w_bound)
        b = jax.random.uniform(kb, (2 * C,), jnp.float32, -b_bound, b_bound)
        weights.append(w)
        biases.append(b)
    return weights, biases


def reference_forward(x_nchw, weights_pt, biases_pt, *, matmul_dtype=jnp.float32):
    # Pure-JAX reference of the same math: Conv2d kernel (3,1), padding (1,0), GLU,
    # residual, sqrt(0.5) scale. matmul_dtype=bf16 matches the kernel's MXU precision.
    N, C, H, W = x_nchw.shape
    x = jnp.transpose(x_nchw, (0, 3, 2, 1)).reshape(N * W, H, C)
    for w_pt, b_pt in zip(weights_pt, biases_pt):
        wcat = jnp.transpose(w_pt, (2, 1, 0)).reshape(WIDTH * C, 2 * C).astype(matmul_dtype)
        xp = jnp.pad(x, ((0, 0), (1, 1), (0, 0)))
        xcat = jnp.concatenate(
            [xp[:, k:k + H, :] for k in range(WIDTH)], axis=-1
        ).astype(matmul_dtype)
        acc = jnp.einsum("bhk,ko->bho", xcat, wcat,
                         preferred_element_type=jnp.float32) + b_pt.reshape(1, 1, 2 * C)
        out, gate = acc[..., :C], acc[..., C:]
        x = (x + out * jax.nn.sigmoid(gate)) * SCALE_WEIGHT
    return jnp.transpose(x.reshape(N, W, H, C), (0, 3, 2, 1))


if __name__ == "__main__":
    key = jax.random.PRNGKey(0)
    N, C, H, W = 2, 32, 16, 8   # input_size = 32
    num_layers = 3

    x = jax.random.normal(jax.random.fold_in(key, 123), (N, C, H, W), jnp.float32)
    weights, biases = init_params(key, num_layers, C)

    out = jax.block_until_ready(stacked_cnn_forward(x, weights, biases))
    assert out.shape == x.shape and out.dtype == x.dtype

    # Definitive check vs a reference that applies the same bf16 matmul-input cast.
    ref_bf16 = reference_forward(x, weights, biases, matmul_dtype=jnp.bfloat16)
    assert jnp.allclose(out, ref_bf16, atol=2e-3, rtol=2e-3), "mismatch vs bf16-matched reference"

    # Looser sanity check vs the full-f32 reference (bf16 matmul inputs differ slightly).
    ref_f32 = reference_forward(x, weights, biases, matmul_dtype=jnp.float32)
    assert jnp.allclose(out, ref_f32, atol=5e-2, rtol=5e-2), "mismatch vs f32 reference"

    print("KERNEL_OK")
</pallas_src>

<mosaic_0001>
module attributes {stable_mosaic.version = 11 : i64} {
  func.func @stacked_gated_conv_kernel(%arg0: i32, %arg1: memref<16x16x32xf32, #tpu.memory_space<vmem>>, %arg2: memref<3x96x64xbf16, #tpu.memory_space<vmem>>, %arg3: memref<3x1x64xf32, #tpu.memory_space<vmem>>, %arg4: memref<16x16x32xf32, #tpu.memory_space<vmem>>, %arg5: memref<16x18x32xbf16, #tpu.memory_space<vmem>>) attributes {dimension_semantics = [#tpu.dimension_semantics<parallel>], iteration_bounds = array<i64: 1>, scalar_prefetch = 0 : i64, scratch_operands = 1 : i64, tpu.core_type = #tpu.core_type<tc>, window_params = [{transform_indices = @transform_0, window_bounds = array<i64: 16, 16, 32>}, {pipeline_mode = #tpu.pipeline_mode<synchronous>, transform_indices = @transform_1, window_bounds = array<i64: 3, 96, 64>}, {pipeline_mode = #tpu.pipeline_mode<synchronous>, transform_indices = @transform_2, window_bounds = array<i64: 3, 1, 64>}, {transform_indices = @transform_3, window_bounds = array<i64: 16, 16, 32>}]} {
    %cst = arith.constant 0.000000e+00 : bf16
    %0 = vector.broadcast %cst : bf16 to vector<16x1x32xbf16>
    %c0 = arith.constant 0 : index
    %c0_0 = arith.constant 0 : index
    %c0_1 = arith.constant 0 : index
    %1 = vector.load %arg5[%c0, %c0_0, %c0_1] : memref<16x18x32xbf16, #tpu.memory_space<vmem>>, vector<16x1x32xbf16>
    tpu.vector_store %arg5[%c0, %c0_0, %c0_1], %0 {strides = array<i32>} : memref<16x18x32xbf16, #tpu.memory_space<vmem>>, vector<16x1x32xbf16>,
    %c0_2 = arith.constant 0 : index
    %c17 = arith.constant 17 : index
    %c0_3 = arith.constant 0 : index
    %2 = vector.load %arg5[%c0_2, %c17, %c0_3] : memref<16x18x32xbf16, #tpu.memory_space<vmem>>, vector<16x1x32xbf16>
    tpu.vector_store %arg5[%c0_2, %c17, %c0_3], %0 {strides = array<i32>} : memref<16x18x32xbf16, #tpu.memory_space<vmem>>, vector<16x1x32xbf16>,
    %c0_4 = arith.constant 0 : index
    %c0_5 = arith.constant 0 : index
    %c0_6 = arith.constant 0 : index
    %3 = vector.load %arg1[%c0_4, %c0_5, %c0_6] : memref<16x16x32xf32, #tpu.memory_space<vmem>>, vector<16x16x32xf32>
    %4 = arith.truncf %3 : vector<16x16x32xf32> to vector<16x16x32xbf16>
    %c0_7 = arith.constant 0 : index
    %c1 = arith.constant 1 : index
    %c0_8 = arith.constant 0 : index
    %5 = vector.load %arg5[%c0_7, %c1, %c0_8] : memref<16x18x32xbf16, #tpu.memory_space<vmem>>, vector<16x16x32xbf16>
    tpu.vector_store %arg5[%c0_7, %c1, %c0_8], %4 {strides = array<i32>} : memref<16x18x32xbf16, #tpu.memory_space<vmem>>, vector<16x16x32xbf16>,
    %c0_9 = arith.constant 0 : index
    %c0_10 = arith.constant 0 : index
    %c0_11 = arith.constant 0 : index
    %6 = vector.load %arg5[%c0_9, %c0_10, %c0_11] : memref<16x18x32xbf16, #tpu.memory_space<vmem>>, vector<16x16x32xbf16>
    %c0_12 = arith.constant 0 : index
    %c2 = arith.constant 2 : index
    %c0_13 = arith.constant 0 : index
    %7 = vector.load %arg5[%c0_12, %c2, %c0_13] : memref<16x18x32xbf16, #tpu.memory_space<vmem>>, vector<16x16x32xbf16>
    %8 = tpu.concatenate %6, %4, %7 in 2 : vector<16x16x32xbf16>, vector<16x16x32xbf16>, vector<16x16x32xbf16> -> vector<16x16x96xbf16>
    %9 = vector.shape_cast %8 : vector<16x16x96xbf16> to vector<256x96xbf16>
    %c0_14 = arith.constant 0 : index
    %c0_15 = arith.constant 0 : index
    %c0_16 = arith.constant 0 : index
    %10 = vector.load %arg2[%c0_14, %c0_15, %c0_16] : memref<3x96x64xbf16, #tpu.memory_space<vmem>>, vector<1x96x64xbf16>
    %11 = vector.shape_cast %10 : vector<1x96x64xbf16> to vector<96x64xbf16>
    %cst_17 = arith.constant dense<0.000000e+00> : vector<256x64xf32>
    %12 = tpu.matmul %9, %11, %cst_17 {dimension_numbers = #tpu.dot_dimension_numbers<[1], [0], [0], [1], [0, 0, 1, 1], [], []>} : vector<256x96xbf16>, vector<96x64xbf16>, vector<256x64xf32> -> vector<256x64xf32>
    %c0_18 = arith.constant 0 : index
    %c0_19 = arith.constant 0 : index
    %c0_20 = arith.constant 0 : index
    %13 = vector.load %arg3[%c0_18, %c0_19, %c0_20] : memref<3x1x64xf32, #tpu.memory_space<vmem>>, vector<1x1x64xf32>
    %14 = vector.shape_cast %13 : vector<1x1x64xf32> to vector<1x64xf32>
    %15 = vector.broadcast %14 : vector<1x64xf32> to vector<256x64xf32>
    %16 = arith.addf %12, %15 : vector<256x64xf32>
    %17 = vector.extract_strided_slice %16 {offsets = [0, 0], sizes = [256, 32], strides = [1, 1]} : vector<256x64xf32> to vector<256x32xf32>
    %18 = vector.extract_strided_slice %16 {offsets = [0, 32], sizes = [256, 32], strides = [1, 1]} : vector<256x64xf32> to vector<256x32xf32>
    %19 = arith.negf %18 : vector<256x32xf32>
    %20 = math.exp %19 : vector<256x32xf32>
    %cst_21 = arith.constant 1.000000e+00 : f32
    %21 = vector.broadcast %cst_21 : f32 to vector<256x32xf32>
    %22 = arith.addf %21, %20 : vector<256x32xf32>
    %23 = arith.divf %21, %22 : vector<256x32xf32>
    %24 = arith.mulf %17, %23 : vector<256x32xf32>
    %25 = vector.shape_cast %24 : vector<256x32xf32> to vector<16x16x32xf32>
    %26 = arith.addf %3, %25 : vector<16x16x32xf32>
    %cst_22 = arith.constant 0.707106769 : f32
    %27 = vector.broadcast %cst_22 : f32 to vector<16x16x32xf32>
    %28 = arith.mulf %26, %27 : vector<16x16x32xf32>
    %29 = arith.truncf %28 : vector<16x16x32xf32> to vector<16x16x32xbf16>
    %c0_23 = arith.constant 0 : index
    %c1_24 = arith.constant 1 : index
    %c0_25 = arith.constant 0 : index
    %30 = vector.load %arg5[%c0_23, %c1_24, %c0_25] : memref<16x18x32xbf16, #tpu.memory_space<vmem>>, vector<16x16x32xbf16>
    tpu.vector_store %arg5[%c0_23, %c1_24, %c0_25], %29 {strides = array<i32>} : memref<16x18x32xbf16, #tpu.memory_space<vmem>>, vector<16x16x32xbf16>,
    %c0_26 = arith.constant 0 : index
    %c0_27 = arith.constant 0 : index
    %c0_28 = arith.constant 0 : index
    %31 = vector.load %arg5[%c0_26, %c0_27, %c0_28] : memref<16x18x32xbf16, #tpu.memory_space<vmem>>, vector<16x16x32xbf16>
    %c0_29 = arith.constant 0 : index
    %c2_30 = arith.constant 2 : index
    %c0_31 = arith.constant 0 : index
    %32 = vector.load %arg5[%c0_29, %c2_30, %c0_31] : memref<16x18x32xbf16, #tpu.memory_space<vmem>>, vector<16x16x32xbf16>
    %33 = tpu.concatenate %31, %29, %32 in 2 : vector<16x16x32xbf16>, vector<16x16x32xbf16>, vector<16x16x32xbf16> -> vector<16x16x96xbf16>
    %34 = vector.shape_cast %33 : vector<16x16x96xbf16> to vector<256x96xbf16>
    %c1_32 = arith.constant 1 : index
    %c0_33 = arith.constant 0 : index
    %c0_34 = arith.constant 0 : index
    %35 = vector.load %arg2[%c1_32, %c0_33, %c0_34] : memref<3x96x64xbf16, #tpu.memory_space<vmem>>, vector<1x96x64xbf16>
    %36 = vector.shape_cast %35 : vector<1x96x64xbf16> to vector<96x64xbf16>
    %cst_35 = arith.constant dense<0.000000e+00> : vector<256x64xf32>
    %37 = tpu.matmul %34, %36, %cst_35 {dimension_numbers = #tpu.dot_dimension_numbers<[1], [0], [0], [1], [0, 0, 1, 1], [], []>} : vector<256x96xbf16>, vector<96x64xbf16>, vector<256x64xf32> -> vector<256x64xf32>
    %c1_36 = arith.constant 1 : index
    %c0_37 = arith.constant 0 : index
    %c0_38 = arith.constant 0 : index
    %38 = vector.load %arg3[%c1_36, %c0_37, %c0_38] : memref<3x1x64xf32, #tpu.memory_space<vmem>>, vector<1x1x64xf32>
    %39 = vector.shape_cast %38 : vector<1x1x64xf32> to vector<1x64xf32>
    %40 = vector.broadcast %39 : vector<1x64xf32> to vector<256x64xf32>
    %41 = arith.addf %37, %40 : vector<256x64xf32>
    %42 = vector.extract_strided_slice %41 {offsets = [0, 0], sizes = [256, 32], strides = [1, 1]} : vector<256x64xf32> to vector<256x32xf32>
    %43 = vector.extract_strided_slice %41 {offsets = [0, 32], sizes = [256, 32], strides = [1, 1]} : vector<256x64xf32> to vector<256x32xf32>
    %44 = arith.negf %43 : vector<256x32xf32>
    %45 = math.exp %44 : vector<256x32xf32>
    %cst_39 = arith.constant 1.000000e+00 : f32
    %46 = vector.broadcast %cst_39 : f32 to vector<256x32xf32>
    %47 = arith.addf %46, %45 : vector<256x32xf32>
    %48 = arith.divf %46, %47 : vector<256x32xf32>
    %49 = arith.mulf %42, %48 : vector<256x32xf32>
    %50 = vector.shape_cast %49 : vector<256x32xf32> to vector<16x16x32xf32>
    %51 = arith.addf %28, %50 : vector<16x16x32xf32>
    %cst_40 = arith.constant 0.707106769 : f32
    %52 = vector.broadcast %cst_40 : f32 to vector<16x16x32xf32>
    %53 = arith.mulf %51, %52 : vector<16x16x32xf32>
    %54 = arith.truncf %53 : vector<16x16x32xf32> to vector<16x16x32xbf16>
    %c0_41 = arith.constant 0 : index
    %c1_42 = arith.constant 1 : index
    %c0_43 = arith.constant 0 : index
    %55 = vector.load %arg5[%c0_41, %c1_42, %c0_43] : memref<16x18x32xbf16, #tpu.memory_space<vmem>>, vector<16x16x32xbf16>
    tpu.vector_store %arg5[%c0_41, %c1_42, %c0_43], %54 {strides = array<i32>} : memref<16x18x32xbf16, #tpu.memory_space<vmem>>, vector<16x16x32xbf16>,
    %c0_44 = arith.constant 0 : index
    %c0_45 = arith.constant 0 : index
    %c0_46 = arith.constant 0 : index
    %56 = vector.load %arg5[%c0_44, %c0_45, %c0_46] : memref<16x18x32xbf16, #tpu.memory_space<vmem>>, vector<16x16x32xbf16>
    %c0_47 = arith.constant 0 : index
    %c2_48 = arith.constant 2 : index
    %c0_49 = arith.constant 0 : index
    %57 = vector.load %arg5[%c0_47, %c2_48, %c0_49] : memref<16x18x32xbf16, #tpu.memory_space<vmem>>, vector<16x16x32xbf16>
    %58 = tpu.concatenate %56, %54, %57 in 2 : vector<16x16x32xbf16>, vector<16x16x32xbf16>, vector<16x16x32xbf16> -> vector<16x16x96xbf16>
    %59 = vector.shape_cast %58 : vector<16x16x96xbf16> to vector<256x96xbf16>
    %c2_50 = arith.constant 2 : index
    %c0_51 = arith.constant 0 : index
    %c0_52 = arith.constant 0 : index
    %60 = vector.load %arg2[%c2_50, %c0_51, %c0_52] : memref<3x96x64xbf16, #tpu.memory_space<vmem>>, vector<1x96x64xbf16>
    %61 = vector.shape_cast %60 : vector<1x96x64xbf16> to vector<96x64xbf16>
    %cst_53 = arith.constant dense<0.000000e+00> : vector<256x64xf32>
    %62 = tpu.matmul %59, %61, %cst_53 {dimension_numbers = #tpu.dot_dimension_numbers<[1], [0], [0], [1], [0, 0, 1, 1], [], []>} : vector<256x96xbf16>, vector<96x64xbf16>, vector<256x64xf32> -> vector<256x64xf32>
    %c2_54 = arith.constant 2 : index
    %c0_55 = arith.constant 0 : index
    %c0_56 = arith.constant 0 : index
    %63 = vector.load %arg3[%c2_54, %c0_55, %c0_56] : memref<3x1x64xf32, #tpu.memory_space<vmem>>, vector<1x1x64xf32>
    %64 = vector.shape_cast %63 : vector<1x1x64xf32> to vector<1x64xf32>
    %65 = vector.broadcast %64 : vector<1x64xf32> to vector<256x64xf32>
    %66 = arith.addf %62, %65 : vector<256x64xf32>
    %67 = vector.extract_strided_slice %66 {offsets = [0, 0], sizes = [256, 32], strides = [1, 1]} : vector<256x64xf32> to vector<256x32xf32>
    %68 = vector.extract_strided_slice %66 {offsets = [0, 32], sizes = [256, 32], strides = [1, 1]} : vector<256x64xf32> to vector<256x32xf32>
    %69 = arith.negf %68 : vector<256x32xf32>
    %70 = math.exp %69 : vector<256x32xf32>
    %cst_57 = arith.constant 1.000000e+00 : f32
    %71 = vector.broadcast %cst_57 : f32 to vector<256x32xf32>
    %72 = arith.addf %71, %70 : vector<256x32xf32>
    %73 = arith.divf %71, %72 : vector<256x32xf32>
    %74 = arith.mulf %67, %73 : vector<256x32xf32>
    %75 = vector.shape_cast %74 : vector<256x32xf32> to vector<16x16x32xf32>
    %76 = arith.addf %53, %75 : vector<16x16x32xf32>
    %cst_58 = arith.constant 0.707106769 : f32
    %77 = vector.broadcast %cst_58 : f32 to vector<16x16x32xf32>
    %78 = arith.mulf %76, %77 : vector<16x16x32xf32>
    %c0_59 = arith.constant 0 : index
    %c0_60 = arith.constant 0 : index
    %c0_61 = arith.constant 0 : index
    %79 = vector.load %arg4[%c0_59, %c0_60, %c0_61] : memref<16x16x32xf32, #tpu.memory_space<vmem>>, vector<16x16x32xf32>
    tpu.vector_store %arg4[%c0_59, %c0_60, %c0_61], %78 {strides = array<i32>} : memref<16x16x32xf32, #tpu.memory_space<vmem>>, vector<16x16x32xf32>,
    return
  }
  func.func @transform_0(%arg0: i32) -> (i32, i32, i32) {
    %c0_i32 = arith.constant 0 : i32
    %c0_i32_0 = arith.constant 0 : i32
    %c0_i32_1 = arith.constant 0 : i32
    return %arg0, %c0_i32, %c0_i32_0 : i32, i32, i32
  }
  func.func @transform_1(%arg0: i32) -> (i32, i32, i32) {
    %c0_i32 = arith.constant 0 : i32
    %c0_i32_0 = arith.constant 0 : i32
    %c0_i32_1 = arith.constant 0 : i32
    %c0_i32_2 = arith.constant 0 : i32
    return %c0_i32, %c0_i32_0, %c0_i32_1 : i32, i32, i32
  }
  func.func @transform_2(%arg0: i32) -> (i32, i32, i32) {
    %c0_i32 = arith.constant 0 : i32
    %c0_i32_0 = arith.constant 0 : i32
    %c0_i32_1 = arith.constant 0 : i32
    %c0_i32_2 = arith.constant 0 : i32
    return %c0_i32, %c0_i32_0, %c0_i32_1 : i32, i32, i32
  }
  func.func @transform_3(%arg0: i32) -> (i32, i32, i32) {
    %c0_i32 = arith.constant 0 : i32
    %c0_i32_0 = arith.constant 0 : i32
    %c0_i32_1 = arith.constant 0 : i32
    return %arg0, %c0_i32, %c0_i32_0 : i32, i32, i32
  }
}

</mosaic_0001>

<llo_original>
// kernel: tpu_custom_call.1
$region0: #{tpu_custom_call.1}
  #allocation0 [shape = 'u32[]', space=smem, size = 0x4, offset = 0x4, fixed_abs, tag = 'smem constant byte address 0x4 - core index']
  #allocation1 [shape = 'u32[144,128]{1,0:T(1,128)}', space=vmem, size = 0x12000, scoped, tag = 'internal scratch']
  #allocation2 [shape = 'bf16[16,18,32]{2,1,0:T(8,128)(2,1)}', space=vmem, size = 0x18000, scoped, tag = 'scratch operand']
  %s0 = inlined_call_operand.hbm [shape: f32[16,16,32], index: 0, kind: input, shape index: {}]
  %s1 = inlined_call_operand.vmem [shape: bf16[3,96,64], index: 1, kind: input, shape index: {}]
  %s2 = inlined_call_operand.vmem [shape: f32[3,1,64], index: 2, kind: input, shape index: {}]
  %s3 = inlined_call_operand.hbm [shape: f32[16,16,32], index: 3, kind: output, shape index: {}]
  %s4 = sld [smem:[#allocation0]]
  $region26: #{tpu_custom_call.1} parent=0
    _
  %s6 = ssub.s32 1, %s4
  %s7 = scalar_select 0, %s6, %s4
  $region1: #{tpu_custom_call.1} parent=0
    #allocation3 [shape = 'u8[131072]{0}', space=vmem, size = 0x20000, scoped, tag = 'input window, operand 0, single buffered']
    #allocation4 [shape = 's32[1]{0}', space=sflag, size = 0x4, scoped, tag = 'scoped memory for tpu_custom_call.1']
    #allocation5 [shape = 's32[1]{0}', space=sflag, size = 0x4, scoped, tag = 'scoped memory for tpu_custom_call.1']
    #allocation6 [shape = 'u8[131072]{0}', space=vmem, size = 0x20000, scoped, tag = 'output window, operand 0, single buffered']
    %8 = vsyncpa [#allocation4], 0
    %9 = vsyncpa [#allocation5], 0
    // Predicated region
    $region2: #{tpu_custom_call.1} parent=1 // pred_check
      _
    $region3: #{tpu_custom_call.1} parent=1 // pred_check_branch
      %11 = sbr.rel (0) target = $region5
    $region4: #{tpu_custom_call.1} parent=1 // pred_region
      %s13 = ssub.s32 4096, 4096
      %14 = vsyncadd [#allocation4], %s13
      %s15 = sshll.u32 [#allocation3], 4
      %s16 = int_to_ptr.vmem [resolvable:$true] %s15
      %21 = dma.hbm_to_vmem [thread:$0]  %s0, 4096, %s16, [#allocation4], 128, 128, 8
    $region5: #{tpu_custom_call.1} parent=1 // pred_fallthru
      _
    // Predicated region
    $region6: #{tpu_custom_call.1} parent=1 // pred_check
      _
    $region7: #{tpu_custom_call.1} parent=1 // pred_check_branch
      %23 = sbr.rel (0) target = $region9
    $region8: #{tpu_custom_call.1} parent=1 // pred_region
      _
    $region9: #{tpu_custom_call.1} parent=1 // pred_fallthru
      _
    // Predicated region
    $region10: #{tpu_custom_call.1} parent=1 // pred_check
      _
    $region11: #{tpu_custom_call.1} parent=1 // pred_check_branch
      %25 = sbr.rel (0) target = $region13
    $region12: #{tpu_custom_call.1} parent=1 // pred_region
      _
    $region13: #{tpu_custom_call.1} parent=1 // pred_fallthru
      _
    // Predicated region
    $region14: #{tpu_custom_call.1} parent=1 // pred_check
      _
    $region15: #{tpu_custom_call.1} parent=1 // pred_check_branch
      %27 = sbr.rel (0) target = $region17
    $region16: #{tpu_custom_call.1} parent=1 // pred_region
      %28 = dma.done [#allocation4], 4096
    $region17: #{tpu_custom_call.1} parent=1 // pred_fallthru
      _
    %vm30 = vcmask 253952
    %vm31 = vsmask.f32 256
    %vm32 = vmand %vm30, %vm31
    %v33 = vld [vmem:[#allocation2] sm:$0x1]
    %v34 = vsel %vm32, 0, %v33
    %35 = vst [vmem:[#allocation2] sm:$0x1] %v34
    %v36 = vld [vmem:[#allocation2 + $0xc] sm:$0x1]
    %v37 = vsel %vm32, 0, %v36
    %38 = vst [vmem:[#allocation2 + $0xc] sm:$0x1] %v37
    %v39 = vld [vmem:[#allocation2 + $0x18] sm:$0x1]
    %v40 = vsel %vm32, 0, %v39
    %41 = vst [vmem:[#allocation2 + $0x18] sm:$0x1] %v40
    %v42 = vld [vmem:[#allocation2 + $0x24] sm:$0x1]
    %v43 = vsel %vm32, 0, %v42
    %44 = vst [vmem:[#allocation2 + $0x24] sm:$0x1] %v43
    %v45 = vld [vmem:[#allocation2 + $0x30] sm:$0x1]
    %v46 = vsel %vm32, 0, %v45
    %47 = vst [vmem:[#allocation2 + $0x30] sm:$0x1] %v46
    %v48 = vld [vmem:[#allocation2 + $0x3c] sm:$0x1]
    %v49 = vsel %vm32, 0, %v48
    %50 = vst [vmem:[#allocation2 + $0x3c] sm:$0x1] %v49
    %v51 = vld [vmem:[#allocation2 + $0x48] sm:$0x1]
    %v52 = vsel %vm32, 0, %v51
    %53 = vst [vmem:[#allocation2 + $0x48] sm:$0x1] %v52
    %v54 = vld [vmem:[#allocation2 + $0x54] sm:$0x1]
    %v55 = vsel %vm32, 0, %v54
    %56 = vst [vmem:[#allocation2 + $0x54] sm:$0x1] %v55
    %v57 = vld [vmem:[#allocation2 + $0x60] sm:$0x1]
    %v58 = vsel %vm32, 0, %v57
    %59 = vst [vmem:[#allocation2 + $0x60] sm:$0x1] %v58
    %v60 = vld [vmem:[#allocation2 + $0x6c] sm:$0x1]
    %v61 = vsel %vm32, 0, %v60
    %62 = vst [vmem:[#allocation2 + $0x6c] sm:$0x1] %v61
    %v63 = vld [vmem:[#allocation2 + $0x78] sm:$0x1]
    %v64 = vsel %vm32, 0, %v63
    %65 = vst [vmem:[#allocation2 + $0x78] sm:$0x1] %v64
    %v66 = vld [vmem:[#allocation2 + $0x84] sm:$0x1]
    %v67 = vsel %vm32, 0, %v66
    %68 = vst [vmem:[#allocation2 + $0x84] sm:$0x1] %v67
    %v69 = vld [vmem:[#allocation2 + $0x90] sm:$0x1]
    %v70 = vsel %vm32, 0, %v69
    %71 = vst [vmem:[#allocation2 + $0x90] sm:$0x1] %v70
    %v72 = vld [vmem:[#allocation2 + $0x9c] sm:$0x1]
    %v73 = vsel %vm32, 0, %v72
    %74 = vst [vmem:[#allocation2 + $0x9c] sm:$0x1] %v73
    %v75 = vld [vmem:[#allocation2 + $0xa8] sm:$0x1]
    %v76 = vsel %vm32, 0, %v75
    %77 = vst [vmem:[#allocation2 + $0xa8] sm:$0x1] %v76
    %v78 = vld [vmem:[#allocation2 + $0xb4] sm:$0x1]
    %v79 = vsel %vm32, 0, %v78
    %80 = vst [vmem:[#allocation2 + $0xb4] sm:$0x1] %v79
    %vm81 = vsmask.f32 7938
    %vm82 = vmand %vm30, %vm81
    %v83 = vld [vmem:[#allocation2 + $0x8] sm:$0x1]
    %v84 = vsel %vm82, 0, %v83
    %85 = vst [vmem:[#allocation2 + $0x8] sm:$0x1] %v84
    %v86 = vld [vmem:[#allocation2 + $0x14] sm:$0x1]
    %v87 = vsel %vm82, 0, %v86
    %88 = vst [vmem:[#allocation2 + $0x14] sm:$0x1] %v87
    %v89 = vld [vmem:[#allocation2 + $0x20] sm:$0x1]
    %v90 = vsel %vm82, 0, %v89
    %91 = vst [vmem:[#allocation2 + $0x20] sm:$0x1] %v90
    %v92 = vld [vmem:[#allocation2 + $0x2c] sm:$0x1]
    %v93 = vsel %vm82, 0, %v92
    %94 = vst [vmem:[#allocation2 + $0x2c] sm:$0x1] %v93
    %v95 = vld [vmem:[#allocation2 + $0x38] sm:$0x1]
    %v96 = vsel %vm82, 0, %v95
    %97 = vst [vmem:[#allocation2 + $0x38] sm:$0x1] %v96
    %v98 = vld [vmem:[#allocation2 + $0x44] sm:$0x1]
    %v99 = vsel %vm82, 0, %v98
    %100 = vst [vmem:[#allocation2 + $0x44] sm:$0x1] %v99
    %v101 = vld [vmem:[#allocation2 + $0x50] sm:$0x1]
    %v102 = vsel %vm82, 0, %v101
    %103 = vst [vmem:[#allocation2 + $0x50] sm:$0x1] %v102
    %v104 = vld [vmem:[#allocation2 + $0x5c] sm:$0x1]
    %v105 = vsel %vm82, 0, %v104
    %106 = vst [vmem:[#allocation2 + $0x5c] sm:$0x1] %v105
    %v107 = vld [vmem:[#allocation2 + $0x68] sm:$0x1]
    %v108 = vsel %vm82, 0, %v107
    %109 = vst [vmem:[#allocation2 + $0x68] sm:$0x1] %v108
    %v110 = vld [vmem:[#allocation2 + $0x74] sm:$0x1]
    %v111 = vsel %vm82, 0, %v110
    %112 = vst [vmem:[#allocation2 + $0x74] sm:$0x1] %v111
    %v113 = vld [vmem:[#allocation2 + $0x80] sm:$0x1]
    %v114 = vsel %vm82, 0, %v113
    %115 = vst [vmem:[#allocation2 + $0x80] sm:$0x1] %v114
    %v116 = vld [vmem:[#allocation2 + $0x8c] sm:$0x1]
    %v117 = vsel %vm82, 0, %v116
    %118 = vst [vmem:[#allocation2 + $0x8c] sm:$0x1] %v117
    %v119 = vld [vmem:[#allocation2 + $0x98] sm:$0x1]
    %v120 = vsel %vm82, 0, %v119
    %121 = vst [vmem:[#allocation2 + $0x98] sm:$0x1] %v120
    %v122 = vld [vmem:[#allocation2 + $0xa4] sm:$0x1]
    %v123 = vsel %vm82, 0, %v122
    %124 = vst [vmem:[#allocation2 + $0xa4] sm:$0x1] %v123
    %v125 = vld [vmem:[#allocation2 + $0xb0] sm:$0x1]
    %v126 = vsel %vm82, 0, %v125
    %127 = vst [vmem:[#allocation2 + $0xb0] sm:$0x1] %v126
    %v128 = vld [vmem:[#allocation2 + $0xbc] sm:$0x1]
    %v129 = vsel %vm82, 0, %v128
    %130 = vst [vmem:[#allocation2 + $0xbc] sm:$0x1] %v129
    %v131 = vld [vmem:[#allocation3] sm:$0xff]
    %v132 = vld [vmem:[#allocation3 + $0x8] sm:$0xff]
    %v133 = vld [vmem:[#allocation3 + $0x10] sm:$0xff]
    %v134 = vld [vmem:[#allocation3 + $0x18] sm:$0xff]
    %v135 = vld [vmem:[#allocation3 + $0x20] sm:$0xff]
    %v136 = vld [vmem:[#allocation3 + $0x28] sm:$0xff]
    %v137 = vld [vmem:[#allocation3 + $0x30] sm:$0xff]
    %v138 = vld [vmem:[#allocation3 + $0x38] sm:$0xff]
    %v139 = vld [vmem:[#allocation3 + $0x40] sm:$0xff]
    %v140 = vld [vmem:[#allocation3 + $0x48] sm:$0xff]
    %v141 = vld [vmem:[#allocation3 + $0x50] sm:$0xff]
    %v142 = vld [vmem:[#allocation3 + $0x58] sm:$0xff]
    %v143 = vld [vmem:[#allocation3 + $0x60] sm:$0xff]
    %v144 = vld [vmem:[#allocation3 + $0x68] sm:$0xff]
    %v145 = vld [vmem:[#allocation3 + $0x70] sm:$0xff]
    %v146 = vld [vmem:[#allocation3 + $0x78] sm:$0xff]
    %v147 = vld [vmem:[#allocation3 + $0x80] sm:$0xff]
    %v148 = vld [vmem:[#allocation3 + $0x88] sm:$0xff]
    %v149 = vld [vmem:[#allocation3 + $0x90] sm:$0xff]
    %v150 = vld [vmem:[#allocation3 + $0x98] sm:$0xff]
    %v151 = vld [vmem:[#allocation3 + $0xa0] sm:$0xff]
    %v152 = vld [vmem:[#allocation3 + $0xa8] sm:$0xff]
    %v153 = vld [vmem:[#allocation3 + $0xb0] sm:$0xff]
    %v154 = vld [vmem:[#allocation3 + $0xb8] sm:$0xff]
    %v155 = vld [vmem:[#allocation3 + $0xc0] sm:$0xff]
    %v156 = vld [vmem:[#allocation3 + $0xc8] sm:$0xff]
    %v157 = vld [vmem:[#allocation3 + $0xd0] sm:$0xff]
    %v158 = vld [vmem:[#allocation3 + $0xd8] sm:$0xff]
    %v159 = vld [vmem:[#allocation3 + $0xe0] sm:$0xff]
    %v160 = vld [vmem:[#allocation3 + $0xe8] sm:$0xff]
    %v161 = vld [vmem:[#allocation3 + $0xf0] sm:$0xff]
    %v162 = vld [vmem:[#allocation3 + $0xf8] sm:$0xff]
    %v163 = vpack.c.bf16 %v132, %v131
    %v164 = vpack.c.bf16 %v134, %v133
    %v165 = vpack.c.bf16 %v136, %v135
    %v166 = vpack.c.bf16 %v138, %v137
    %v167 = vpack.c.bf16 %v140, %v139
    %v168 = vpack.c.bf16 %v142, %v141
    %v169 = vpack.c.bf16 %v144, %v143
    %v170 = vpack.c.bf16 %v146, %v145
    %v171 = vpack.c.bf16 %v148, %v147
    %v172 = vpack.c.bf16 %v150, %v149
    %v173 = vpack.c.bf16 %v152, %v151
    %v174 = vpack.c.bf16 %v154, %v153
    %v175 = vpack.c.bf16 %v156, %v155
    %v176 = vpack.c.bf16 %v158, %v157
    %v177 = vpack.c.bf16 %v160, %v159
    %v178 = vpack.c.bf16 %v162, %v161
    %v195 = vunpack.c.l.b16 %v163
    %v196 = vunpack.c.h.b16 %v163
    %v197 = vunpack.c.l.b16 %v164
    %v198 = vunpack.c.h.b16 %v164
    %v199 = vunpack.c.l.b16 %v165
    %v200 = vunpack.c.h.b16 %v165
    %v201 = vunpack.c.l.b16 %v166
    %v202 = vunpack.c.h.b16 %v166
    %v203 = vunpack.c.l.b16 %v167
    %v204 = vunpack.c.h.b16 %v167
    %v205 = vunpack.c.l.b16 %v168
    %v206 = vunpack.c.h.b16 %v168
    %v207 = vunpack.c.l.b16 %v169
    %v208 = vunpack.c.h.b16 %v169
    %v209 = vunpack.c.l.b16 %v170
    %v210 = vunpack.c.h.b16 %v170
    %v211 = vunpack.c.l.b16 %v171
    %v212 = vunpack.c.h.b16 %v171
    %v213 = vunpack.c.l.b16 %v172
    %v214 = vunpack.c.h.b16 %v172
    %v215 = vunpack.c.l.b16 %v173
    %v216 = vunpack.c.h.b16 %v173
    %v217 = vunpack.c.l.b16 %v174
    %v218 = vunpack.c.h.b16 %v174
    %v219 = vunpack.c.l.b16 %v175
    %v220 = vunpack.c.h.b16 %v175
    %v221 = vunpack.c.l.b16 %v176
    %v222 = vunpack.c.h.b16 %v176
    %v223 = vunpack.c.l.b16 %v177
    %v224 = vunpack.c.h.b16 %v177
    %v225 = vunpack.c.l.b16 %v178
    %v226 = vunpack.c.h.b16 %v178
    %v227 = vpack.c.b16 %v195, %v195
    %v228 = vpack.c.b16 %v196, %v196
    %v229 = vpack.c.b16 %v197, %v197
    %v230 = vpack.c.b16 %v198, %v198
    %v231 = vpack.c.b16 %v199, %v199
    %v232 = vpack.c.b16 %v200, %v200
    %v233 = vpack.c.b16 %v201, %v201
    %v234 = vpack.c.b16 %v202, %v202
    %v235 = vpack.c.b16 %v203, %v203
    %v236 = vpack.c.b16 %v204, %v204
    %v237 = vpack.c.b16 %v205, %v205
    %v238 = vpack.c.b16 %v206, %v206
    %v239 = vpack.c.b16 %v207, %v207
    %v240 = vpack.c.b16 %v208, %v208
    %v241 = vpack.c.b16 %v209, %v209
    %v242 = vpack.c.b16 %v210, %v210
    %v243 = vpack.c.b16 %v211, %v211
    %v244 = vpack.c.b16 %v212, %v212
    %v245 = vpack.c.b16 %v213, %v213
    %v246 = vpack.c.b16 %v214, %v214
    %v247 = vpack.c.b16 %v215, %v215
    %v248 = vpack.c.b16 %v216, %v216
    %v249 = vpack.c.b16 %v217, %v217
    %v250 = vpack.c.b16 %v218, %v218
    %v251 = vpack.c.b16 %v219, %v219
    %v252 = vpack.c.b16 %v220, %v220
    %v253 = vpack.c.b16 %v221, %v221
    %v254 = vpack.c.b16 %v222, %v222
    %v255 = vpack.c.b16 %v223, %v223
    %v256 = vpack.c.b16 %v224, %v224
    %v257 = vpack.c.b16 %v225, %v225
    %v258 = vpack.c.b16 %v226, %v226
    %vm259 = vsmask.f32 4368
    %vm260 = vmor %vm31, %vm259
    %v262 = vshrl.u32 %v227, 16
    %v264 = vrot.slane %v262, 7
    %v265 = vshll.u32 %v227, 16
    %v267 = vor.u32 %v264, %v265
    %v268 = vrot.slane %v264, 4
    %v270 = vshrl.u32 %v228, 16
    %v272 = vrot.slane %v270, 7
    %v273 = vshll.u32 %v228, 16
    %v275 = vor.u32 %v272, %v273
    %v276 = vsel %vm260, %v268, %v275
    %v277 = vrot.slane %v272, 4
    %v279 = vshrl.u32 %v229, 16
    %v281 = vrot.slane %v279, 7
    %v282 = vshll.u32 %v229, 16
    %v284 = vor.u32 %v281, %v282
    %v285 = vrot.slane %v281, 4
    %v287 = vshrl.u32 %v230, 16
    %v289 = vrot.slane %v287, 7
    %v290 = vshll.u32 %v230, 16
    %v292 = vor.u32 %v289, %v290
    %v293 = vsel %vm260, %v285, %v292
    %v294 = vrot.slane %v289, 4
    %v296 = vshrl.u32 %v231, 16
    %v298 = vrot.slane %v296, 7
    %v299 = vshll.u32 %v231, 16
    %v301 = vor.u32 %v298, %v299
    %v302 = vrot.slane %v298, 4
    %v304 = vshrl.u32 %v232, 16
    %v306 = vrot.slane %v304, 7
    %v307 = vshll.u32 %v232, 16
    %v309 = vor.u32 %v306, %v307
    %v310 = vsel %vm260, %v302, %v309
    %v311 = vrot.slane %v306, 4
    %v313 = vshrl.u32 %v233, 16
    %v315 = vrot.slane %v313, 7
    %v316 = vshll.u32 %v233, 16
    %v318 = vor.u32 %v315, %v316
    %v319 = vrot.slane %v315, 4
    %v321 = vshrl.u32 %v234, 16
    %v323 = vrot.slane %v321, 7
    %v324 = vshll.u32 %v234, 16
    %v326 = vor.u32 %v323, %v324
    %v327 = vsel %vm260, %v319, %v326
    %v328 = vrot.slane %v323, 4
    %v330 = vshrl.u32 %v235, 16
    %v332 = vrot.slane %v330, 7
    %v333 = vshll.u32 %v235, 16
    %v335 = vor.u32 %v332, %v333
    %v336 = vrot.slane %v332, 4
    %v338 = vshrl.u32 %v236, 16
    %v340 = vrot.slane %v338, 7
    %v341 = vshll.u32 %v236, 16
    %v343 = vor.u32 %v340, %v341
    %v344 = vsel %vm260, %v336, %v343
    %v345 = vrot.slane %v340, 4
    %v347 = vshrl.u32 %v237, 16
    %v349 = vrot.slane %v347, 7
    %v350 = vshll.u32 %v237, 16
    %v352 = vor.u32 %v349, %v350
    %v353 = vrot.slane %v349, 4
    %v355 = vshrl.u32 %v238, 16
    %v357 = vrot.slane %v355, 7
    %v358 = vshll.u32 %v238, 16
    %v360 = vor.u32 %v357, %v358
    %v361 = vsel %vm260, %v353, %v360
    %v362 = vrot.slane %v357, 4
    %v364 = vshrl.u32 %v239, 16
    %v366 = vrot.slane %v364, 7
    %v367 = vshll.u32 %v239, 16
    %v369 = vor.u32 %v366, %v367
    %v370 = vrot.slane %v366, 4
    %v372 = vshrl.u32 %v240, 16
    %v374 = vrot.slane %v372, 7
    %v375 = vshll.u32 %v240, 16
    %v377 = vor.u32 %v374, %v375
    %v378 = vsel %vm260, %v370, %v377
    %v379 = vrot.slane %v374, 4
    %v381 = vshrl.u32 %v241, 16
    %v383 = vrot.slane %v381, 7
    %v384 = vshll.u32 %v241, 16
    %v386 = vor.u32 %v383, %v384
    %v387 = vrot.slane %v383, 4
    %v389 = vshrl.u32 %v242, 16
    %v391 = vrot.slane %v389, 7
    %v392 = vshll.u32 %v242, 16
    %v394 = vor.u32 %v391, %v392
    %v395 = vsel %vm260, %v387, %v394
    %v396 = vrot.slane %v391, 4
    %v398 = vshrl.u32 %v243, 16
    %v400 = vrot.slane %v398, 7
    %v401 = vshll.u32 %v243, 16
    %v403 = vor.u32 %v400, %v401
    %v404 = vrot.slane %v400, 4
    %v406 = vshrl.u32 %v244, 16
    %v408 = vrot.slane %v406, 7
    %v409 = vshll.u32 %v244, 16
    %v411 = vor.u32 %v408, %v409
    %v412 = vsel %vm260, %v404, %v411
    %v413 = vrot.slane %v408, 4
    %v415 = vshrl.u32 %v245, 16
    %v417 = vrot.slane %v415, 7
    %v418 = vshll.u32 %v245, 16
    %v420 = vor.u32 %v417, %v418
    %v421 = vrot.slane %v417, 4
    %v423 = vshrl.u32 %v246, 16
    %v425 = vrot.slane %v423, 7
    %v426 = vshll.u32 %v246, 16
    %v428 = vor.u32 %v425, %v426
    %v429 = vsel %vm260, %v421, %v428
    %v430 = vrot.slane %v425, 4
    %v432 = vshrl.u32 %v247, 16
    %v434 = vrot.slane %v432, 7
    %v435 = vshll.u32 %v247, 16
    %v437 = vor.u32 %v434, %v435
    %v438 = vrot.slane %v434, 4
    %v440 = vshrl.u32 %v248, 16
    %v442 = vrot.slane %v440, 7
    %v443 = vshll.u32 %v248, 16
    %v445 = vor.u32 %v442, %v443
    %v446 = vsel %vm260, %v438, %v445
    %v447 = vrot.slane %v442, 4
    %v449 = vshrl.u32 %v249, 16
    %v451 = vrot.slane %v449, 7
    %v452 = vshll.u32 %v249, 16
    %v454 = vor.u32 %v451, %v452
    %v455 = vrot.slane %v451, 4
    %v457 = vshrl.u32 %v250, 16
    %v459 = vrot.slane %v457, 7
    %v460 = vshll.u32 %v250, 16
    %v462 = vor.u32 %v459, %v460
    %v463 = vsel %vm260, %v455, %v462
    %v464 = vrot.slane %v459, 4
    %v466 = vshrl.u32 %v251, 16
    %v468 = vrot.slane %v466, 7
    %v469 = vshll.u32 %v251, 16
    %v471 = vor.u32 %v468, %v469
    %v472 = vrot.slane %v468, 4
    %v474 = vshrl.u32 %v252, 16
    %v476 = vrot.slane %v474, 7
    %v477 = vshll.u32 %v252, 16
    %v479 = vor.u32 %v476, %v477
    %v480 = vsel %vm260, %v472, %v479
    %v481 = vrot.slane %v476, 4
    %v483 = vshrl.u32 %v253, 16
    %v485 = vrot.slane %v483, 7
    %v486 = vshll.u32 %v253, 16
    %v488 = vor.u32 %v485, %v486
    %v489 = vrot.slane %v485, 4
    %v491 = vshrl.u32 %v254, 16
    %v493 = vrot.slane %v491, 7
    %v494 = vshll.u32 %v254, 16
    %v496 = vor.u32 %v493, %v494
    %v497 = vsel %vm260, %v489, %v496
    %v498 = vrot.slane %v493, 4
    %v500 = vshrl.u32 %v255, 16
    %v502 = vrot.slane %v500, 7
    %v503 = vshll.u32 %v255, 16
    %v505 = vor.u32 %v502, %v503
    %v506 = vrot.slane %v502, 4
    %v508 = vshrl.u32 %v256, 16
    %v510 = vrot.slane %v508, 7
    %v511 = vshll.u32 %v256, 16
    %v513 = vor.u32 %v510, %v511
    %v514 = vsel %vm260, %v506, %v513
    %v515 = vrot.slane %v510, 4
    %v517 = vshrl.u32 %v257, 16
    %v519 = vrot.slane %v517, 7
    %v520 = vshll.u32 %v257, 16
    %v522 = vor.u32 %v519, %v520
    %v523 = vrot.slane %v519, 4
    %v525 = vshrl.u32 %v258, 16
    %v527 = vrot.slane %v525, 7
    %v528 = vshll.u32 %v258, 16
    %v530 = vor.u32 %v527, %v528
    %v531 = vsel %vm260, %v523, %v530
    %v532 = vrot.slane %v527, 4
    %vm581 = vcmask 257024
    %vm582 = vmand %vm581, %vm81
    %v583 = vld [vmem:[#allocation2] sm:$0xf]
    %v584 = vsel %vm582, %v267, %v583
    %585 = vst [vmem:[#allocation2] sm:$0xf] %v584
    %vm586 = vcmask 257024
    %587 = vst.msk [vmem:[#allocation2 + $0x4] sm:$0xf] %vm586, %v276
    %v588 = vld [vmem:[#allocation2 + $0x8] sm:$0x1]
    %v589 = vsel %vm32, %v277, %v588
    %590 = vst [vmem:[#allocation2 + $0x8] sm:$0x1] %v589
    %v591 = vld [vmem:[#allocation2 + $0xc] sm:$0xf]
    %v592 = vsel %vm582, %v284, %v591
    %593 = vst [vmem:[#allocation2 + $0xc] sm:$0xf] %v592
    %594 = vst.msk [vmem:[#allocation2 + $0x10] sm:$0xf] %vm586, %v293
    %v595 = vld [vmem:[#allocation2 + $0x14] sm:$0x1]
    %v596 = vsel %vm32, %v294, %v595
    %597 = vst [vmem:[#allocation2 + $0x14] sm:$0x1] %v596
    %v598 = vld [vmem:[#allocation2 + $0x18] sm:$0xf]
    %v599 = vsel %vm582, %v301, %v598
    %600 = vst [vmem:[#allocation2 + $0x18] sm:$0xf] %v599
    %601 = vst.msk [vmem:[#allocation2 + $0x1c] sm:$0xf] %vm586, %v310
    %v602 = vld [vmem:[#allocation2 + $0x20] sm:$0x1]
    %v603 = vsel %vm32, %v311, %v602
    %604 = vst [vmem:[#allocation2 + $0x20] sm:$0x1] %v603
    %v605 = vld [vmem:[#allocation2 + $0x24] sm:$0xf]
    %v606 = vsel %vm582, %v318, %v605
    %607 = vst [vmem:[#allocation2 + $0x24] sm:$0xf] %v606
    %608 = vst.msk [vmem:[#allocation2 + $0x28] sm:$0xf] %vm586, %v327
    %v609 = vld [vmem:[#allocation2 + $0x2c] sm:$0x1]
    %v610 = vsel %vm32, %v328, %v609
    %611 = vst [vmem:[#allocation2 + $0x2c] sm:$0x1] %v610
    %v612 = vld [vmem:[#allocation2 + $0x30] sm:$0xf]
    %v613 = vsel %vm582, %v335, %v612
    %614 = vst [vmem:[#allocation2 + $0x30] sm:$0xf] %v613
    %615 = vst.msk [vmem:[#allocation2 + $0x34] sm:$0xf] %vm586, %v344
    %v616 = vld [vmem:[#allocation2 + $0x38] sm:$0x1]
    %v617 = vsel %vm32, %v345, %v616
    %618 = vst [vmem:[#allocation2 + $0x38] sm:$0x1] %v617
    %v619 = vld [vmem:[#allocation2 + $0x3c] sm:$0xf]
    %v620 = vsel %vm582, %v352, %v619
    %621 = vst [vmem:[#allocation2 + $0x3c] sm:$0xf] %v620
    %622 = vst.msk [vmem:[#allocation2 + $0x40] sm:$0xf] %vm586, %v361
    %v623 = vld [vmem:[#allocation2 + $0x44] sm:$0x1]
    %v624 = vsel %vm32, %v362, %v623
    %625 = vst [vmem:[#allocation2 + $0x44] sm:$0x1] %v624
    %v626 = vld [vmem:[#allocation2 + $0x48] sm:$0xf]
    %v627 = vsel %vm582, %v369, %v626
    %628 = vst [vmem:[#allocation2 + $0x48] sm:$0xf] %v627
    %629 = vst.msk [vmem:[#allocation2 + $0x4c] sm:$0xf] %vm586, %v378
    %v630 = vld [vmem:[#allocation2 + $0x50] sm:$0x1]
    %v631 = vsel %vm32, %v379, %v630
    %632 = vst [vmem:[#allocation2 + $0x50] sm:$0x1] %v631
    %v633 = vld [vmem:[#allocation2 + $0x54] sm:$0xf]
    %v634 = vsel %vm582, %v386, %v633
    %635 = vst [vmem:[#allocation2 + $0x54] sm:$0xf] %v634
    %636 = vst.msk [vmem:[#allocation2 + $0x58] sm:$0xf] %vm586, %v395
    %v637 = vld [vmem:[#allocation2 + $0x5c] sm:$0x1]
    %v638 = vsel %vm32, %v396, %v637
    %639 = vst [vmem:[#allocation2 + $0x5c] sm:$0x1] %v638
    %v640 = vld [vmem:[#allocation2 + $0x60] sm:$0xf]
    %v641 = vsel %vm582, %v403, %v640
    %642 = vst [vmem:[#allocation2 + $0x60] sm:$0xf] %v641
    %643 = vst.msk [vmem:[#allocation2 + $0x64] sm:$0xf] %vm586, %v412
    %v644 = vld [vmem:[#allocation2 + $0x68] sm:$0x1]
    %v645 = vsel %vm32, %v413, %v644
    %646 = vst [vmem:[#allocation2 + $0x68] sm:$0x1] %v645
    %v647 = vld [vmem:[#allocation2 + $0x6c] sm:$0xf]
    %v648 = vsel %vm582, %v420, %v647
    %649 = vst [vmem:[#allocation2 + $0x6c] sm:$0xf] %v648
    %650 = vst.msk [vmem:[#allocation2 + $0x70] sm:$0xf] %vm586, %v429
    %v651 = vld [vmem:[#allocation2 + $0x74] sm:$0x1]
    %v652 = vsel %vm32, %v430, %v651
    %653 = vst [vmem:[#allocation2 + $0x74] sm:$0x1] %v652
    %v654 = vld [vmem:[#allocation2 + $0x78] sm:$0xf]
    %v655 = vsel %vm582, %v437, %v654
    %656 = vst [vmem:[#allocation2 + $0x78] sm:$0xf] %v655
    %657 = vst.msk [vmem:[#allocation2 + $0x7c] sm:$0xf] %vm586, %v446
    %v658 = vld [vmem:[#allocation2 + $0x80] sm:$0x1]
    %v659 = vsel %vm32, %v447, %v658
    %660 = vst [vmem:[#allocation2 + $0x80] sm:$0x1] %v659
    %v661 = vld [vmem:[#allocation2 + $0x84] sm:$0xf]
    %v662 = vsel %vm582, %v454, %v661
    %663 = vst [vmem:[#allocation2 + $0x84] sm:$0xf] %v662
    %664 = vst.msk [vmem:[#allocation2 + $0x88] sm:$0xf] %vm586, %v463
    %v665 = vld [vmem:[#allocation2 + $0x8c] sm:$0x1]
    %v666 = vsel %vm32, %v464, %v665
    %667 = vst [vmem:[#allocation2 + $0x8c] sm:$0x1] %v666
    %v668 = vld [vmem:[#allocation2 + $0x90] sm:$0xf]
    %v669 = vsel %vm582, %v471, %v668
    %670 = vst [vmem:[#allocation2 + $0x90] sm:$0xf] %v669
    %671 = vst.msk [vmem:[#allocation2 + $0x94] sm:$0xf] %vm586, %v480
    %v672 = vld [vmem:[#allocation2 + $0x98] sm:$0x1]
    %v673 = vsel %vm32, %v481, %v672
    %674 = vst [vmem:[#allocation2 + $0x98] sm:$0x1] %v673
    %v675 = vld [vmem:[#allocation2 + $0x9c] sm:$0xf]
    %v676 = vsel %vm582, %v488, %v675
    %677 = vst [vmem:[#allocation2 + $0x9c] sm:$0xf] %v676
    %678 = vst.msk [vmem:[#allocation2 + $0xa0] sm:$0xf] %vm586, %v497
    %v679 = vld [vmem:[#allocation2 + $0xa4] sm:$0x1]
    %v680 = vsel %vm32, %v498, %v679
    %681 = vst [vmem:[#allocation2 + $0xa4] sm:$0x1] %v680
    %v682 = vld [vmem:[#allocation2 + $0xa8] sm:$0xf]
    %v683 = vsel %vm582, %v505, %v682
    %684 = vst [vmem:[#allocation2 + $0xa8] sm:$0xf] %v683
    %685 = vst.msk [vmem:[#allocation2 + $0xac] sm:$0xf] %vm586, %v514
    %v686 = vld [vmem:[#allocation2 + $0xb0] sm:$0x1]
    %v687 = vsel %vm32, %v515, %v686
    %688 = vst [vmem:[#allocation2 + $0xb0] sm:$0x1] %v687
    %v689 = vld [vmem:[#allocation2 + $0xb4] sm:$0xf]
    %v690 = vsel %vm582, %v522, %v689
    %691 = vst [vmem:[#allocation2 + $0xb4] sm:$0xf] %v690
    %692 = vst.msk [vmem:[#allocation2 + $0xb8] sm:$0xf] %vm586, %v531
    %v693 = vld [vmem:[#allocation2 + $0xbc] sm:$0x1]
    %v694 = vsel %vm32, %v532, %v693
    %695 = vst [vmem:[#allocation2 + $0xbc] sm:$0x1] %v694
    %v696 = vld [vmem:[#allocation2] sm:$0xf]
    %v697 = vld [vmem:[#allocation2 + $0x4] sm:$0xf]
    %v698 = vld [vmem:[#allocation2 + $0xc] sm:$0xf]
    %v699 = vld [vmem:[#allocation2 + $0x10] sm:$0xf]
    %v700 = vld [vmem:[#allocation2 + $0x18] sm:$0xf]
    %v701 = vld [vmem:[#allocation2 + $0x1c] sm:$0xf]
    %v702 = vld [vmem:[#allocation2 + $0x24] sm:$0xf]
    %v703 = vld [vmem:[#allocation2 + $0x28] sm:$0xf]
    %v704 = vld [vmem:[#allocation2 + $0x30] sm:$0xf]
    %v705 = vld [vmem:[#allocation2 + $0x34] sm:$0xf]
    %v706 = vld [vmem:[#allocation2 + $0x3c] sm:$0xf]
    %v707 = vld [vmem:[#allocation2 + $0x40] sm:$0xf]
    %v708 = vld [vmem:[#allocation2 + $0x48] sm:$0xf]
    %v709 = vld [vmem:[#allocation2 + $0x4c] sm:$0xf]
    %v710 = vld [vmem:[#allocation2 + $0x54] sm:$0xf]
    %v711 = vld [vmem:[#allocation2 + $0x58] sm:$0xf]
    %v712 = vld [vmem:[#allocation2 + $0x60] sm:$0xf]
    %v713 = vld [vmem:[#allocation2 + $0x64] sm:$0xf]
    %v714 = vld [vmem:[#allocation2 + $0x6c] sm:$0xf]
    %v715 = vld [vmem:[#allocation2 + $0x70] sm:$0xf]
    %v716 = vld [vmem:[#allocation2 + $0x78] sm:$0xf]
    %v717 = vld [vmem:[#allocation2 + $0x7c] sm:$0xf]
    %v718 = vld [vmem:[#allocation2 + $0x84] sm:$0xf]
    %v719 = vld [vmem:[#allocation2 + $0x88] sm:$0xf]
    %v720 = vld [vmem:[#allocation2 + $0x90] sm:$0xf]
    %v721 = vld [vmem:[#allocation2 + $0x94] sm:$0xf]
    %v722 = vld [vmem:[#allocation2 + $0x9c] sm:$0xf]
    %v723 = vld [vmem:[#allocation2 + $0xa0] sm:$0xf]
    %v724 = vld [vmem:[#allocation2 + $0xa8] sm:$0xf]
    %v725 = vld [vmem:[#allocation2 + $0xac] sm:$0xf]
    %v726 = vld [vmem:[#allocation2 + $0xb4] sm:$0xf]
    %v727 = vld [vmem:[#allocation2 + $0xb8] sm:$0xf]
    %v728 = vld [vmem:[#allocation2] sm:$0xe]
    %v729 = vld [vmem:[#allocation2 + $0x8] sm:$0x1]
    %v730 = vld [vmem:[#allocation2 + $0xc] sm:$0xe]
    %v731 = vld [vmem:[#allocation2 + $0x14] sm:$0x1]
    %v732 = vld [vmem:[#allocation2 + $0x18] sm:$0xe]
    %v733 = vld [vmem:[#allocation2 + $0x20] sm:$0x1]
    %v734 = vld [vmem:[#allocation2 + $0x24] sm:$0xe]
    %v735 = vld [vmem:[#allocation2 + $0x2c] sm:$0x1]
    %v736 = vld [vmem:[#allocation2 + $0x30] sm:$0xe]
    %v737 = vld [vmem:[#allocation2 + $0x38] sm:$0x1]
    %v738 = vld [vmem:[#allocation2 + $0x3c] sm:$0xe]
    %v739 = vld [vmem:[#allocation2 + $0x44] sm:$0x1]
    %v740 = vld [vmem:[#allocation2 + $0x48] sm:$0xe]
    %v741 = vld [vmem:[#allocation2 + $0x50] sm:$0x1]
    %v742 = vld [vmem:[#allocation2 + $0x54] sm:$0xe]
    %v743 = vld [vmem:[#allocation2 + $0x5c] sm:$0x1]
    %v744 = vld [vmem:[#allocation2 + $0x60] sm:$0xe]
    %v745 = vld [vmem:[#allocation2 + $0x68] sm:$0x1]
    %v746 = vld [vmem:[#allocation2 + $0x6c] sm:$0xe]
    %v747 = vld [vmem:[#allocation2 + $0x74] sm:$0x1]
    %v748 = vld [vmem:[#allocation2 + $0x78] sm:$0xe]
    %v749 = vld [vmem:[#allocation2 + $0x80] sm:$0x1]
    %v750 = vld [vmem:[#allocation2 + $0x84] sm:$0xe]
    %v751 = vld [vmem:[#allocation2 + $0x8c] sm:$0x1]
    %v752 = vld [vmem:[#allocation2 + $0x90] sm:$0xe]
    %v753 = vld [vmem:[#allocation2 + $0x98] sm:$0x1]
    %v754 = vld [vmem:[#allocation2 + $0x9c] sm:$0xe]
    %v755 = vld [vmem:[#allocation2 + $0xa4] sm:$0x1]
    %v756 = vld [vmem:[#allocation2 + $0xa8] sm:$0xe]
    %v757 = vld [vmem:[#allocation2 + $0xb0] sm:$0x1]
    %v758 = vld [vmem:[#allocation2 + $0xb4] sm:$0xe]
    %v759 = vld [vmem:[#allocation2 + $0xbc] sm:$0x1]
    %v792 = vunpack.c.l.b16 %v696
    %v793 = vunpack.c.l.b16 %v697
    %v794 = vunpack.c.l.b16 %v698
    %v795 = vunpack.c.l.b16 %v699
    %v796 = vunpack.c.l.b16 %v700
    %v797 = vunpack.c.l.b16 %v701
    %v798 = vunpack.c.l.b16 %v702
    %v799 = vunpack.c.l.b16 %v703
    %v800 = vunpack.c.l.b16 %v704
    %v801 = vunpack.c.l.b16 %v705
    %v802 = vunpack.c.l.b16 %v706
    %v803 = vunpack.c.l.b16 %v707
    %v804 = vunpack.c.l.b16 %v708
    %v805 = vunpack.c.l.b16 %v709
    %v806 = vunpack.c.l.b16 %v710
    %v807 = vunpack.c.l.b16 %v711
    %v808 = vunpack.c.l.b16 %v712
    %v809 = vunpack.c.l.b16 %v713
    %v810 = vunpack.c.l.b16 %v714
    %v811 = vunpack.c.l.b16 %v715
    %v812 = vunpack.c.l.b16 %v716
    %v813 = vunpack.c.l.b16 %v717
    %v814 = vunpack.c.l.b16 %v718
    %v815 = vunpack.c.l.b16 %v719
    %v816 = vunpack.c.l.b16 %v720
    %v817 = vunpack.c.l.b16 %v721
    %v818 = vunpack.c.l.b16 %v722
    %v819 = vunpack.c.l.b16 %v723
    %v820 = vunpack.c.l.b16 %v724
    %v821 = vunpack.c.l.b16 %v725
    %v822 = vunpack.c.l.b16 %v726
    %v823 = vunpack.c.l.b16 %v727
    %v824 = vpack.c.b16 %v793, %v792
    %v825 = vpack.c.b16 %v795, %v794
    %v826 = vpack.c.b16 %v797, %v796
    %v827 = vpack.c.b16 %v799, %v798
    %v828 = vpack.c.b16 %v801, %v800
    %v829 = vpack.c.b16 %v803, %v802
    %v830 = vpack.c.b16 %v805, %v804
    %v831 = vpack.c.b16 %v807, %v806
    %v832 = vpack.c.b16 %v809, %v808
    %v833 = vpack.c.b16 %v811, %v810
    %v834 = vpack.c.b16 %v813, %v812
    %v835 = vpack.c.b16 %v815, %v814
    %v836 = vpack.c.b16 %v817, %v816
    %v837 = vpack.c.b16 %v819, %v818
    %v838 = vpack.c.b16 %v821, %v820
    %v839 = vpack.c.b16 %v823, %v822
    %840 = vrot.lane.b32.xlu0 %v163, 32
    %v841 = vpop.permute.xlu0 %840
    %842 = vrot.lane.b32.xlu0 %v164, 32
    %v843 = vpop.permute.xlu0 %842
    %844 = vrot.lane.b32.xlu0 %v165, 32
    %v845 = vpop.permute.xlu0 %844
    %846 = vrot.lane.b32.xlu0 %v166, 32
    %v847 = vpop.permute.xlu0 %846
    %848 = vrot.lane.b32.xlu0 %v167, 32
    %v849 = vpop.permute.xlu0 %848
    %850 = vrot.lane.b32.xlu0 %v168, 32
    %v851 = vpop.permute.xlu0 %850
    %852 = vrot.lane.b32.xlu0 %v169, 32
    %v853 = vpop.permute.xlu0 %852
    %854 = vrot.lane.b32.xlu0 %v170, 32
    %v855 = vpop.permute.xlu0 %854
    %856 = vrot.lane.b32.xlu0 %v171, 32
    %v857 = vpop.permute.xlu0 %856
    %858 = vrot.lane.b32.xlu0 %v172, 32
    %v859 = vpop.permute.xlu0 %858
    %860 = vrot.lane.b32.xlu0 %v173, 32
    %v861 = vpop.permute.xlu0 %860
    %862 = vrot.lane.b32.xlu0 %v174, 32
    %v863 = vpop.permute.xlu0 %862
    %864 = vrot.lane.b32.xlu0 %v175, 32
    %v865 = vpop.permute.xlu0 %864
    %866 = vrot.lane.b32.xlu0 %v176, 32
    %v867 = vpop.permute.xlu0 %866
    %868 = vrot.lane.b32.xlu0 %v177, 32
    %v869 = vpop.permute.xlu0 %868
    %870 = vrot.lane.b32.xlu0 %v178, 32
    %v871 = vpop.permute.xlu0 %870
    %v904 = vunpack.c.l.b16 %v728
    %v905 = vunpack.c.l.b16 %v729
    %v906 = vunpack.c.l.b16 %v730
    %v907 = vunpack.c.l.b16 %v731
    %v908 = vunpack.c.l.b16 %v732
    %v909 = vunpack.c.l.b16 %v733
    %v910 = vunpack.c.l.b16 %v734
    %v911 = vunpack.c.l.b16 %v735
    %v912 = vunpack.c.l.b16 %v736
    %v913 = vunpack.c.l.b16 %v737
    %v914 = vunpack.c.l.b16 %v738
    %v915 = vunpack.c.l.b16 %v739
    %v916 = vunpack.c.l.b16 %v740
    %v917 = vunpack.c.l.b16 %v741
    %v918 = vunpack.c.l.b16 %v742
    %v919 = vunpack.c.l.b16 %v743
    %v920 = vunpack.c.l.b16 %v744
    %v921 = vunpack.c.l.b16 %v745
    %v922 = vunpack.c.l.b16 %v746
    %v923 = vunpack.c.l.b16 %v747
    %v924 = vunpack.c.l.b16 %v748
    %v925 = vunpack.c.l.b16 %v749
    %v926 = vunpack.c.l.b16 %v750
    %v927 = vunpack.c.l.b16 %v751
    %v928 = vunpack.c.l.b16 %v752
    %v929 = vunpack.c.l.b16 %v753
    %v930 = vunpack.c.l.b16 %v754
    %v931 = vunpack.c.l.b16 %v755
    %v932 = vunpack.c.l.b16 %v756
    %v933 = vunpack.c.l.b16 %v757
    %v934 = vunpack.c.l.b16 %v758
    %v935 = vunpack.c.l.b16 %v759
    %v936 = vpack.c.b16 %v793, %v904
    %v937 = vpack.c.b16 %v905, %v905
    %v938 = vpack.c.b16 %v795, %v906
    %v939 = vpack.c.b16 %v907, %v907
    %v940 = vpack.c.b16 %v797, %v908
    %v941 = vpack.c.b16 %v909, %v909
    %v942 = vpack.c.b16 %v799, %v910
    %v943 = vpack.c.b16 %v911, %v911
    %v944 = vpack.c.b16 %v801, %v912
    %v945 = vpack.c.b16 %v913, %v913
    %v946 = vpack.c.b16 %v803, %v914
    %v947 = vpack.c.b16 %v915, %v915
    %v948 = vpack.c.b16 %v805, %v916
    %v949 = vpack.c.b16 %v917, %v917
    %v950 = vpack.c.b16 %v807, %v918
    %v951 = vpack.c.b16 %v919, %v919
    %v952 = vpack.c.b16 %v809, %v920
    %v953 = vpack.c.b16 %v921, %v921
    %v954 = vpack.c.b16 %v811, %v922
    %v955 = vpack.c.b16 %v923, %v923
    %v956 = vpack.c.b16 %v813, %v924
    %v957 = vpack.c.b16 %v925, %v925
    %v958 = vpack.c.b16 %v815, %v926
    %v959 = vpack.c.b16 %v927, %v927
    %v960 = vpack.c.b16 %v817, %v928
    %v961 = vpack.c.b16 %v929, %v929
    %v962 = vpack.c.b16 %v819, %v930
    %v963 = vpack.c.b16 %v931, %v931
    %v964 = vpack.c.b16 %v821, %v932
    %v965 = vpack.c.b16 %v933, %v933
    %v966 = vpack.c.b16 %v823, %v934
    %v967 = vpack.c.b16 %v935, %v935
    %vm968 = vcmask 1046528
    %v969 = vrot.slane %v936, 1
    %v970 = vrot.slane %v937, 1
    %v971 = vsel %vm968, %v969, %v970
    %v972 = vrot.slane %v938, 1
    %v973 = vrot.slane %v939, 1
    %v974 = vsel %vm968, %v972, %v973
    %v975 = vrot.slane %v940, 1
    %v976 = vrot.slane %v941, 1
    %v977 = vsel %vm968, %v975, %v976
    %v978 = vrot.slane %v942, 1
    %v979 = vrot.slane %v943, 1
    %v980 = vsel %vm968, %v978, %v979
    %v981 = vrot.slane %v944, 1
    %v982 = vrot.slane %v945, 1
    %v983 = vsel %vm968, %v981, %v982
    %v984 = vrot.slane %v946, 1
    %v985 = vrot.slane %v947, 1
    %v986 = vsel %vm968, %v984, %v985
    %v987 = vrot.slane %v948, 1
    %v988 = vrot.slane %v949, 1
    %v989 = vsel %vm968, %v987, %v988
    %v990 = vrot.slane %v950, 1
    %v991 = vrot.slane %v951, 1
    %v992 = vsel %vm968, %v990, %v991
    %v993 = vrot.slane %v952, 1
    %v994 = vrot.slane %v953, 1
    %v995 = vsel %vm968, %v993, %v994
    %v996 = vrot.slane %v954, 1
    %v997 = vrot.slane %v955, 1
    %v998 = vsel %vm968, %v996, %v997
    %v999 = vrot.slane %v956, 1
    %v1000 = vrot.slane %v957, 1
    %v1001 = vsel %vm968, %v999, %v1000
    %v1002 = vrot.slane %v958, 1
    %v1003 = vrot.slane %v959, 1
    %v1004 = vsel %vm968, %v1002, %v1003
    %v1005 = vrot.slane %v960, 1
    %v1006 = vrot.slane %v961, 1
    %v1007 = vsel %vm968, %v1005, %v1006
    %v1008 = vrot.slane %v962, 1
    %v1009 = vrot.slane %v963, 1
    %v1010 = vsel %vm968, %v1008, %v1009
    %v1011 = vrot.slane %v964, 1
    %v1012 = vrot.slane %v965, 1
    %v1013 = vsel %vm968, %v1011, %v1012
    %v1014 = vrot.slane %v966, 1
    %v1015 = vrot.slane %v967, 1
    %v1016 = vsel %vm968, %v1014, %v1015
    %1017 = vrot.lane.b32.xlu0 %v971, 64
    %v1018 = vpop.permute.xlu0 %1017
    %1019 = vrot.lane.b32.xlu0 %v974, 64
    %v1020 = vpop.permute.xlu0 %1019
    %1021 = vrot.lane.b32.xlu0 %v977, 64
    %v1022 = vpop.permute.xlu0 %1021
    %1023 = vrot.lane.b32.xlu0 %v980, 64
    %v1024 = vpop.permute.xlu0 %1023
    %1025 = vrot.lane.b32.xlu0 %v983, 64
    %v1026 = vpop.permute.xlu0 %1025
    %1027 = vrot.lane.b32.xlu0 %v986, 64
    %v1028 = vpop.permute.xlu0 %1027
    %1029 = vrot.lane.b32.xlu0 %v989, 64
    %v1030 = vpop.permute.xlu0 %1029
    %1031 = vrot.lane.b32.xlu0 %v992, 64
    %v1032 = vpop.permute.xlu0 %1031
    %1033 = vrot.lane.b32.xlu0 %v995, 64
    %v1034 = vpop.permute.xlu0 %1033
    %1035 = vrot.lane.b32.xlu0 %v998, 64
    %v1036 = vpop.permute.xlu0 %1035
    %1037 = vrot.lane.b32.xlu0 %v1001, 64
    %v1038 = vpop.permute.xlu0 %1037
    %1039 = vrot.lane.b32.xlu0 %v1004, 64
    %v1040 = vpop.permute.xlu0 %1039
    %1041 = vrot.lane.b32.xlu0 %v1007, 64
    %v1042 = vpop.permute.xlu0 %1041
    %1043 = vrot.lane.b32.xlu0 %v1010, 64
    %v1044 = vpop.permute.xlu0 %1043
    %1045 = vrot.lane.b32.xlu0 %v1013, 64
    %v1046 = vpop.permute.xlu0 %1045
    %1047 = vrot.lane.b32.xlu0 %v1016, 64
    %v1048 = vpop.permute.xlu0 %1047
    %vm1049 = vcmask 261120
    %v1052 = vsel %vm1049, %v824, %v841
    %v1055 = vsel %vm1049, %v825, %v843
    %v1058 = vsel %vm1049, %v826, %v845
    %v1061 = vsel %vm1049, %v827, %v847
    %v1064 = vsel %vm1049, %v828, %v849
    %v1067 = vsel %vm1049, %v829, %v851
    %v1070 = vsel %vm1049, %v830, %v853
    %v1073 = vsel %vm1049, %v831, %v855
    %v1076 = vsel %vm1049, %v832, %v857
    %v1079 = vsel %vm1049, %v833, %v859
    %v1082 = vsel %vm1049, %v834, %v861
    %v1085 = vsel %vm1049, %v835, %v863
    %v1088 = vsel %vm1049, %v836, %v865
    %v1091 = vsel %vm1049, %v837, %v867
    %v1094 = vsel %vm1049, %v838, %v869
    %v1097 = vsel %vm1049, %v839, %v871
    %vm1098 = vcmask 523264
    %v1100 = vsel %vm1098, %v1052, %v1018
    %v1102 = vsel %vm1098, %v1055, %v1020
    %v1104 = vsel %vm1098, %v1058, %v1022
    %v1106 = vsel %vm1098, %v1061, %v1024
    %v1108 = vsel %vm1098, %v1064, %v1026
    %v1110 = vsel %vm1098, %v1067, %v1028
    %v1112 = vsel %vm1098, %v1070, %v1030
    %v1114 = vsel %vm1098, %v1073, %v1032
    %v1116 = vsel %vm1098, %v1076, %v1034
    %v1118 = vsel %vm1098, %v1079, %v1036
    %v1120 = vsel %vm1098, %v1082, %v1038
    %v1122 = vsel %vm1098, %v1085, %v1040
    %v1124 = vsel %vm1098, %v1088, %v1042
    %v1126 = vsel %vm1098, %v1091, %v1044
    %v1128 = vsel %vm1098, %v1094, %v1046
    %v1130 = vsel %vm1098, %v1097, %v1048
    %v1131 = vld [vmem:[%s1] sm:$0xf]
    %v1132 = vld [vmem:[%s1 + $0x4] sm:$0xf]
    %v1133 = vld [vmem:[%s1 + $0x8] sm:$0xf]
    %v1134 = vld [vmem:[%s1 + $0xc] sm:$0xf]
    %v1135 = vld [vmem:[%s1 + $0x10] sm:$0xf]
    %v1136 = vld [vmem:[%s1 + $0x14] sm:$0xf]
    %v1137 = vld [vmem:[%s1 + $0x18] sm:$0xf]
    %v1138 = vld [vmem:[%s1 + $0x1c] sm:$0xf]
    %v1139 = vld [vmem:[%s1 + $0x20] sm:$0xf]
    %v1140 = vld [vmem:[%s1 + $0x24] sm:$0xf]
    %v1141 = vld [vmem:[%s1 + $0x28] sm:$0xf]
    %v1142 = vld [vmem:[%s1 + $0x2c] sm:$0xf]
    %v1143 = vld [vmem:[%s2] sm:$0x1]
    %v1145 = vlaneseq
    %v1146 = vshrl.u32 %v1145, 7
    %v1147 = vsub.s32 0, %v1146
    %v1148 = vrot.slane %v1143, %v1147
    %v1162 = vunpack.c.l.b16 %v1131
    %v1163 = vunpack.c.l.b16 %v1132
    %v1164 = vunpack.c.l.b16 %v1133
    %v1165 = vunpack.c.l.b16 %v1134
    %v1166 = vunpack.c.l.b16 %v1135
    %v1167 = vunpack.c.l.b16 %v1136
    %v1168 = vunpack.c.l.b16 %v1137
    %v1169 = vunpack.c.l.b16 %v1138
    %v1170 = vunpack.c.l.b16 %v1139
    %v1171 = vunpack.c.l.b16 %v1140
    %v1172 = vunpack.c.l.b16 %v1141
    %v1173 = vunpack.c.l.b16 %v1142
    %v1174 = vpack.c.b16 %v1163, %v1162
    %v1175 = vpack.c.b16 %v1165, %v1164
    %v1176 = vpack.c.b16 %v1167, %v1166
    %v1177 = vpack.c.b16 %v1169, %v1168
    %v1178 = vpack.c.b16 %v1171, %v1170
    %v1179 = vpack.c.b16 %v1173, %v1172
    %vm1186 = vcmask 785408
    %v1187 = vsel %vm1186, %v1100, 0
    %v1189 = vsel %vm1186, %v1102, 0
    %v1191 = vsel %vm1186, %v1104, 0
    %v1193 = vsel %vm1186, %v1106, 0
    %v1195 = vsel %vm1186, %v1108, 0
    %v1197 = vsel %vm1186, %v1110, 0
    %v1199 = vsel %vm1186, %v1112, 0
    %v1201 = vsel %vm1186, %v1114, 0
    %v1203 = vsel %vm1186, %v1116, 0
    %v1205 = vsel %vm1186, %v1118, 0
    %v1207 = vsel %vm1186, %v1120, 0
    %v1209 = vsel %vm1186, %v1122, 0
    %v1211 = vsel %vm1186, %v1124, 0
    %v1213 = vsel %vm1186, %v1126, 0
    %v1215 = vsel %vm1186, %v1128, 0
    %v1217 = vsel %vm1186, %v1130, 0
    %1219 = vmatprep.subr.bf16.mxu0 0
    %1220 = vmatpush1.bf16.msra.mxu0 %v1174
    %1221 = vmatprep.subr.bf16.mxu0 0
    %1222 = vmatpush1.bf16.msra.mxu0 %v1175
    %1223 = vmatprep.subr.bf16.mxu0 0
    %1224 = vmatpush1.bf16.msra.mxu0 %v1176
    %1225 = vmatprep.subr.bf16.mxu0 0
    %1226 = vmatpush1.bf16.msra.mxu0 %v1177
    %1227 = vmatprep.subr.bf16.mxu0 0
    %1228 = vmatpush1.bf16.msra.mxu0 %v1178
    %1229 = vmatprep.subr.bf16.mxu0 0
    %1230 = vmatpush1.bf16.msra.mxu0 %v1179
    %1231 = vmatprep.subr.bf16.mxu0 0
    %1232 = vmatpush1.bf16.msra.mxu0 0
    %1233 = vmatprep.subr.bf16.mxu0 0
    %1234 = vmatpush1.bf16.msra.mxu0 0
    %1235 = vmatprep.subr.bf16.mxu0 0
    %1236 = vmatpush1.bf16.msra.mxu0 0
    %1237 = vmatprep.subr.bf16.mxu0 0
    %1238 = vmatpush1.bf16.msra.mxu0 0
    %1239 = vmatprep.subr.bf16.mxu0 0
    %1240 = vmatpush1.bf16.msra.mxu0 0
    %1241 = vmatprep.subr.bf16.mxu0 0
    %1242 = vmatpush1.bf16.msra.mxu0 0
    %1243 = vmatprep.subr.bf16.mxu0 0
    %1244 = vmatpush1.bf16.msra.mxu0 0
    %1245 = vmatprep.subr.bf16.mxu0 0
    %1246 = vmatpush1.bf16.msra.mxu0 0
    %1247 = vmatprep.subr.bf16.mxu0 0
    %1248 = vmatpush1.bf16.msra.mxu0 0
    %1249 = vmatprep.subr.bf16.mxu0 0
    %1250 = vmatpush1.bf16.msra.mxu0 0
    %1251 = vmatprep.mubr.bf16.mxu0 0
    %1252 = vmatmul.mubr.bf16.gmra.mrb[0].mxu0 %v1187
    %v1253 = vpop.f32.mrb[0].mxu0
    %v1254 = vadd.f32 %v1148, %v1253
    %v1255 = vpop.f32.mrb[0].mxu0
    %v1256 = vpop.f32.mrb[0].mxu0
    %v1257 = vadd.f32 %v1148, %v1256
    %v1258 = vpop.f32.mrb[0].mxu0
    %1259 = vmatprep.mubr.bf16.mxu0 0
    %1260 = vmatmul.mubr.bf16.gmra.mrb[0].mxu0 %v1189
    %v1261 = vpop.f32.mrb[0].mxu0
    %v1262 = vadd.f32 %v1148, %v1261
    %v1263 = vpop.f32.mrb[0].mxu0
    %v1264 = vpop.f32.mrb[0].mxu0
    %v1265 = vadd.f32 %v1148, %v1264
    %v1266 = vpop.f32.mrb[0].mxu0
    %1267 = vmatprep.mubr.bf16.mxu0 0
    %1268 = vmatmul.mubr.bf16.gmra.mrb[0].mxu0 %v1191
    %v1269 = vpop.f32.mrb[0].mxu0
    %v1270 = vadd.f32 %v1148, %v1269
    %v1271 = vpop.f32.mrb[0].mxu0
    %v1272 = vpop.f32.mrb[0].mxu0
    %v1273 = vadd.f32 %v1148, %v1272
    %v1274 = vpop.f32.mrb[0].mxu0
    %1275 = vmatprep.mubr.bf16.mxu0 0
    %1276 = vmatmul.mubr.bf16.gmra.mrb[0].mxu0 %v1193
    %v1277 = vpop.f32.mrb[0].mxu0
    %v1278 = vadd.f32 %v1148, %v1277
    %v1279 = vpop.f32.mrb[0].mxu0
    %v1280 = vpop.f32.mrb[0].mxu0
    %v1281 = vadd.f32 %v1148, %v1280
    %v1282 = vpop.f32.mrb[0].mxu0
    %1283 = vmatprep.mubr.bf16.mxu0 0
    %1284 = vmatmul.mubr.bf16.gmra.mrb[0].mxu0 %v1195
    %v1285 = vpop.f32.mrb[0].mxu0
    %v1286 = vadd.f32 %v1148, %v1285
    %v1287 = vpop.f32.mrb[0].mxu0
    %v1288 = vpop.f32.mrb[0].mxu0
    %v1289 = vadd.f32 %v1148, %v1288
    %v1290 = vpop.f32.mrb[0].mxu0
    %1291 = vmatprep.mubr.bf16.mxu0 0
    %1292 = vmatmul.mubr.bf16.gmra.mrb[0].mxu0 %v1197
    %v1293 = vpop.f32.mrb[0].mxu0
    %v1294 = vadd.f32 %v1148, %v1293
    %v1295 = vpop.f32.mrb[0].mxu0
    %v1296 = vpop.f32.mrb[0].mxu0
    %v1297 = vadd.f32 %v1148, %v1296
    %v1298 = vpop.f32.mrb[0].mxu0
    %1299 = vmatprep.mubr.bf16.mxu0 0
    %1300 = vmatmul.mubr.bf16.gmra.mrb[0].mxu0 %v1199
    %v1301 = vpop.f32.mrb[0].mxu0
    %v1302 = vadd.f32 %v1148, %v1301
    %v1303 = vpop.f32.mrb[0].mxu0
    %v1304 = vpop.f32.mrb[0].mxu0
    %v1305 = vadd.f32 %v1148, %v1304
    %v1306 = vpop.f32.mrb[0].mxu0
    %1307 = vmatprep.mubr.bf16.mxu0 0
    %1308 = vmatmul.mubr.bf16.gmra.mrb[0].mxu0 %v1201
    %v1309 = vpop.f32.mrb[0].mxu0
    %v1310 = vadd.f32 %v1148, %v1309
    %v1311 = vpop.f32.mrb[0].mxu0
    %v1312 = vpop.f32.mrb[0].mxu0
    %v1313 = vadd.f32 %v1148, %v1312
    %v1314 = vpop.f32.mrb[0].mxu0
    %1315 = vmatprep.mubr.bf16.mxu0 0
    %1316 = vmatmul.mubr.bf16.gmra.mrb[0].mxu0 %v1203
    %v1317 = vpop.f32.mrb[0].mxu0
    %v1318 = vadd.f32 %v1148, %v1317
    %v1319 = vpop.f32.mrb[0].mxu0
    %v1320 = vpop.f32.mrb[0].mxu0
    %v1321 = vadd.f32 %v1148, %v1320
    %v1322 = vpop.f32.mrb[0].mxu0
    %1323 = vmatprep.mubr.bf16.mxu0 0
    %1324 = vmatmul.mubr.bf16.gmra.mrb[0].mxu0 %v1205
    %v1325 = vpop.f32.mrb[0].mxu0
    %v1326 = vadd.f32 %v1148, %v1325
    %v1327 = vpop.f32.mrb[0].mxu0
    %v1328 = vpop.f32.mrb[0].mxu0
    %v1329 = vadd.f32 %v1148, %v1328
    %v1330 = vpop.f32.mrb[0].mxu0
    %1331 = vmatprep.mubr.bf16.mxu0 0
    %1332 = vmatmul.mubr.bf16.gmra.mrb[0].mxu0 %v1207
    %v1333 = vpop.f32.mrb[0].mxu0
    %v1334 = vadd.f32 %v1148, %v1333
    %v1335 = vpop.f32.mrb[0].mxu0
    %v1336 = vpop.f32.mrb[0].mxu0
    %v1337 = vadd.f32 %v1148, %v1336
    %v1338 = vpop.f32.mrb[0].mxu0
    %1339 = vmatprep.mubr.bf16.mxu0 0
    %1340 = vmatmul.mubr.bf16.gmra.mrb[0].mxu0 %v1209
    %v1341 = vpop.f32.mrb[0].mxu0
    %v1342 = vadd.f32 %v1148, %v1341
    %v1343 = vpop.f32.mrb[0].mxu0
    %v1344 = vpop.f32.mrb[0].mxu0
    %v1345 = vadd.f32 %v1148, %v1344
    %v1346 = vpop.f32.mrb[0].mxu0
    %1347 = vmatprep.mubr.bf16.mxu0 0
    %1348 = vmatmul.mubr.bf16.gmra.mrb[0].mxu0 %v1211
    %v1349 = vpop.f32.mrb[0].mxu0
    %v1350 = vadd.f32 %v1148, %v1349
    %v1351 = vpop.f32.mrb[0].mxu0
    %v1352 = vpop.f32.mrb[0].mxu0
    %v1353 = vadd.f32 %v1148, %v1352
    %v1354 = vpop.f32.mrb[0].mxu0
    %1355 = vmatprep.mubr.bf16.mxu0 0
    %1356 = vmatmul.mubr.bf16.gmra.mrb[0].mxu0 %v1213
    %v1357 = vpop.f32.mrb[0].mxu0
    %v1358 = vadd.f32 %v1148, %v1357
    %v1359 = vpop.f32.mrb[0].mxu0
    %v1360 = vpop.f32.mrb[0].mxu0
    %v1361 = vadd.f32 %v1148, %v1360
    %v1362 = vpop.f32.mrb[0].mxu0
    %1363 = vmatprep.mubr.bf16.mxu0 0
    %1364 = vmatmul.mubr.bf16.gmra.mrb[0].mxu0 %v1215
    %v1365 = vpop.f32.mrb[0].mxu0
    %v1366 = vadd.f32 %v1148, %v1365
    %v1367 = vpop.f32.mrb[0].mxu0
    %v1368 = vpop.f32.mrb[0].mxu0
    %v1369 = vadd.f32 %v1148, %v1368
    %v1370 = vpop.f32.mrb[0].mxu0
    %1371 = vmatprep.mubr.bf16.mxu0 0
    %1372 = vmatmul.mubr.bf16.gmra.mrb[0].mxu0 %v1217
    %v1373 = vpop.f32.mrb[0].mxu0
    %v1374 = vadd.f32 %v1148, %v1373
    %v1375 = vpop.f32.mrb[0].mxu0
    %v1376 = vpop.f32.mrb[0].mxu0
    %v1377 = vadd.f32 %v1148, %v1376
    %v1378 = vpop.f32.mrb[0].mxu0
    %1379 = vdwg.mxu0
    %v1380 = vxor.u32 %v1254, 2147483648
    %v1381 = vxor.u32 %v1257, 2147483648
    %v1382 = vxor.u32 %v1262, 2147483648
    %v1383 = vxor.u32 %v1265, 2147483648
    %v1384 = vxor.u32 %v1270, 2147483648
    %v1385 = vxor.u32 %v1273, 2147483648
    %v1386 = vxor.u32 %v1278, 2147483648
    %v1387 = vxor.u32 %v1281, 2147483648
    %v1388 = vxor.u32 %v1286, 2147483648
    %v1389 = vxor.u32 %v1289, 2147483648
    %v1390 = vxor.u32 %v1294, 2147483648
    %v1391 = vxor.u32 %v1297, 2147483648
    %v1392 = vxor.u32 %v1302, 2147483648
    %v1393 = vxor.u32 %v1305, 2147483648
    %v1394 = vxor.u32 %v1310, 2147483648
    %v1395 = vxor.u32 %v1313, 2147483648
    %v1396 = vxor.u32 %v1318, 2147483648
    %v1397 = vxor.u32 %v1321, 2147483648
    %v1398 = vxor.u32 %v1326, 2147483648
    %v1399 = vxor.u32 %v1329, 2147483648
    %v1400 = vxor.u32 %v1334, 2147483648
    %v1401 = vxor.u32 %v1337, 2147483648
    %v1402 = vxor.u32 %v1342, 2147483648
    %v1403 = vxor.u32 %v1345, 2147483648
    %v1404 = vxor.u32 %v1350, 2147483648
    %v1405 = vxor.u32 %v1353, 2147483648
    %v1406 = vxor.u32 %v1358, 2147483648
    %v1407 = vxor.u32 %v1361, 2147483648
    %v1408 = vxor.u32 %v1366, 2147483648
    %v1409 = vxor.u32 %v1369, 2147483648
    %v1410 = vxor.u32 %v1374, 2147483648
    %v1411 = vxor.u32 %v1377, 2147483648
    %v1412 = vmul.f32 %v1380, 1.442695
    %v1413 = vpow.pop %v1412
    %v1414 = vmul.f32 %v1381, 1.442695
    %v1415 = vpow.pop %v1414
    %v1416 = vmul.f32 %v1382, 1.442695
    %v1417 = vpow.pop %v1416
    %v1418 = vmul.f32 %v1383, 1.442695
    %v1419 = vpow.pop %v1418
    %v1420 = vmul.f32 %v1384, 1.442695
    %v1421 = vpow.pop %v1420
    %v1422 = vmul.f32 %v1385, 1.442695
    %v1423 = vpow.pop %v1422
    %v1424 = vmul.f32 %v1386, 1.442695
    %v1425 = vpow.pop %v1424
    %v1426 = vmul.f32 %v1387, 1.442695
    %v1427 = vpow.pop %v1426
    %v1428 = vmul.f32 %v1388, 1.442695
    %v1429 = vpow.pop %v1428
    %v1430 = vmul.f32 %v1389, 1.442695
    %v1431 = vpow.pop %v1430
    %v1432 = vmul.f32 %v1390, 1.442695
    %v1433 = vpow.pop %v1432
    %v1434 = vmul.f32 %v1391, 1.442695
    %v1435 = vpow.pop %v1434
    %v1436 = vmul.f32 %v1392, 1.442695
    %v1437 = vpow.pop %v1436
    %v1438 = vmul.f32 %v1393, 1.442695
    %v1439 = vpow.pop %v1438
    %v1440 = vmul.f32 %v1394, 1.442695
    %v1441 = vpow.pop %v1440
    %v1442 = vmul.f32 %v1395, 1.442695
    %v1443 = vpow.pop %v1442
    %v1444 = vmul.f32 %v1396, 1.442695
    %v1445 = vpow.pop %v1444
    %v1446 = vmul.f32 %v1397, 1.442695
    %v1447 = vpow.pop %v1446
    %v1448 = vmul.f32 %v1398, 1.442695
    %v1449 = vpow.pop %v1448
    %v1450 = vmul.f32 %v1399, 1.442695
    %v1451 = vpow.pop %v1450
    %v1452 = vmul.f32 %v1400, 1.442695
    %v1453 = vpow.pop %v1452
    %v1454 = vmul.f32 %v1401, 1.442695
    %v1455 = vpow.pop %v1454
    %v1456 = vmul.f32 %v1402, 1.442695
    %v1457 = vpow.pop %v1456
    %v1458 = vmul.f32 %v1403, 1.442695
    %v1459 = vpow.pop %v1458
    %v1460 = vmul.f32 %v1404, 1.442695
    %v1461 = vpow.pop %v1460
    %v1462 = vmul.f32 %v1405, 1.442695
    %v1463 = vpow.pop %v1462
    %v1464 = vmul.f32 %v1406, 1.442695
    %v1465 = vpow.pop %v1464
    %v1466 = vmul.f32 %v1407, 1.442695
    %v1467 = vpow.pop %v1466
    %v1468 = vmul.f32 %v1408, 1.442695
    %v1469 = vpow.pop %v1468
    %v1470 = vmul.f32 %v1409, 1.442695
    %v1471 = vpow.pop %v1470
    %v1472 = vmul.f32 %v1410, 1.442695
    %v1473 = vpow.pop %v1472
    %v1474 = vmul.f32 %v1411, 1.442695
    %v1475 = vpow.pop %v1474
    %v1476 = vadd.f32 %v1413, 1.0
    %v1477 = vadd.f32 %v1415, 1.0
    %v1478 = vadd.f32 %v1417, 1.0
    %v1479 = vadd.f32 %v1419, 1.0
    %v1480 = vadd.f32 %v1421, 1.0
    %v1481 = vadd.f32 %v1423, 1.0
    %v1482 = vadd.f32 %v1425, 1.0
    %v1483 = vadd.f32 %v1427, 1.0
    %v1484 = vadd.f32 %v1429, 1.0
    %v1485 = vadd.f32 %v1431, 1.0
    %v1486 = vadd.f32 %v1433, 1.0
    %v1487 = vadd.f32 %v1435, 1.0
    %v1488 = vadd.f32 %v1437, 1.0
    %v1489 = vadd.f32 %v1439, 1.0
    %v1490 = vadd.f32 %v1441, 1.0
    %v1491 = vadd.f32 %v1443, 1.0
    %v1492 = vadd.f32 %v1445, 1.0
    %v1493 = vadd.f32 %v1447, 1.0
    %v1494 = vadd.f32 %v1449, 1.0
    %v1495 = vadd.f32 %v1451, 1.0
    %v1496 = vadd.f32 %v1453, 1.0
    %v1497 = vadd.f32 %v1455, 1.0
    %v1498 = vadd.f32 %v1457, 1.0
    %v1499 = vadd.f32 %v1459, 1.0
    %v1500 = vadd.f32 %v1461, 1.0
    %v1501 = vadd.f32 %v1463, 1.0
    %v1502 = vadd.f32 %v1465, 1.0
    %v1503 = vadd.f32 %v1467, 1.0
    %v1504 = vadd.f32 %v1469, 1.0
    %v1505 = vadd.f32 %v1471, 1.0
    %v1506 = vadd.f32 %v1473, 1.0
    %v1507 = vadd.f32 %v1475, 1.0
    %v1508 = vrcp.pop %v1476
    %v1509 = vmul.f32 1.0, %v1508
    %v1510 = vrcp.pop %v1477
    %v1511 = vmul.f32 1.0, %v1510
    %v1512 = vrcp.pop %v1478
    %v1513 = vmul.f32 1.0, %v1512
    %v1514 = vrcp.pop %v1479
    %v1515 = vmul.f32 1.0, %v1514
    %v1516 = vrcp.pop %v1480
    %v1517 = vmul.f32 1.0, %v1516
    %v1518 = vrcp.pop %v1481
    %v1519 = vmul.f32 1.0, %v1518
    %v1520 = vrcp.pop %v1482
    %v1521 = vmul.f32 1.0, %v1520
    %v1522 = vrcp.pop %v1483
    %v1523 = vmul.f32 1.0, %v1522
    %v1524 = vrcp.pop %v1484
    %v1525 = vmul.f32 1.0, %v1524
    %v1526 = vrcp.pop %v1485
    %v1527 = vmul.f32 1.0, %v1526
    %v1528 = vrcp.pop %v1486
    %v1529 = vmul.f32 1.0, %v1528
    %v1530 = vrcp.pop %v1487
    %v1531 = vmul.f32 1.0, %v1530
    %v1532 = vrcp.pop %v1488
    %v1533 = vmul.f32 1.0, %v1532
    %v1534 = vrcp.pop %v1489
    %v1535 = vmul.f32 1.0, %v1534
    %v1536 = vrcp.pop %v1490
    %v1537 = vmul.f32 1.0, %v1536
    %v1538 = vrcp.pop %v1491
    %v1539 = vmul.f32 1.0, %v1538
    %v1540 = vrcp.pop %v1492
    %v1541 = vmul.f32 1.0, %v1540
    %v1542 = vrcp.pop %v1493
    %v1543 = vmul.f32 1.0, %v1542
    %v1544 = vrcp.pop %v1494
    %v1545 = vmul.f32 1.0, %v1544
    %v1546 = vrcp.pop %v1495
    %v1547 = vmul.f32 1.0, %v1546
    %v1548 = vrcp.pop %v1496
    %v1549 = vmul.f32 1.0, %v1548
    %v1550 = vrcp.pop %v1497
    %v1551 = vmul.f32 1.0, %v1550
    %v1552 = vrcp.pop %v1498
    %v1553 = vmul.f32 1.0, %v1552
    %v1554 = vrcp.pop %v1499
    %v1555 = vmul.f32 1.0, %v1554
    %v1556 = vrcp.pop %v1500
    %v1557 = vmul.f32 1.0, %v1556
    %v1558 = vrcp.pop %v1501
    %v1559 = vmul.f32 1.0, %v1558
    %v1560 = vrcp.pop %v1502
    %v1561 = vmul.f32 1.0, %v1560
    %v1562 = vrcp.pop %v1503
    %v1563 = vmul.f32 1.0, %v1562
    %v1564 = vrcp.pop %v1504
    %v1565 = vmul.f32 1.0, %v1564
    %v1566 = vrcp.pop %v1505
    %v1567 = vmul.f32 1.0, %v1566
    %v1568 = vrcp.pop %v1506
    %v1569 = vmul.f32 1.0, %v1568
    %v1570 = vrcp.pop %v1507
    %v1571 = vmul.f32 1.0, %v1570
    %1604 = vrot.lane.b32.xlu0 %v1509, 96
    %v1605 = vpop.permute.xlu0 %1604
    %1606 = vrot.lane.b32.xlu0 %v1511, 96
    %v1607 = vpop.permute.xlu0 %1606
    %1608 = vrot.lane.b32.xlu0 %v1513, 96
    %v1609 = vpop.permute.xlu0 %1608
    %1610 = vrot.lane.b32.xlu0 %v1515, 96
    %v1611 = vpop.permute.xlu0 %1610
    %1612 = vrot.lane.b32.xlu0 %v1517, 96
    %v1613 = vpop.permute.xlu0 %1612
    %1614 = vrot.lane.b32.xlu0 %v1519, 96
    %v1615 = vpop.permute.xlu0 %1614
    %1616 = vrot.lane.b32.xlu0 %v1521, 96
    %v1617 = vpop.permute.xlu0 %1616
    %1618 = vrot.lane.b32.xlu0 %v1523, 96
    %v1619 = vpop.permute.xlu0 %1618
    %1620 = vrot.lane.b32.xlu0 %v1525, 96
    %v1621 = vpop.permute.xlu0 %1620
    %1622 = vrot.lane.b32.xlu0 %v1527, 96
    %v1623 = vpop.permute.xlu0 %1622
    %1624 = vrot.lane.b32.xlu0 %v1529, 96
    %v1625 = vpop.permute.xlu0 %1624
    %1626 = vrot.lane.b32.xlu0 %v1531, 96
    %v1627 = vpop.permute.xlu0 %1626
    %1628 = vrot.lane.b32.xlu0 %v1533, 96
    %v1629 = vpop.permute.xlu0 %1628
    %1630 = vrot.lane.b32.xlu0 %v1535, 96
    %v1631 = vpop.permute.xlu0 %1630
    %1632 = vrot.lane.b32.xlu0 %v1537, 96
    %v1633 = vpop.permute.xlu0 %1632
    %1634 = vrot.lane.b32.xlu0 %v1539, 96
    %v1635 = vpop.permute.xlu0 %1634
    %1636 = vrot.lane.b32.xlu0 %v1541, 96
    %v1637 = vpop.permute.xlu0 %1636
    %1638 = vrot.lane.b32.xlu0 %v1543, 96
    %v1639 = vpop.permute.xlu0 %1638
    %1640 = vrot.lane.b32.xlu0 %v1545, 96
    %v1641 = vpop.permute.xlu0 %1640
    %1642 = vrot.lane.b32.xlu0 %v1547, 96
    %v1643 = vpop.permute.xlu0 %1642
    %1644 = vrot.lane.b32.xlu0 %v1549, 96
    %v1645 = vpop.permute.xlu0 %1644
    %1646 = vrot.lane.b32.xlu0 %v1551, 96
    %v1647 = vpop.permute.xlu0 %1646
    %1648 = vrot.lane.b32.xlu0 %v1553, 96
    %v1649 = vpop.permute.xlu0 %1648
    %1650 = vrot.lane.b32.xlu0 %v1555, 96
    %v1651 = vpop.permute.xlu0 %1650
    %1652 = vrot.lane.b32.xlu0 %v1557, 96
    %v1653 = vpop.permute.xlu0 %1652
    %1654 = vrot.lane.b32.xlu0 %v1559, 96
    %v1655 = vpop.permute.xlu0 %1654
    %1656 = vrot.lane.b32.xlu0 %v1561, 96
    %v1657 = vpop.permute.xlu0 %1656
    %1658 = vrot.lane.b32.xlu0 %v1563, 96
    %v1659 = vpop.permute.xlu0 %1658
    %1660 = vrot.lane.b32.xlu0 %v1565, 96
    %v1661 = vpop.permute.xlu0 %1660
    %1662 = vrot.lane.b32.xlu0 %v1567, 96
    %v1663 = vpop.permute.xlu0 %1662
    %1664 = vrot.lane.b32.xlu0 %v1569, 96
    %v1665 = vpop.permute.xlu0 %1664
    %1666 = vrot.lane.b32.xlu0 %v1571, 96
    %v1667 = vpop.permute.xlu0 %1666
    %v1700 = vmul.f32 %v1254, %v1605
    %v1701 = vmul.f32 %v1257, %v1607
    %v1702 = vmul.f32 %v1262, %v1609
    %v1703 = vmul.f32 %v1265, %v1611
    %v1704 = vmul.f32 %v1270, %v1613
    %v1705 = vmul.f32 %v1273, %v1615
    %v1706 = vmul.f32 %v1278, %v1617
    %v1707 = vmul.f32 %v1281, %v1619
    %v1708 = vmul.f32 %v1286, %v1621
    %v1709 = vmul.f32 %v1289, %v1623
    %v1710 = vmul.f32 %v1294, %v1625
    %v1711 = vmul.f32 %v1297, %v1627
    %v1712 = vmul.f32 %v1302, %v1629
    %v1713 = vmul.f32 %v1305, %v1631
    %v1714 = vmul.f32 %v1310, %v1633
    %v1715 = vmul.f32 %v1313, %v1635
    %v1716 = vmul.f32 %v1318, %v1637
    %v1717 = vmul.f32 %v1321, %v1639
    %v1718 = vmul.f32 %v1326, %v1641
    %v1719 = vmul.f32 %v1329, %v1643
    %v1720 = vmul.f32 %v1334, %v1645
    %v1721 = vmul.f32 %v1337, %v1647
    %v1722 = vmul.f32 %v1342, %v1649
    %v1723 = vmul.f32 %v1345, %v1651
    %v1724 = vmul.f32 %v1350, %v1653
    %v1725 = vmul.f32 %v1353, %v1655
    %v1726 = vmul.f32 %v1358, %v1657
    %v1727 = vmul.f32 %v1361, %v1659
    %v1728 = vmul.f32 %v1366, %v1661
    %v1729 = vmul.f32 %v1369, %v1663
    %v1730 = vmul.f32 %v1374, %v1665
    %v1731 = vmul.f32 %v1377, %v1667
    %v1732 = vadd.f32 %v131, %v1700
    %v1733 = vadd.f32 %v132, %v1701
    %v1734 = vadd.f32 %v133, %v1702
    %v1735 = vadd.f32 %v134, %v1703
    %v1736 = vadd.f32 %v135, %v1704
    %v1737 = vadd.f32 %v136, %v1705
    %v1738 = vadd.f32 %v137, %v1706
    %v1739 = vadd.f32 %v138, %v1707
    %v1740 = vadd.f32 %v139, %v1708
    %v1741 = vadd.f32 %v140, %v1709
    %v1742 = vadd.f32 %v141, %v1710
    %v1743 = vadd.f32 %v142, %v1711
    %v1744 = vadd.f32 %v143, %v1712
    %v1745 = vadd.f32 %v144, %v1713
    %v1746 = vadd.f32 %v145, %v1714
    %v1747 = vadd.f32 %v146, %v1715
    %v1748 = vadd.f32 %v147, %v1716
    %v1749 = vadd.f32 %v148, %v1717
    %v1750 = vadd.f32 %v149, %v1718
    %v1751 = vadd.f32 %v150, %v1719
    %v1752 = vadd.f32 %v151, %v1720
    %v1753 = vadd.f32 %v152, %v1721
    %v1754 = vadd.f32 %v153, %v1722
    %v1755 = vadd.f32 %v154, %v1723
    %v1756 = vadd.f32 %v155, %v1724
    %v1757 = vadd.f32 %v156, %v1725
    %v1758 = vadd.f32 %v157, %v1726
    %v1759 = vadd.f32 %v158, %v1727
    %v1760 = vadd.f32 %v159, %v1728
    %v1761 = vadd.f32 %v160, %v1729
    %v1762 = vadd.f32 %v161, %v1730
    %v1763 = vadd.f32 %v162, %v1731
    %v1764 = vmul.f32 %v1732, 0.70710677
    %v1765 = vmul.f32 %v1733, 0.70710677
    %v1766 = vmul.f32 %v1734, 0.70710677
    %v1767 = vmul.f32 %v1735, 0.70710677
    %v1768 = vmul.f32 %v1736, 0.70710677
    %v1769 = vmul.f32 %v1737, 0.70710677
    %v1770 = vmul.f32 %v1738, 0.70710677
    %v1771 = vmul.f32 %v1739, 0.70710677
    %v1772 = vmul.f32 %v1740, 0.70710677
    %v1773 = vmul.f32 %v1741, 0.70710677
    %v1774 = vmul.f32 %v1742, 0.70710677
    %v1775 = vmul.f32 %v1743, 0.70710677
    %v1776 = vmul.f32 %v1744, 0.70710677
    %v1777 = vmul.f32 %v1745, 0.70710677
    %v1778 = vmul.f32 %v1746, 0.70710677
    %v1779 = vmul.f32 %v1747, 0.70710677
    %v1780 = vmul.f32 %v1748, 0.70710677
    %v1781 = vmul.f32 %v1749, 0.70710677
    %v1782 = vmul.f32 %v1750, 0.70710677
    %v1783 = vmul.f32 %v1751, 0.70710677
    %v1784 = vmul.f32 %v1752, 0.70710677
    %v1785 = vmul.f32 %v1753, 0.70710677
    %v1786 = vmul.f32 %v1754, 0.70710677
    %v1787 = vmul.f32 %v1755, 0.70710677
    %v1788 = vmul.f32 %v1756, 0.70710677
    %v1789 = vmul.f32 %v1757, 0.70710677
    %v1790 = vmul.f32 %v1758, 0.70710677
    %v1791 = vmul.f32 %v1759, 0.70710677
    %v1792 = vmul.f32 %v1760, 0.70710677
    %v1793 = vmul.f32 %v1761, 0.70710677
    %v1794 = vmul.f32 %v1762, 0.70710677
    %v1795 = vmul.f32 %v1763, 0.70710677
    %v1796 = vpack.c.bf16 %v1765, %v1764
    %v1797 = vpack.c.bf16 %v1767, %v1766
    %v1798 = vpack.c.bf16 %v1769, %v1768
    %v1799 = vpack.c.bf16 %v1771, %v1770
    %v1800 = vpack.c.bf16 %v1773, %v1772
    %v1801 = vpack.c.bf16 %v1775, %v1774
    %v1802 = vpack.c.bf16 %v1777, %v1776
    %v1803 = vpack.c.bf16 %v1779, %v1778
    %v1804 = vpack.c.bf16 %v1781, %v1780
    %v1805 = vpack.c.bf16 %v1783, %v1782
    %v1806 = vpack.c.bf16 %v1785, %v1784
    %v1807 = vpack.c.bf16 %v1787, %v1786
    %v1808 = vpack.c.bf16 %v1789, %v1788
    %v1809 = vpack.c.bf16 %v1791, %v1790
    %v1810 = vpack.c.bf16 %v1793, %v1792
    %v1811 = vpack.c.bf16 %v1795, %v1794
    %v1828 = vunpack.c.l.b16 %v1796
    %v1829 = vunpack.c.h.b16 %v1796
    %v1830 = vunpack.c.l.b16 %v1797
    %v1831 = vunpack.c.h.b16 %v1797
    %v1832 = vunpack.c.l.b16 %v1798
    %v1833 = vunpack.c.h.b16 %v1798
    %v1834 = vunpack.c.l.b16 %v1799
    %v1835 = vunpack.c.h.b16 %v1799
    %v1836 = vunpack.c.l.b16 %v1800
    %v1837 = vunpack.c.h.b16 %v1800
    %v1838 = vunpack.c.l.b16 %v1801
    %v1839 = vunpack.c.h.b16 %v1801
    %v1840 = vunpack.c.l.b16 %v1802
    %v1841 = vunpack.c.h.b16 %v1802
    %v1842 = vunpack.c.l.b16 %v1803
    %v1843 = vunpack.c.h.b16 %v1803
    %v1844 = vunpack.c.l.b16 %v1804
    %v1845 = vunpack.c.h.b16 %v1804
    %v1846 = vunpack.c.l.b16 %v1805
    %v1847 = vunpack.c.h.b16 %v1805
    %v1848 = vunpack.c.l.b16 %v1806
    %v1849 = vunpack.c.h.b16 %v1806
    %v1850 = vunpack.c.l.b16 %v1807
    %v1851 = vunpack.c.h.b16 %v1807
    %v1852 = vunpack.c.l.b16 %v1808
    %v1853 = vunpack.c.h.b16 %v1808
    %v1854 = vunpack.c.l.b16 %v1809
    %v1855 = vunpack.c.h.b16 %v1809
    %v1856 = vunpack.c.l.b16 %v1810
    %v1857 = vunpack.c.h.b16 %v1810
    %v1858 = vunpack.c.l.b16 %v1811
    %v1859 = vunpack.c.h.b16 %v1811
    %v1860 = vpack.c.b16 %v1828, %v1828
    %v1861 = vpack.c.b16 %v1829, %v1829
    %v1862 = vpack.c.b16 %v1830, %v1830
    %v1863 = vpack.c.b16 %v1831, %v1831
    %v1864 = vpack.c.b16 %v1832, %v1832
    %v1865 = vpack.c.b16 %v1833, %v1833
    %v1866 = vpack.c.b16 %v1834, %v1834
    %v1867 = vpack.c.b16 %v1835, %v1835
    %v1868 = vpack.c.b16 %v1836, %v1836
    %v1869 = vpack.c.b16 %v1837, %v1837
    %v1870 = vpack.c.b16 %v1838, %v1838
    %v1871 = vpack.c.b16 %v1839, %v1839
    %v1872 = vpack.c.b16 %v1840, %v1840
    %v1873 = vpack.c.b16 %v1841, %v1841
    %v1874 = vpack.c.b16 %v1842, %v1842
    %v1875 = vpack.c.b16 %v1843, %v1843
    %v1876 = vpack.c.b16 %v1844, %v1844
    %v1877 = vpack.c.b16 %v1845, %v1845
    %v1878 = vpack.c.b16 %v1846, %v1846
    %v1879 = vpack.c.b16 %v1847, %v1847
    %v1880 = vpack.c.b16 %v1848, %v1848
    %v1881 = vpack.c.b16 %v1849, %v1849
    %v1882 = vpack.c.b16 %v1850, %v1850
    %v1883 = vpack.c.b16 %v1851, %v1851
    %v1884 = vpack.c.b16 %v1852, %v1852
    %v1885 = vpack.c.b16 %v1853, %v1853
    %v1886 = vpack.c.b16 %v1854, %v1854
    %v1887 = vpack.c.b16 %v1855, %v1855
    %v1888 = vpack.c.b16 %v1856, %v1856
    %v1889 = vpack.c.b16 %v1857, %v1857
    %v1890 = vpack.c.b16 %v1858, %v1858
    %v1891 = vpack.c.b16 %v1859, %v1859
    %v1893 = vshrl.u32 %v1860, 16
    %v1895 = vrot.slane %v1893, 7
    %v1896 = vshll.u32 %v1860, 16
    %v1898 = vor.u32 %v1895, %v1896
    %v1899 = vrot.slane %v1895, 4
    %v1901 = vshrl.u32 %v1861, 16
    %v1903 = vrot.slane %v1901, 7
    %v1904 = vshll.u32 %v1861, 16
    %v1906 = vor.u32 %v1903, %v1904
    %v1907 = vsel %vm260, %v1899, %v1906
    %v1908 = vrot.slane %v1903, 4
    %v1910 = vshrl.u32 %v1862, 16
    %v1912 = vrot.slane %v1910, 7
    %v1913 = vshll.u32 %v1862, 16
    %v1915 = vor.u32 %v1912, %v1913
    %v1916 = vrot.slane %v1912, 4
    %v1918 = vshrl.u32 %v1863, 16
    %v1920 = vrot.slane %v1918, 7
    %v1921 = vshll.u32 %v1863, 16
    %v1923 = vor.u32 %v1920, %v1921
    %v1924 = vsel %vm260, %v1916, %v1923
    %v1925 = vrot.slane %v1920, 4
    %v1927 = vshrl.u32 %v1864, 16
    %v1929 = vrot.slane %v1927, 7
    %v1930 = vshll.u32 %v1864, 16
    %v1932 = vor.u32 %v1929, %v1930
    %v1933 = vrot.slane %v1929, 4
    %v1935 = vshrl.u32 %v1865, 16
    %v1937 = vrot.slane %v1935, 7
    %v1938 = vshll.u32 %v1865, 16
    %v1940 = vor.u32 %v1937, %v1938
    %v1941 = vsel %vm260, %v1933, %v1940
    %v1942 = vrot.slane %v1937, 4
    %v1944 = vshrl.u32 %v1866, 16
    %v1946 = vrot.slane %v1944, 7
    %v1947 = vshll.u32 %v1866, 16
    %v1949 = vor.u32 %v1946, %v1947
    %v1950 = vrot.slane %v1946, 4
    %v1952 = vshrl.u32 %v1867, 16
    %v1954 = vrot.slane %v1952, 7
    %v1955 = vshll.u32 %v1867, 16
    %v1957 = vor.u32 %v1954, %v1955
    %v1958 = vsel %vm260, %v1950, %v1957
    %v1959 = vrot.slane %v1954, 4
    %v1961 = vshrl.u32 %v1868, 16
    %v1963 = vrot.slane %v1961, 7
    %v1964 = vshll.u32 %v1868, 16
    %v1966 = vor.u32 %v1963, %v1964
    %v1967 = vrot.slane %v1963, 4
    %v1969 = vshrl.u32 %v1869, 16
    %v1971 = vrot.slane %v1969, 7
    %v1972 = vshll.u32 %v1869, 16
    %v1974 = vor.u32 %v1971, %v1972
    %v1975 = vsel %vm260, %v1967, %v1974
    %v1976 = vrot.slane %v1971, 4
    %v1978 = vshrl.u32 %v1870, 16
    %v1980 = vrot.slane %v1978, 7
    %v1981 = vshll.u32 %v1870, 16
    %v1983 = vor.u32 %v1980, %v1981
    %v1984 = vrot.slane %v1980, 4
    %v1986 = vshrl.u32 %v1871, 16
    %v1988 = vrot.slane %v1986, 7
    %v1989 = vshll.u32 %v1871, 16
    %v1991 = vor.u32 %v1988, %v1989
    %v1992 = vsel %vm260, %v1984, %v1991
    %v1993 = vrot.slane %v1988, 4
    %v1995 = vshrl.u32 %v1872, 16
    %v1997 = vrot.slane %v1995, 7
    %v1998 = vshll.u32 %v1872, 16
    %v2000 = vor.u32 %v1997, %v1998
    %v2001 = vrot.slane %v1997, 4
    %v2003 = vshrl.u32 %v1873, 16
    %v2005 = vrot.slane %v2003, 7
    %v2006 = vshll.u32 %v1873, 16
    %v2008 = vor.u32 %v2005, %v2006
    %v2009 = vsel %vm260, %v2001, %v2008
    %v2010 = vrot.slane %v2005, 4
    %v2012 = vshrl.u32 %v1874, 16
    %v2014 = vrot.slane %v2012, 7
    %v2015 = vshll.u32 %v1874, 16
    %v2017 = vor.u32 %v2014, %v2015
    %v2018 = vrot.slane %v2014, 4
    %v2020 = vshrl.u32 %v1875, 16
    %v2022 = vrot.slane %v2020, 7
    %v2023 = vshll.u32 %v1875, 16
    %v2025 = vor.u32 %v2022, %v2023
    %v2026 = vsel %vm260, %v2018, %v2025
    %v2027 = vrot.slane %v2022, 4
    %v2029 = vshrl.u32 %v1876, 16
    %v2031 = vrot.slane %v2029, 7
    %v2032 = vshll.u32 %v1876, 16
    %v2034 = vor.u32 %v2031, %v2032
    %v2035 = vrot.slane %v2031, 4
    %v2037 = vshrl.u32 %v1877, 16
    %v2039 = vrot.slane %v2037, 7
    %v2040 = vshll.u32 %v1877, 16
    %v2042 = vor.u32 %v2039, %v2040
    %v2043 = vsel %vm260, %v2035, %v2042
    %v2044 = vrot.slane %v2039, 4
    %v2046 = vshrl.u32 %v1878, 16
    %v2048 = vrot.slane %v2046, 7
    %v2049 = vshll.u32 %v1878, 16
    %v2051 = vor.u32 %v2048, %v2049
    %v2052 = vrot.slane %v2048, 4
    %v2054 = vshrl.u32 %v1879, 16
    %v2056 = vrot.slane %v2054, 7
    %v2057 = vshll.u32 %v1879, 16
    %v2059 = vor.u32 %v2056, %v2057
    %v2060 = vsel %vm260, %v2052, %v2059
    %v2061 = vrot.slane %v2056, 4
    %v2063 = vshrl.u32 %v1880, 16
    %v2065 = vrot.slane %v2063, 7
    %v2066 = vshll.u32 %v1880, 16
    %v2068 = vor.u32 %v2065, %v2066
    %v2069 = vrot.slane %v2065, 4
    %v2071 = vshrl.u32 %v1881, 16
    %v2073 = vrot.slane %v2071, 7
    %v2074 = vshll.u32 %v1881, 16
    %v2076 = vor.u32 %v2073, %v2074
    %v2077 = vsel %vm260, %v2069, %v2076
    %v2078 = vrot.slane %v2073, 4
    %v2080 = vshrl.u32 %v1882, 16
    %v2082 = vrot.slane %v2080, 7
    %v2083 = vshll.u32 %v1882, 16
    %v2085 = vor.u32 %v2082, %v2083
    %v2086 = vrot.slane %v2082, 4
    %v2088 = vshrl.u32 %v1883, 16
    %v2090 = vrot.slane %v2088, 7
    %v2091 = vshll.u32 %v1883, 16
    %v2093 = vor.u32 %v2090, %v2091
    %v2094 = vsel %vm260, %v2086, %v2093
    %v2095 = vrot.slane %v2090, 4
    %v2097 = vshrl.u32 %v1884, 16
    %v2099 = vrot.slane %v2097, 7
    %v2100 = vshll.u32 %v1884, 16
    %v2102 = vor.u32 %v2099, %v2100
    %v2103 = vrot.slane %v2099, 4
    %v2105 = vshrl.u32 %v1885, 16
    %v2107 = vrot.slane %v2105, 7
    %v2108 = vshll.u32 %v1885, 16
    %v2110 = vor.u32 %v2107, %v2108
    %v2111 = vsel %vm260, %v2103, %v2110
    %v2112 = vrot.slane %v2107, 4
    %v2114 = vshrl.u32 %v1886, 16
    %v2116 = vrot.slane %v2114, 7
    %v2117 = vshll.u32 %v1886, 16
    %v2119 = vor.u32 %v2116, %v2117
    %v2120 = vrot.slane %v2116, 4
    %v2122 = vshrl.u32 %v1887, 16
    %v2124 = vrot.slane %v2122, 7
    %v2125 = vshll.u32 %v1887, 16
    %v2127 = vor.u32 %v2124, %v2125
    %v2128 = vsel %vm260, %v2120, %v2127
    %v2129 = vrot.slane %v2124, 4
    %v2131 = vshrl.u32 %v1888, 16
    %v2133 = vrot.slane %v2131, 7
    %v2134 = vshll.u32 %v1888, 16
    %v2136 = vor.u32 %v2133, %v2134
    %v2137 = vrot.slane %v2133, 4
    %v2139 = vshrl.u32 %v1889, 16
    %v2141 = vrot.slane %v2139, 7
    %v2142 = vshll.u32 %v1889, 16
    %v2144 = vor.u32 %v2141, %v2142
    %v2145 = vsel %vm260, %v2137, %v2144
    %v2146 = vrot.slane %v2141, 4
    %v2148 = vshrl.u32 %v1890, 16
    %v2150 = vrot.slane %v2148, 7
    %v2151 = vshll.u32 %v1890, 16
    %v2153 = vor.u32 %v2150, %v2151
    %v2154 = vrot.slane %v2150, 4
    %v2156 = vshrl.u32 %v1891, 16
    %v2158 = vrot.slane %v2156, 7
    %v2159 = vshll.u32 %v1891, 16
    %v2161 = vor.u32 %v2158, %v2159
    %v2162 = vsel %vm260, %v2154, %v2161
    %v2163 = vrot.slane %v2158, 4
    %v2212 = vld [vmem:[#allocation2] sm:$0xf]
    %v2213 = vsel %vm582, %v1898, %v2212
    %2214 = vst [vmem:[#allocation2] sm:$0xf] %v2213
    %2215 = vst.msk [vmem:[#allocation2 + $0x4] sm:$0xf] %vm586, %v1907
    %v2216 = vld [vmem:[#allocation2 + $0x8] sm:$0x1]
    %v2217 = vsel %vm32, %v1908, %v2216
    %2218 = vst [vmem:[#allocation2 + $0x8] sm:$0x1] %v2217
    %v2219 = vld [vmem:[#allocation2 + $0xc] sm:$0xf]
    %v2220 = vsel %vm582, %v1915, %v2219
    %2221 = vst [vmem:[#allocation2 + $0xc] sm:$0xf] %v2220
    %2222 = vst.msk [vmem:[#allocation2 + $0x10] sm:$0xf] %vm586, %v1924
    %v2223 = vld [vmem:[#allocation2 + $0x14] sm:$0x1]
    %v2224 = vsel %vm32, %v1925, %v2223
    %2225 = vst [vmem:[#allocation2 + $0x14] sm:$0x1] %v2224
    %v2226 = vld [vmem:[#allocation2 + $0x18] sm:$0xf]
    %v2227 = vsel %vm582, %v1932, %v2226
    %2228 = vst [vmem:[#allocation2 + $0x18] sm:$0xf] %v2227
    %2229 = vst.msk [vmem:[#allocation2 + $0x1c] sm:$0xf] %vm586, %v1941
    %v2230 = vld [vmem:[#allocation2 + $0x20] sm:$0x1]
    %v2231 = vsel %vm32, %v1942, %v2230
    %2232 = vst [vmem:[#allocation2 + $0x20] sm:$0x1] %v2231
    %v2233 = vld [vmem:[#allocation2 + $0x24] sm:$0xf]
    %v2234 = vsel %vm582, %v1949, %v2233
    %2235 = vst [vmem:[#allocation2 + $0x24] sm:$0xf] %v2234
    %2236 = vst.msk [vmem:[#allocation2 + $0x28] sm:$0xf] %vm586, %v1958
    %v2237 = vld [vmem:[#allocation2 + $0x2c] sm:$0x1]
    %v2238 = vsel %vm32, %v1959, %v2237
    %2239 = vst [vmem:[#allocation2 + $0x2c] sm:$0x1] %v2238
    %v2240 = vld [vmem:[#allocation2 + $0x30] sm:$0xf]
    %v2241 = vsel %vm582, %v1966, %v2240
    %2242 = vst [vmem:[#allocation2 + $0x30] sm:$0xf] %v2241
    %2243 = vst.msk [vmem:[#allocation2 + $0x34] sm:$0xf] %vm586, %v1975
    %v2244 = vld [vmem:[#allocation2 + $0x38] sm:$0x1]
    %v2245 = vsel %vm32, %v1976, %v2244
    %2246 = vst [vmem:[#allocation2 + $0x38] sm:$0x1] %v2245
    %v2247 = vld [vmem:[#allocation2 + $0x3c] sm:$0xf]
    %v2248 = vsel %vm582, %v1983, %v2247
    %2249 = vst [vmem:[#allocation2 + $0x3c] sm:$0xf] %v2248
    %2250 = vst.msk [vmem:[#allocation2 + $0x40] sm:$0xf] %vm586, %v1992
    %v2251 = vld [vmem:[#allocation2 + $0x44] sm:$0x1]
    %v2252 = vsel %vm32, %v1993, %v2251
    %2253 = vst [vmem:[#allocation2 + $0x44] sm:$0x1] %v2252
    %v2254 = vld [vmem:[#allocation2 + $0x48] sm:$0xf]
    %v2255 = vsel %vm582, %v2000, %v2254
    %2256 = vst [vmem:[#allocation2 + $0x48] sm:$0xf] %v2255
    %2257 = vst.msk [vmem:[#allocation2 + $0x4c] sm:$0xf] %vm586, %v2009
    %v2258 = vld [vmem:[#allocation2 + $0x50] sm:$0x1]
    %v2259 = vsel %vm32, %v2010, %v2258
    %2260 = vst [vmem:[#allocation2 + $0x50] sm:$0x1] %v2259
    %v2261 = vld [vmem:[#allocation2 + $0x54] sm:$0xf]
    %v2262 = vsel %vm582, %v2017, %v2261
    %2263 = vst [vmem:[#allocation2 + $0x54] sm:$0xf] %v2262
    %2264 = vst.msk [vmem:[#allocation2 + $0x58] sm:$0xf] %vm586, %v2026
    %v2265 = vld [vmem:[#allocation2 + $0x5c] sm:$0x1]
    %v2266 = vsel %vm32, %v2027, %v2265
    %2267 = vst [vmem:[#allocation2 + $0x5c] sm:$0x1] %v2266
    %v2268 = vld [vmem:[#allocation2 + $0x60] sm:$0xf]
    %v2269 = vsel %vm582, %v2034, %v2268
    %2270 = vst [vmem:[#allocation2 + $0x60] sm:$0xf] %v2269
    %2271 = vst.msk [vmem:[#allocation2 + $0x64] sm:$0xf] %vm586, %v2043
    %v2272 = vld [vmem:[#allocation2 + $0x68] sm:$0x1]
    %v2273 = vsel %vm32, %v2044, %v2272
    %2274 = vst [vmem:[#allocation2 + $0x68] sm:$0x1] %v2273
    %v2275 = vld [vmem:[#allocation2 + $0x6c] sm:$0xf]
    %v2276 = vsel %vm582, %v2051, %v2275
    %2277 = vst [vmem:[#allocation2 + $0x6c] sm:$0xf] %v2276
    %2278 = vst.msk [vmem:[#allocation2 + $0x70] sm:$0xf] %vm586, %v2060
    %v2279 = vld [vmem:[#allocation2 + $0x74] sm:$0x1]
    %v2280 = vsel %vm32, %v2061, %v2279
    %2281 = vst [vmem:[#allocation2 + $0x74] sm:$0x1] %v2280
    %v2282 = vld [vmem:[#allocation2 + $0x78] sm:$0xf]
    %v2283 = vsel %vm582, %v2068, %v2282
    %2284 = vst [vmem:[#allocation2 + $0x78] sm:$0xf] %v2283
    %2285 = vst.msk [vmem:[#allocation2 + $0x7c] sm:$0xf] %vm586, %v2077
    %v2286 = vld [vmem:[#allocation2 + $0x80] sm:$0x1]
    %v2287 = vsel %vm32, %v2078, %v2286
    %2288 = vst [vmem:[#allocation2 + $0x80] sm:$0x1] %v2287
    %v2289 = vld [vmem:[#allocation2 + $0x84] sm:$0xf]
    %v2290 = vsel %vm582, %v2085, %v2289
    %2291 = vst [vmem:[#allocation2 + $0x84] sm:$0xf] %v2290
    %2292 = vst.msk [vmem:[#allocation2 + $0x88] sm:$0xf] %vm586, %v2094
    %v2293 = vld [vmem:[#allocation2 + $0x8c] sm:$0x1]
    %v2294 = vsel %vm32, %v2095, %v2293
    %2295 = vst [vmem:[#allocation2 + $0x8c] sm:$0x1] %v2294
    %v2296 = vld [vmem:[#allocation2 + $0x90] sm:$0xf]
    %v2297 = vsel %vm582, %v2102, %v2296
    %2298 = vst [vmem:[#allocation2 + $0x90] sm:$0xf] %v2297
    %2299 = vst.msk [vmem:[#allocation2 + $0x94] sm:$0xf] %vm586, %v2111
    %v2300 = vld [vmem:[#allocation2 + $0x98] sm:$0x1]
    %v2301 = vsel %vm32, %v2112, %v2300
    %2302 = vst [vmem:[#allocation2 + $0x98] sm:$0x1] %v2301
    %v2303 = vld [vmem:[#allocation2 + $0x9c] sm:$0xf]
    %v2304 = vsel %vm582, %v2119, %v2303
    %2305 = vst [vmem:[#allocation2 + $0x9c] sm:$0xf] %v2304
    %2306 = vst.msk [vmem:[#allocation2 + $0xa0] sm:$0xf] %vm586, %v2128
    %v2307 = vld [vmem:[#allocation2 + $0xa4] sm:$0x1]
    %v2308 = vsel %vm32, %v2129, %v2307
    %2309 = vst [vmem:[#allocation2 + $0xa4] sm:$0x1] %v2308
    %v2310 = vld [vmem:[#allocation2 + $0xa8] sm:$0xf]
    %v2311 = vsel %vm582, %v2136, %v2310
    %2312 = vst [vmem:[#allocation2 + $0xa8] sm:$0xf] %v2311
    %2313 = vst.msk [vmem:[#allocation2 + $0xac] sm:$0xf] %vm586, %v2145
    %v2314 = vld [vmem:[#allocation2 + $0xb0] sm:$0x1]
    %v2315 = vsel %vm32, %v2146, %v2314
    %2316 = vst [vmem:[#allocation2 + $0xb0] sm:$0x1] %v2315
    %v2317 = vld [vmem:[#allocation2 + $0xb4] sm:$0xf]
    %v2318 = vsel %vm582, %v2153, %v2317
    %2319 = vst [vmem:[#allocation2 + $0xb4] sm:$0xf] %v2318
    %2320 = vst.msk [vmem:[#allocation2 + $0xb8] sm:$0xf] %vm586, %v2162
    %v2321 = vld [vmem:[#allocation2 + $0xbc] sm:$0x1]
    %v2322 = vsel %vm32, %v2163, %v2321
    %2323 = vst [vmem:[#allocation2 + $0xbc] sm:$0x1] %v2322
    %v2324 = vld [vmem:[#allocation2] sm:$0xf]
    %v2325 = vld [vmem:[#allocation2 + $0x4] sm:$0xf]
    %v2326 = vld [vmem:[#allocation2 + $0xc] sm:$0xf]
    %v2327 = vld [vmem:[#allocation2 + $0x10] sm:$0xf]
    %v2328 = vld [vmem:[#allocation2 + $0x18] sm:$0xf]
    %v2329 = vld [vmem:[#allocation2 + $0x1c] sm:$0xf]
    %v2330 = vld [vmem:[#allocation2 + $0x24] sm:$0xf]
    %v2331 = vld [vmem:[#allocation2 + $0x28] sm:$0xf]
    %v2332 = vld [vmem:[#allocation2 + $0x30] sm:$0xf]
    %v2333 = vld [vmem:[#allocation2 + $0x34] sm:$0xf]
    %v2334 = vld [vmem:[#allocation2 + $0x3c] sm:$0xf]
    %v2335 = vld [vmem:[#allocation2 + $0x40] sm:$0xf]
    %v2336 = vld [vmem:[#allocation2 + $0x48] sm:$0xf]
    %v2337 = vld [vmem:[#allocation2 + $0x4c] sm:$0xf]
    %v2338 = vld [vmem:[#allocation2 + $0x54] sm:$0xf]
    %v2339 = vld [vmem:[#allocation2 + $0x58] sm:$0xf]
    %v2340 = vld [vmem:[#allocation2 + $0x60] sm:$0xf]
    %v2341 = vld [vmem:[#allocation2 + $0x64] sm:$0xf]
    %v2342 = vld [vmem:[#allocation2 + $0x6c] sm:$0xf]
    %v2343 = vld [vmem:[#allocation2 + $0x70] sm:$0xf]
    %v2344 = vld [vmem:[#allocation2 + $0x78] sm:$0xf]
    %v2345 = vld [vmem:[#allocation2 + $0x7c] sm:$0xf]
    %v2346 = vld [vmem:[#allocation2 + $0x84] sm:$0xf]
    %v2347 = vld [vmem:[#allocation2 + $0x88] sm:$0xf]
    %v2348 = vld [vmem:[#allocation2 + $0x90] sm:$0xf]
    %v2349 = vld [vmem:[#allocation2 + $0x94] sm:$0xf]
    %v2350 = vld [vmem:[#allocation2 + $0x9c] sm:$0xf]
    %v2351 = vld [vmem:[#allocation2 + $0xa0] sm:$0xf]
    %v2352 = vld [vmem:[#allocation2 + $0xa8] sm:$0xf]
    %v2353 = vld [vmem:[#allocation2 + $0xac] sm:$0xf]
    %v2354 = vld [vmem:[#allocation2 + $0xb4] sm:$0xf]
    %v2355 = vld [vmem:[#allocation2 + $0xb8] sm:$0xf]
    %v2356 = vld [vmem:[#allocation2] sm:$0xe]
    %v2357 = vld [vmem:[#allocation2 + $0x8] sm:$0x1]
    %v2358 = vld [vmem:[#allocation2 + $0xc] sm:$0xe]
    %v2359 = vld [vmem:[#allocation2 + $0x14] sm:$0x1]
    %v2360 = vld [vmem:[#allocation2 + $0x18] sm:$0xe]
    %v2361 = vld [vmem:[#allocation2 + $0x20] sm:$0x1]
    %v2362 = vld [vmem:[#allocation2 + $0x24] sm:$0xe]
    %v2363 = vld [vmem:[#allocation2 + $0x2c] sm:$0x1]
    %v2364 = vld [vmem:[#allocation2 + $0x30] sm:$0xe]
    %v2365 = vld [vmem:[#allocation2 + $0x38] sm:$0x1]
    %v2366 = vld [vmem:[#allocation2 + $0x3c] sm:$0xe]
    %v2367 = vld [vmem:[#allocation2 + $0x44] sm:$0x1]
    %v2368 = vld [vmem:[#allocation2 + $0x48] sm:$0xe]
    %v2369 = vld [vmem:[#allocation2 + $0x50] sm:$0x1]
    %v2370 = vld [vmem:[#allocation2 + $0x54] sm:$0xe]
    %v2371 = vld [vmem:[#allocation2 + $0x5c] sm:$0x1]
    %v2372 = vld [vmem:[#allocation2 + $0x60] sm:$0xe]
    %v2373 = vld [vmem:[#allocation2 + $0x68] sm:$0x1]
    %v2374 = vld [vmem:[#allocation2 + $0x6c] sm:$0xe]
    %v2375 = vld [vmem:[#allocation2 + $0x74] sm:$0x1]
    %v2376 = vld [vmem:[#allocation2 + $0x78] sm:$0xe]
    %v2377 = vld [vmem:[#allocation2 + $0x80] sm:$0x1]
    %v2378 = vld [vmem:[#allocation2 + $0x84] sm:$0xe]
    %v2379 = vld [vmem:[#allocation2 + $0x8c] sm:$0x1]
    %v2380 = vld [vmem:[#allocation2 + $0x90] sm:$0xe]
    %v2381 = vld [vmem:[#allocation2 + $0x98] sm:$0x1]
    %v2382 = vld [vmem:[#allocation2 + $0x9c] sm:$0xe]
    %v2383 = vld [vmem:[#allocation2 + $0xa4] sm:$0x1]
    %v2384 = vld [vmem:[#allocation2 + $0xa8] sm:$0xe]
    %v2385 = vld [vmem:[#allocation2 + $0xb0] sm:$0x1]
    %v2386 = vld [vmem:[#allocation2 + $0xb4] sm:$0xe]
    %v2387 = vld [vmem:[#allocation2 + $0xbc] sm:$0x1]
    %v2420 = vunpack.c.l.b16 %v2324
    %v2421 = vunpack.c.l.b16 %v2325
    %v2422 = vunpack.c.l.b16 %v2326
    %v2423 = vunpack.c.l.b16 %v2327
    %v2424 = vunpack.c.l.b16 %v2328
    %v2425 = vunpack.c.l.b16 %v2329
    %v2426 = vunpack.c.l.b16 %v2330
    %v2427 = vunpack.c.l.b16 %v2331
    %v2428 = vunpack.c.l.b16 %v2332
    %v2429 = vunpack.c.l.b16 %v2333
    %v2430 = vunpack.c.l.b16 %v2334
    %v2431 = vunpack.c.l.b16 %v2335
    %v2432 = vunpack.c.l.b16 %v2336
    %v2433 = vunpack.c.l.b16 %v2337
    %v2434 = vunpack.c.l.b16 %v2338
    %v2435 = vunpack.c.l.b16 %v2339
    %v2436 = vunpack.c.l.b16 %v2340
    %v2437 = vunpack.c.l.b16 %v2341
    %v2438 = vunpack.c.l.b16 %v2342
    %v2439 = vunpack.c.l.b16 %v2343
    %v2440 = vunpack.c.l.b16 %v2344
    %v2441 = vunpack.c.l.b16 %v2345
    %v2442 = vunpack.c.l.b16 %v2346
    %v2443 = vunpack.c.l.b16 %v2347
    %v2444 = vunpack.c.l.b16 %v2348
    %v2445 = vunpack.c.l.b16 %v2349
    %v2446 = vunpack.c.l.b16 %v2350
    %v2447 = vunpack.c.l.b16 %v2351
    %v2448 = vunpack.c.l.b16 %v2352
    %v2449 = vunpack.c.l.b16 %v2353
    %v2450 = vunpack.c.l.b16 %v2354
    %v2451 = vunpack.c.l.b16 %v2355
    %v2452 = vpack.c.b16 %v2421, %v2420
    %v2453 = vpack.c.b16 %v2423, %v2422
    %v2454 = vpack.c.b16 %v2425, %v2424
    %v2455 = vpack.c.b16 %v2427, %v2426
    %v2456 = vpack.c.b16 %v2429, %v2428
    %v2457 = vpack.c.b16 %v2431, %v2430
    %v2458 = vpack.c.b16 %v2433, %v2432
    %v2459 = vpack.c.b16 %v2435, %v2434
    %v2460 = vpack.c.b16 %v2437, %v2436
    %v2461 = vpack.c.b16 %v2439, %v2438
    %v2462 = vpack.c.b16 %v2441, %v2440
    %v2463 = vpack.c.b16 %v2443, %v2442
    %v2464 = vpack.c.b16 %v2445, %v2444
    %v2465 = vpack.c.b16 %v2447, %v2446
    %v2466 = vpack.c.b16 %v2449, %v2448
    %v2467 = vpack.c.b16 %v2451, %v2450
    %2468 = vrot.lane.b32.xlu0 %v1796, 32
    %v2469 = vpop.permute.xlu0 %2468
    %2470 = vrot.lane.b32.xlu0 %v1797, 32
    %v2471 = vpop.permute.xlu0 %2470
    %2472 = vrot.lane.b32.xlu0 %v1798, 32
    %v2473 = vpop.permute.xlu0 %2472
    %2474 = vrot.lane.b32.xlu0 %v1799, 32
    %v2475 = vpop.permute.xlu0 %2474
    %2476 = vrot.lane.b32.xlu0 %v1800, 32
    %v2477 = vpop.permute.xlu0 %2476
    %2478 = vrot.lane.b32.xlu0 %v1801, 32
    %v2479 = vpop.permute.xlu0 %2478
    %2480 = vrot.lane.b32.xlu0 %v1802, 32
    %v2481 = vpop.permute.xlu0 %2480
    %2482 = vrot.lane.b32.xlu0 %v1803, 32
    %v2483 = vpop.permute.xlu0 %2482
    %2484 = vrot.lane.b32.xlu0 %v1804, 32
    %v2485 = vpop.permute.xlu0 %2484
    %2486 = vrot.lane.b32.xlu0 %v1805, 32
    %v2487 = vpop.permute.xlu0 %2486
    %2488 = vrot.lane.b32.xlu0 %v1806, 32
    %v2489 = vpop.permute.xlu0 %2488
    %2490 = vrot.lane.b32.xlu0 %v1807, 32
    %v2491 = vpop.permute.xlu0 %2490
    %2492 = vrot.lane.b32.xlu0 %v1808, 32
    %v2493 = vpop.permute.xlu0 %2492
    %2494 = vrot.lane.b32.xlu0 %v1809, 32
    %v2495 = vpop.permute.xlu0 %2494
    %2496 = vrot.lane.b32.xlu0 %v1810, 32
    %v2497 = vpop.permute.xlu0 %2496
    %2498 = vrot.lane.b32.xlu0 %v1811, 32
    %v2499 = vpop.permute.xlu0 %2498
    %v2532 = vunpack.c.l.b16 %v2356
    %v2533 = vunpack.c.l.b16 %v2357
    %v2534 = vunpack.c.l.b16 %v2358
    %v2535 = vunpack.c.l.b16 %v2359
    %v2536 = vunpack.c.l.b16 %v2360
    %v2537 = vunpack.c.l.b16 %v2361
    %v2538 = vunpack.c.l.b16 %v2362
    %v2539 = vunpack.c.l.b16 %v2363
    %v2540 = vunpack.c.l.b16 %v2364
    %v2541 = vunpack.c.l.b16 %v2365
    %v2542 = vunpack.c.l.b16 %v2366
    %v2543 = vunpack.c.l.b16 %v2367
    %v2544 = vunpack.c.l.b16 %v2368
    %v2545 = vunpack.c.l.b16 %v2369
    %v2546 = vunpack.c.l.b16 %v2370
    %v2547 = vunpack.c.l.b16 %v2371
    %v2548 = vunpack.c.l.b16 %v2372
    %v2549 = vunpack.c.l.b16 %v2373
    %v2550 = vunpack.c.l.b16 %v2374
    %v2551 = vunpack.c.l.b16 %v2375
    %v2552 = vunpack.c.l.b16 %v2376
    %v2553 = vunpack.c.l.b16 %v2377
    %v2554 = vunpack.c.l.b16 %v2378
    %v2555 = vunpack.c.l.b16 %v2379
    %v2556 = vunpack.c.l.b16 %v2380
    %v2557 = vunpack.c.l.b16 %v2381
    %v2558 = vunpack.c.l.b16 %v2382
    %v2559 = vunpack.c.l.b16 %v2383
    %v2560 = vunpack.c.l.b16 %v2384
    %v2561 = vunpack.c.l.b16 %v2385
    %v2562 = vunpack.c.l.b16 %v2386
    %v2563 = vunpack.c.l.b16 %v2387
    %v2564 = vpack.c.b16 %v2421, %v2532
    %v2565 = vpack.c.b16 %v2533, %v2533
    %v2566 = vpack.c.b16 %v2423, %v2534
    %v2567 = vpack.c.b16 %v2535, %v2535
    %v2568 = vpack.c.b16 %v2425, %v2536
    %v2569 = vpack.c.b16 %v2537, %v2537
    %v2570 = vpack.c.b16 %v2427, %v2538
    %v2571 = vpack.c.b16 %v2539, %v2539
    %v2572 = vpack.c.b16 %v2429, %v2540
    %v2573 = vpack.c.b16 %v2541, %v2541
    %v2574 = vpack.c.b16 %v2431, %v2542
    %v2575 = vpack.c.b16 %v2543, %v2543
    %v2576 = vpack.c.b16 %v2433, %v2544
    %v2577 = vpack.c.b16 %v2545, %v2545
    %v2578 = vpack.c.b16 %v2435, %v2546
    %v2579 = vpack.c.b16 %v2547, %v2547
    %v2580 = vpack.c.b16 %v2437, %v2548
    %v2581 = vpack.c.b16 %v2549, %v2549
    %v2582 = vpack.c.b16 %v2439, %v2550
    %v2583 = vpack.c.b16 %v2551, %v2551
    %v2584 = vpack.c.b16 %v2441, %v2552
    %v2585 = vpack.c.b16 %v2553, %v2553
    %v2586 = vpack.c.b16 %v2443, %v2554
    %v2587 = vpack.c.b16 %v2555, %v2555
    %v2588 = vpack.c.b16 %v2445, %v2556
    %v2589 = vpack.c.b16 %v2557, %v2557
    %v2590 = vpack.c.b16 %v2447, %v2558
    %v2591 = vpack.c.b16 %v2559, %v2559
    %v2592 = vpack.c.b16 %v2449, %v2560
    %v2593 = vpack.c.b16 %v2561, %v2561
    %v2594 = vpack.c.b16 %v2451, %v2562
    %v2595 = vpack.c.b16 %v2563, %v2563
    %v2596 = vrot.slane %v2564, 1
    %v2597 = vrot.slane %v2565, 1
    %v2598 = vsel %vm968, %v2596, %v2597
    %v2599 = vrot.slane %v2566, 1
    %v2600 = vrot.slane %v2567, 1
    %v2601 = vsel %vm968, %v2599, %v2600
    %v2602 = vrot.slane %v2568, 1
    %v2603 = vrot.slane %v2569, 1
    %v2604 = vsel %vm968, %v2602, %v2603
    %v2605 = vrot.slane %v2570, 1
    %v2606 = vrot.slane %v2571, 1
    %v2607 = vsel %vm968, %v2605, %v2606
    %v2608 = vrot.slane %v2572, 1
    %v2609 = vrot.slane %v2573, 1
    %v2610 = vsel %vm968, %v2608, %v2609
    %v2611 = vrot.slane %v2574, 1
    %v2612 = vrot.slane %v2575, 1
    %v2613 = vsel %vm968, %v2611, %v2612
    %v2614 = vrot.slane %v2576, 1
    %v2615 = vrot.slane %v2577, 1
    %v2616 = vsel %vm968, %v2614, %v2615
    %v2617 = vrot.slane %v2578, 1
    %v2618 = vrot.slane %v2579, 1
    %v2619 = vsel %vm968, %v2617, %v2618
    %v2620 = vrot.slane %v2580, 1
    %v2621 = vrot.slane %v2581, 1
    %v2622 = vsel %vm968, %v2620, %v2621
    %v2623 = vrot.slane %v2582, 1
    %v2624 = vrot.slane %v2583, 1
    %v2625 = vsel %vm968, %v2623, %v2624
    %v2626 = vrot.slane %v2584, 1
    %v2627 = vrot.slane %v2585, 1
    %v2628 = vsel %vm968, %v2626, %v2627
    %v2629 = vrot.slane %v2586, 1
    %v2630 = vrot.slane %v2587, 1
    %v2631 = vsel %vm968, %v2629, %v2630
    %v2632 = vrot.slane %v2588, 1
    %v2633 = vrot.slane %v2589, 1
    %v2634 = vsel %vm968, %v2632, %v2633
    %v2635 = vrot.slane %v2590, 1
    %v2636 = vrot.slane %v2591, 1
    %v2637 = vsel %vm968, %v2635, %v2636
    %v2638 = vrot.slane %v2592, 1
    %v2639 = vrot.slane %v2593, 1
    %v2640 = vsel %vm968, %v2638, %v2639
    %v2641 = vrot.slane %v2594, 1
    %v2642 = vrot.slane %v2595, 1
    %v2643 = vsel %vm968, %v2641, %v2642
    %2644 = vrot.lane.b32.xlu0 %v2598, 64
    %v2645 = vpop.permute.xlu0 %2644
    %2646 = vrot.lane.b32.xlu0 %v2601, 64
    %v2647 = vpop.permute.xlu0 %2646
    %2648 = vrot.lane.b32.xlu0 %v2604, 64
    %v2649 = vpop.permute.xlu0 %2648
    %2650 = vrot.lane.b32.xlu0 %v2607, 64
    %v2651 = vpop.permute.xlu0 %2650
    %2652 = vrot.lane.b32.xlu0 %v2610, 64
    %v2653 = vpop.permute.xlu0 %2652
    %2654 = vrot.lane.b32.xlu0 %v2613, 64
    %v2655 = vpop.permute.xlu0 %2654
    %2656 = vrot.lane.b32.xlu0 %v2616, 64
    %v2657 = vpop.permute.xlu0 %2656
    %2658 = vrot.lane.b32.xlu0 %v2619, 64
    %v2659 = vpop.permute.xlu0 %2658
    %2660 = vrot.lane.b32.xlu0 %v2622, 64
    %v2661 = vpop.permute.xlu0 %2660
    %2662 = vrot.lane.b32.xlu0 %v2625, 64
    %v2663 = vpop.permute.xlu0 %2662
    %2664 = vrot.lane.b32.xlu0 %v2628, 64
    %v2665 = vpop.permute.xlu0 %2664
    %2666 = vrot.lane.b32.xlu0 %v2631, 64
    %v2667 = vpop.permute.xlu0 %2666
    %2668 = vrot.lane.b32.xlu0 %v2634, 64
    %v2669 = vpop.permute.xlu0 %2668
    %2670 = vrot.lane.b32.xlu0 %v2637, 64
    %v2671 = vpop.permute.xlu0 %2670
    %2672 = vrot.lane.b32.xlu0 %v2640, 64
    %v2673 = vpop.permute.xlu0 %2672
    %2674 = vrot.lane.b32.xlu0 %v2643, 64
    %v2675 = vpop.permute.xlu0 %2674
    %v2678 = vsel %vm1049, %v2452, %v2469
    %v2681 = vsel %vm1049, %v2453, %v2471
    %v2684 = vsel %vm1049, %v2454, %v2473
    %v2687 = vsel %vm1049, %v2455, %v2475
    %v2690 = vsel %vm1049, %v2456, %v2477
    %v2693 = vsel %vm1049, %v2457, %v2479
    %v2696 = vsel %vm1049, %v2458, %v2481
    %v2699 = vsel %vm1049, %v2459, %v2483
    %v2702 = vsel %vm1049, %v2460, %v2485
    %v2705 = vsel %vm1049, %v2461, %v2487
    %v2708 = vsel %vm1049, %v2462, %v2489
    %v2711 = vsel %vm1049, %v2463, %v2491
    %v2714 = vsel %vm1049, %v2464, %v2493
    %v2717 = vsel %vm1049, %v2465, %v2495
    %v2720 = vsel %vm1049, %v2466, %v2497
    %v2723 = vsel %vm1049, %v2467, %v2499
    %v2725 = vsel %vm1098, %v2678, %v2645
    %v2727 = vsel %vm1098, %v2681, %v2647
    %v2729 = vsel %vm1098, %v2684, %v2649
    %v2731 = vsel %vm1098, %v2687, %v2651
    %v2733 = vsel %vm1098, %v2690, %v2653
    %v2735 = vsel %vm1098, %v2693, %v2655
    %v2737 = vsel %vm1098, %v2696, %v2657
    %v2739 = vsel %vm1098, %v2699, %v2659
    %v2741 = vsel %vm1098, %v2702, %v2661
    %v2743 = vsel %vm1098, %v2705, %v2663
    %v2745 = vsel %vm1098, %v2708, %v2665
    %v2747 = vsel %vm1098, %v2711, %v2667
    %v2749 = vsel %vm1098, %v2714, %v2669
    %v2751 = vsel %vm1098, %v2717, %v2671
    %v2753 = vsel %vm1098, %v2720, %v2673
    %v2755 = vsel %vm1098, %v2723, %v2675
    %s2756 = scalar_lea.vmem %s1, 48
    %v2757 = vld [vmem:[%s2756] sm:$0xf]
    %v2758 = vld [vmem:[%s2756 + $0x4] sm:$0xf]
    %v2759 = vld [vmem:[%s2756 + $0x8] sm:$0xf]
    %v2760 = vld [vmem:[%s2756 + $0xc] sm:$0xf]
    %v2761 = vld [vmem:[%s2756 + $0x10] sm:$0xf]
    %v2762 = vld [vmem:[%s2756 + $0x14] sm:$0xf]
    %v2763 = vld [vmem:[%s2756 + $0x18] sm:$0xf]
    %v2764 = vld [vmem:[%s2756 + $0x1c] sm:$0xf]
    %v2765 = vld [vmem:[%s2756 + $0x20] sm:$0xf]
    %v2766 = vld [vmem:[%s2756 + $0x24] sm:$0xf]
    %v2767 = vld [vmem:[%s2756 + $0x28] sm:$0xf]
    %v2768 = vld [vmem:[%s2756 + $0x2c] sm:$0xf]
    %s2769 = scalar_lea.vmem %s2, 1
    %v2770 = vld [vmem:[%s2769] sm:$0x1]
    %v2772 = vlaneseq
    %v2773 = vshrl.u32 %v2772, 7
    %v2774 = vsub.s32 0, %v2773
    %v2775 = vrot.slane %v2770, %v2774
    %v2789 = vunpack.c.l.b16 %v2757
    %v2790 = vunpack.c.l.b16 %v2758
    %v2791 = vunpack.c.l.b16 %v2759
    %v2792 = vunpack.c.l.b16 %v2760
    %v2793 = vunpack.c.l.b16 %v2761
    %v2794 = vunpack.c.l.b16 %v2762
    %v2795 = vunpack.c.l.b16 %v2763
    %v2796 = vunpack.c.l.b16 %v2764
    %v2797 = vunpack.c.l.b16 %v2765
    %v2798 = vunpack.c.l.b16 %v2766
    %v2799 = vunpack.c.l.b16 %v2767
    %v2800 = vunpack.c.l.b16 %v2768
    %v2801 = vpack.c.b16 %v2790, %v2789
    %v2802 = vpack.c.b16 %v2792, %v2791
    %v2803 = vpack.c.b16 %v2794, %v2793
    %v2804 = vpack.c.b16 %v2796, %v2795
    %v2805 = vpack.c.b16 %v2798, %v2797
    %v2806 = vpack.c.b16 %v2800, %v2799
    %v2813 = vsel %vm1186, %v2725, 0
    %v2815 = vsel %vm1186, %v2727, 0
    %v2817 = vsel %vm1186, %v2729, 0
    %v2819 = vsel %vm1186, %v2731, 0
    %v2821 = vsel %vm1186, %v2733, 0
    %v2823 = vsel %vm1186, %v2735, 0
    %v2825 = vsel %vm1186, %v2737, 0
    %v2827 = vsel %vm1186, %v2739, 0
    %v2829 = vsel %vm1186, %v2741, 0
    %v2831 = vsel %vm1186, %v2743, 0
    %v2833 = vsel %vm1186, %v2745, 0
    %v2835 = vsel %vm1186, %v2747, 0
    %v2837 = vsel %vm1186, %v2749, 0
    %v2839 = vsel %vm1186, %v2751, 0
    %v2841 = vsel %vm1186, %v2753, 0
    %v2843 = vsel %vm1186, %v2755, 0
    %2845 = vmatprep.subr.bf16.mxu0 0
    %2846 = vmatpush1.bf16.msra.mxu0 %v2801
    %2847 = vmatprep.subr.bf16.mxu0 0
    %2848 = vmatpush1.bf16.msra.mxu0 %v2802
    %2849 = vmatprep.subr.bf16.mxu0 0
    %2850 = vmatpush1.bf16.msra.mxu0 %v2803
    %2851 = vmatprep.subr.bf16.mxu0 0
    %2852 = vmatpush1.bf16.msra.mxu0 %v2804
    %2853 = vmatprep.subr.bf16.mxu0 0
    %2854 = vmatpush1.bf16.msra.mxu0 %v2805
    %2855 = vmatprep.subr.bf16.mxu0 0
    %2856 = vmatpush1.bf16.msra.mxu0 %v2806
    %2857 = vmatprep.subr.bf16.mxu0 0
    %2858 = vmatpush1.bf16.msra.mxu0 0
    %2859 = vmatprep.subr.bf16.mxu0 0
    %2860 = vmatpush1.bf16.msra.mxu0 0
    %2861 = vmatprep.subr.bf16.mxu0 0
    %2862 = vmatpush1.bf16.msra.mxu0 0
    %2863 = vmatprep.subr.bf16.mxu0 0
    %2864 = vmatpush1.bf16.msra.mxu0 0
    %2865 = vmatprep.subr.bf16.mxu0 0
    %2866 = vmatpush1.bf16.msra.mxu0 0
    %2867 = vmatprep.subr.bf16.mxu0 0
    %2868 = vmatpush1.bf16.msra.mxu0 0
    %2869 = vmatprep.subr.bf16.mxu0 0
    %2870 = vmatpush1.bf16.msra.mxu0 0
    %2871 = vmatprep.subr.bf16.mxu0 0
    %2872 = vmatpush1.bf16.msra.mxu0 0
    %2873 = vmatprep.subr.bf16.mxu0 0
    %2874 = vmatpush1.bf16.msra.mxu0 0
    %2875 = vmatprep.subr.bf16.mxu0 0
    %2876 = vmatpush1.bf16.msra.mxu0 0
    %2877 = vmatprep.mubr.bf16.mxu0 0
    %2878 = vmatmul.mubr.bf16.gmra.mrb[0].mxu0 %v2813
    %v2879 = vpop.f32.mrb[0].mxu0
    %v2880 = vadd.f32 %v2775, %v2879
    %v2881 = vpop.f32.mrb[0].mxu0
    %v2882 = vpop.f32.mrb[0].mxu0
    %v2883 = vadd.f32 %v2775, %v2882
    %v2884 = vpop.f32.mrb[0].mxu0
    %2885 = vmatprep.mubr.bf16.mxu0 0
    %2886 = vmatmul.mubr.bf16.gmra.mrb[0].mxu0 %v2815
    %v2887 = vpop.f32.mrb[0].mxu0
    %v2888 = vadd.f32 %v2775, %v2887
    %v2889 = vpop.f32.mrb[0].mxu0
    %v2890 = vpop.f32.mrb[0].mxu0
    %v2891 = vadd.f32 %v2775, %v2890
    %v2892 = vpop.f32.mrb[0].mxu0
    %2893 = vmatprep.mubr.bf16.mxu0 0
    %2894 = vmatmul.mubr.bf16.gmra.mrb[0].mxu0 %v2817
    %v2895 = vpop.f32.mrb[0].mxu0
    %v2896 = vadd.f32 %v2775, %v2895
    %v2897 = vpop.f32.mrb[0].mxu0
    %v2898 = vpop.f32.mrb[0].mxu0
    %v2899 = vadd.f32 %v2775, %v2898
    %v2900 = vpop.f32.mrb[0].mxu0
    %2901 = vmatprep.mubr.bf16.mxu0 0
    %2902 = vmatmul.mubr.bf16.gmra.mrb[0].mxu0 %v2819
    %v2903 = vpop.f32.mrb[0].mxu0
    %v2904 = vadd.f32 %v2775, %v2903
    %v2905 = vpop.f32.mrb[0].mxu0
    %v2906 = vpop.f32.mrb[0].mxu0
    %v2907 = vadd.f32 %v2775, %v2906
    %v2908 = vpop.f32.mrb[0].mxu0
    %2909 = vmatprep.mubr.bf16.mxu0 0
    %2910 = vmatmul.mubr.bf16.gmra.mrb[0].mxu0 %v2821
    %v2911 = vpop.f32.mrb[0].mxu0
    %v2912 = vadd.f32 %v2775, %v2911
    %v2913 = vpop.f32.mrb[0].mxu0
    %v2914 = vpop.f32.mrb[0].mxu0
    %v2915 = vadd.f32 %v2775, %v2914
    %v2916 = vpop.f32.mrb[0].mxu0
    %2917 = vmatprep.mubr.bf16.mxu0 0
    %2918 = vmatmul.mubr.bf16.gmra.mrb[0].mxu0 %v2823
    %v2919 = vpop.f32.mrb[0].mxu0
    %v2920 = vadd.f32 %v2775, %v2919
    %v2921 = vpop.f32.mrb[0].mxu0
    %v2922 = vpop.f32.mrb[0].mxu0
    %v2923 = vadd.f32 %v2775, %v2922
    %v2924 = vpop.f32.mrb[0].mxu0
    %2925 = vmatprep.mubr.bf16.mxu0 0
    %2926 = vmatmul.mubr.bf16.gmra.mrb[0].mxu0 %v2825
    %v2927 = vpop.f32.mrb[0].mxu0
    %v2928 = vadd.f32 %v2775, %v2927
    %v2929 = vpop.f32.mrb[0].mxu0
    %v2930 = vpop.f32.mrb[0].mxu0
    %v2931 = vadd.f32 %v2775, %v2930
    %v2932 = vpop.f32.mrb[0].mxu0
    %2933 = vmatprep.mubr.bf16.mxu0 0
    %2934 = vmatmul.mubr.bf16.gmra.mrb[0].mxu0 %v2827
    %v2935 = vpop.f32.mrb[0].mxu0
    %v2936 = vadd.f32 %v2775, %v2935
    %v2937 = vpop.f32.mrb[0].mxu0
    %v2938 = vpop.f32.mrb[0].mxu0
    %v2939 = vadd.f32 %v2775, %v2938
    %v2940 = vpop.f32.mrb[0].mxu0
    %2941 = vmatprep.mubr.bf16.mxu0 0
    %2942 = vmatmul.mubr.bf16.gmra.mrb[0].mxu0 %v2829
    %v2943 = vpop.f32.mrb[0].mxu0
    %v2944 = vadd.f32 %v2775, %v2943
    %v2945 = vpop.f32.mrb[0].mxu0
    %v2946 = vpop.f32.mrb[0].mxu0
    %v2947 = vadd.f32 %v2775, %v2946
    %v2948 = vpop.f32.mrb[0].mxu0
    %2949 = vmatprep.mubr.bf16.mxu0 0
    %2950 = vmatmul.mubr.bf16.gmra.mrb[0].mxu0 %v2831
    %v2951 = vpop.f32.mrb[0].mxu0
    %v2952 = vadd.f32 %v2775, %v2951
    %v2953 = vpop.f32.mrb[0].mxu0
    %v2954 = vpop.f32.mrb[0].mxu0
    %v2955 = vadd.f32 %v2775, %v2954
    %v2956 = vpop.f32.mrb[0].mxu0
    %2957 = vmatprep.mubr.bf16.mxu0 0
    %2958 = vmatmul.mubr.bf16.gmra.mrb[0].mxu0 %v2833
    %v2959 = vpop.f32.mrb[0].mxu0
    %v2960 = vadd.f32 %v2775, %v2959
    %v2961 = vpop.f32.mrb[0].mxu0
    %v2962 = vpop.f32.mrb[0].mxu0
    %v2963 = vadd.f32 %v2775, %v2962
    %v2964 = vpop.f32.mrb[0].mxu0
    %2965 = vmatprep.mubr.bf16.mxu0 0
    %2966 = vmatmul.mubr.bf16.gmra.mrb[0].mxu0 %v2835
    %v2967 = vpop.f32.mrb[0].mxu0
    %v2968 = vadd.f32 %v2775, %v2967
    %v2969 = vpop.f32.mrb[0].mxu0
    %v2970 = vpop.f32.mrb[0].mxu0
    %v2971 = vadd.f32 %v2775, %v2970
    %v2972 = vpop.f32.mrb[0].mxu0
    %2973 = vmatprep.mubr.bf16.mxu0 0
    %2974 = vmatmul.mubr.bf16.gmra.mrb[0].mxu0 %v2837
    %v2975 = vpop.f32.mrb[0].mxu0
    %v2976 = vadd.f32 %v2775, %v2975
    %v2977 = vpop.f32.mrb[0].mxu0
    %v2978 = vpop.f32.mrb[0].mxu0
    %v2979 = vadd.f32 %v2775, %v2978
    %v2980 = vpop.f32.mrb[0].mxu0
    %2981 = vmatprep.mubr.bf16.mxu0 0
    %2982 = vmatmul.mubr.bf16.gmra.mrb[0].mxu0 %v2839
    %v2983 = vpop.f32.mrb[0].mxu0
    %v2984 = vadd.f32 %v2775, %v2983
    %v2985 = vpop.f32.mrb[0].mxu0
    %v2986 = vpop.f32.mrb[0].mxu0
    %v2987 = vadd.f32 %v2775, %v2986
    %v2988 = vpop.f32.mrb[0].mxu0
    %2989 = vmatprep.mubr.bf16.mxu0 0
    %2990 = vmatmul.mubr.bf16.gmra.mrb[0].mxu0 %v2841
    %v2991 = vpop.f32.mrb[0].mxu0
    %v2992 = vadd.f32 %v2775, %v2991
    %v2993 = vpop.f32.mrb[0].mxu0
    %v2994 = vpop.f32.mrb[0].mxu0
    %v2995 = vadd.f32 %v2775, %v2994
    %v2996 = vpop.f32.mrb[0].mxu0
    %2997 = vmatprep.mubr.bf16.mxu0 0
    %2998 = vmatmul.mubr.bf16.gmra.mrb[0].mxu0 %v2843
    %v2999 = vpop.f32.mrb[0].mxu0
    %v3000 = vadd.f32 %v2775, %v2999
    %v3001 = vpop.f32.mrb[0].mxu0
    %v3002 = vpop.f32.mrb[0].mxu0
    %v3003 = vadd.f32 %v2775, %v3002
    %v3004 = vpop.f32.mrb[0].mxu0
    %3005 = vdwg.mxu0
    %v3006 = vxor.u32 %v2880, 2147483648
    %v3007 = vxor.u32 %v2883, 2147483648
    %v3008 = vxor.u32 %v2888, 2147483648
    %v3009 = vxor.u32 %v2891, 2147483648
    %v3010 = vxor.u32 %v2896, 2147483648
    %v3011 = vxor.u32 %v2899, 2147483648
    %v3012 = vxor.u32 %v2904, 2147483648
    %v3013 = vxor.u32 %v2907, 2147483648
    %v3014 = vxor.u32 %v2912, 2147483648
    %v3015 = vxor.u32 %v2915, 2147483648
    %v3016 = vxor.u32 %v2920, 2147483648
    %v3017 = vxor.u32 %v2923, 2147483648
    %v3018 = vxor.u32 %v2928, 2147483648
    %v3019 = vxor.u32 %v2931, 2147483648
    %v3020 = vxor.u32 %v2936, 2147483648
    %v3021 = vxor.u32 %v2939, 2147483648
    %v3022 = vxor.u32 %v2944, 2147483648
    %v3023 = vxor.u32 %v2947, 2147483648
    %v3024 = vxor.u32 %v2952, 2147483648
    %v3025 = vxor.u32 %v2955, 2147483648
    %v3026 = vxor.u32 %v2960, 2147483648
    %v3027 = vxor.u32 %v2963, 2147483648
    %v3028 = vxor.u32 %v2968, 2147483648
    %v3029 = vxor.u32 %v2971, 2147483648
    %v3030 = vxor.u32 %v2976, 2147483648
    %v3031 = vxor.u32 %v2979, 2147483648
    %v3032 = vxor.u32 %v2984, 2147483648
    %v3033 = vxor.u32 %v2987, 2147483648
    %v3034 = vxor.u32 %v2992, 2147483648
    %v3035 = vxor.u32 %v2995, 2147483648
    %v3036 = vxor.u32 %v3000, 2147483648
    %v3037 = vxor.u32 %v3003, 2147483648
    %v3038 = vmul.f32 %v3006, 1.442695
    %v3039 = vpow.pop %v3038
    %v3040 = vmul.f32 %v3007, 1.442695
    %v3041 = vpow.pop %v3040
    %v3042 = vmul.f32 %v3008, 1.442695
    %v3043 = vpow.pop %v3042
    %v3044 = vmul.f32 %v3009, 1.442695
    %v3045 = vpow.pop %v3044
    %v3046 = vmul.f32 %v3010, 1.442695
    %v3047 = vpow.pop %v3046
    %v3048 = vmul.f32 %v3011, 1.442695
    %v3049 = vpow.pop %v3048
    %v3050 = vmul.f32 %v3012, 1.442695
    %v3051 = vpow.pop %v3050
    %v3052 = vmul.f32 %v3013, 1.442695
    %v3053 = vpow.pop %v3052
    %v3054 = vmul.f32 %v3014, 1.442695
    %v3055 = vpow.pop %v3054
    %v3056 = vmul.f32 %v3015, 1.442695
    %v3057 = vpow.pop %v3056
    %v3058 = vmul.f32 %v3016, 1.442695
    %v3059 = vpow.pop %v3058
    %v3060 = vmul.f32 %v3017, 1.442695
    %v3061 = vpow.pop %v3060
    %v3062 = vmul.f32 %v3018, 1.442695
    %v3063 = vpow.pop %v3062
    %v3064 = vmul.f32 %v3019, 1.442695
    %v3065 = vpow.pop %v3064
    %v3066 = vmul.f32 %v3020, 1.442695
    %v3067 = vpow.pop %v3066
    %v3068 = vmul.f32 %v3021, 1.442695
    %v3069 = vpow.pop %v3068
    %v3070 = vmul.f32 %v3022, 1.442695
    %v3071 = vpow.pop %v3070
    %v3072 = vmul.f32 %v3023, 1.442695
    %v3073 = vpow.pop %v3072
    %v3074 = vmul.f32 %v3024, 1.442695
    %v3075 = vpow.pop %v3074
    %v3076 = vmul.f32 %v3025, 1.442695
    %v3077 = vpow.pop %v3076
    %v3078 = vmul.f32 %v3026, 1.442695
    %v3079 = vpow.pop %v3078
    %v3080 = vmul.f32 %v3027, 1.442695
    %v3081 = vpow.pop %v3080
    %v3082 = vmul.f32 %v3028, 1.442695
    %v3083 = vpow.pop %v3082
    %v3084 = vmul.f32 %v3029, 1.442695
    %v3085 = vpow.pop %v3084
    %v3086 = vmul.f32 %v3030, 1.442695
    %v3087 = vpow.pop %v3086
    %v3088 = vmul.f32 %v3031, 1.442695
    %v3089 = vpow.pop %v3088
    %v3090 = vmul.f32 %v3032, 1.442695
    %v3091 = vpow.pop %v3090
    %v3092 = vmul.f32 %v3033, 1.442695
    %v3093 = vpow.pop %v3092
    %v3094 = vmul.f32 %v3034, 1.442695
    %v3095 = vpow.pop %v3094
    %v3096 = vmul.f32 %v3035, 1.442695
    %v3097 = vpow.pop %v3096
    %v3098 = vmul.f32 %v3036, 1.442695
    %v3099 = vpow.pop %v3098
    %v3100 = vmul.f32 %v3037, 1.442695
    %v3101 = vpow.pop %v3100
    %v3102 = vadd.f32 %v3039, 1.0
    %v3103 = vadd.f32 %v3041, 1.0
    %v3104 = vadd.f32 %v3043, 1.0
    %v3105 = vadd.f32 %v3045, 1.0
    %v3106 = vadd.f32 %v3047, 1.0
    %v3107 = vadd.f32 %v3049, 1.0
    %v3108 = vadd.f32 %v3051, 1.0
    %v3109 = vadd.f32 %v3053, 1.0
    %v3110 = vadd.f32 %v3055, 1.0
    %v3111 = vadd.f32 %v3057, 1.0
    %v3112 = vadd.f32 %v3059, 1.0
    %v3113 = vadd.f32 %v3061, 1.0
    %v3114 = vadd.f32 %v3063, 1.0
    %v3115 = vadd.f32 %v3065, 1.0
    %v3116 = vadd.f32 %v3067, 1.0
    %v3117 = vadd.f32 %v3069, 1.0
    %v3118 = vadd.f32 %v3071, 1.0
    %v3119 = vadd.f32 %v3073, 1.0
    %v3120 = vadd.f32 %v3075, 1.0
    %v3121 = vadd.f32 %v3077, 1.0
    %v3122 = vadd.f32 %v3079, 1.0
    %v3123 = vadd.f32 %v3081, 1.0
    %v3124 = vadd.f32 %v3083, 1.0
    %v3125 = vadd.f32 %v3085, 1.0
    %v3126 = vadd.f32 %v3087, 1.0
    %v3127 = vadd.f32 %v3089, 1.0
    %v3128 = vadd.f32 %v3091, 1.0
    %v3129 = vadd.f32 %v3093, 1.0
    %v3130 = vadd.f32 %v3095, 1.0
    %v3131 = vadd.f32 %v3097, 1.0
    %v3132 = vadd.f32 %v3099, 1.0
    %v3133 = vadd.f32 %v3101, 1.0
    %v3134 = vrcp.pop %v3102
    %v3135 = vmul.f32 1.0, %v3134
    %v3136 = vrcp.pop %v3103
    %v3137 = vmul.f32 1.0, %v3136
    %v3138 = vrcp.pop %v3104
    %v3139 = vmul.f32 1.0, %v3138
    %v3140 = vrcp.pop %v3105
    %v3141 = vmul.f32 1.0, %v3140
    %v3142 = vrcp.pop %v3106
    %v3143 = vmul.f32 1.0, %v3142
    %v3144 = vrcp.pop %v3107
    %v3145 = vmul.f32 1.0, %v3144
    %v3146 = vrcp.pop %v3108
    %v3147 = vmul.f32 1.0, %v3146
    %v3148 = vrcp.pop %v3109
    %v3149 = vmul.f32 1.0, %v3148
    %v3150 = vrcp.pop %v3110
    %v3151 = vmul.f32 1.0, %v3150
    %v3152 = vrcp.pop %v3111
    %v3153 = vmul.f32 1.0, %v3152
    %v3154 = vrcp.pop %v3112
    %v3155 = vmul.f32 1.0, %v3154
    %v3156 = vrcp.pop %v3113
    %v3157 = vmul.f32 1.0, %v3156
    %v3158 = vrcp.pop %v3114
    %v3159 = vmul.f32 1.0, %v3158
    %v3160 = vrcp.pop %v3115
    %v3161 = vmul.f32 1.0, %v3160
    %v3162 = vrcp.pop %v3116
    %v3163 = vmul.f32 1.0, %v3162
    %v3164 = vrcp.pop %v3117
    %v3165 = vmul.f32 1.0, %v3164
    %v3166 = vrcp.pop %v3118
    %v3167 = vmul.f32 1.0, %v3166
    %v3168 = vrcp.pop %v3119
    %v3169 = vmul.f32 1.0, %v3168
    %v3170 = vrcp.pop %v3120
    %v3171 = vmul.f32 1.0, %v3170
    %v3172 = vrcp.pop %v3121
    %v3173 = vmul.f32 1.0, %v3172
    %v3174 = vrcp.pop %v3122
    %v3175 = vmul.f32 1.0, %v3174
    %v3176 = vrcp.pop %v3123
    %v3177 = vmul.f32 1.0, %v3176
    %v3178 = vrcp.pop %v3124
    %v3179 = vmul.f32 1.0, %v3178
    %v3180 = vrcp.pop %v3125
    %v3181 = vmul.f32 1.0, %v3180
    %v3182 = vrcp.pop %v3126
    %v3183 = vmul.f32 1.0, %v3182
    %v3184 = vrcp.pop %v3127
    %v3185 = vmul.f32 1.0, %v3184
    %v3186 = vrcp.pop %v3128
    %v3187 = vmul.f32 1.0, %v3186
    %v3188 = vrcp.pop %v3129
    %v3189 = vmul.f32 1.0, %v3188
    %v3190 = vrcp.pop %v3130
    %v3191 = vmul.f32 1.0, %v3190
    %v3192 = vrcp.pop %v3131
    %v3193 = vmul.f32 1.0, %v3192
    %v3194 = vrcp.pop %v3132
    %v3195 = vmul.f32 1.0, %v3194
    %v3196 = vrcp.pop %v3133
    %v3197 = vmul.f32 1.0, %v3196
    %3230 = vrot.lane.b32.xlu0 %v3135, 96
    %v3231 = vpop.permute.xlu0 %3230
    %3232 = vrot.lane.b32.xlu0 %v3137, 96
    %v3233 = vpop.permute.xlu0 %3232
    %3234 = vrot.lane.b32.xlu0 %v3139, 96
    %v3235 = vpop.permute.xlu0 %3234
    %3236 = vrot.lane.b32.xlu0 %v3141, 96
    %v3237 = vpop.permute.xlu0 %3236
    %3238 = vrot.lane.b32.xlu0 %v3143, 96
    %v3239 = vpop.permute.xlu0 %3238
    %3240 = vrot.lane.b32.xlu0 %v3145, 96
    %v3241 = vpop.permute.xlu0 %3240
    %3242 = vrot.lane.b32.xlu0 %v3147, 96
    %v3243 = vpop.permute.xlu0 %3242
    %3244 = vrot.lane.b32.xlu0 %v3149, 96
    %v3245 = vpop.permute.xlu0 %3244
    %3246 = vrot.lane.b32.xlu0 %v3151, 96
    %v3247 = vpop.permute.xlu0 %3246
    %3248 = vrot.lane.b32.xlu0 %v3153, 96
    %v3249 = vpop.permute.xlu0 %3248
    %3250 = vrot.lane.b32.xlu0 %v3155, 96
    %v3251 = vpop.permute.xlu0 %3250
    %3252 = vrot.lane.b32.xlu0 %v3157, 96
    %v3253 = vpop.permute.xlu0 %3252
    %3254 = vrot.lane.b32.xlu0 %v3159, 96
    %v3255 = vpop.permute.xlu0 %3254
    %3256 = vrot.lane.b32.xlu0 %v3161, 96
    %v3257 = vpop.permute.xlu0 %3256
    %3258 = vrot.lane.b32.xlu0 %v3163, 96
    %v3259 = vpop.permute.xlu0 %3258
    %3260 = vrot.lane.b32.xlu0 %v3165, 96
    %v3261 = vpop.permute.xlu0 %3260
    %3262 = vrot.lane.b32.xlu0 %v3167, 96
    %v3263 = vpop.permute.xlu0 %3262
    %3264 = vrot.lane.b32.xlu0 %v3169, 96
    %v3265 = vpop.permute.xlu0 %3264
    %3266 = vrot.lane.b32.xlu0 %v3171, 96
    %v3267 = vpop.permute.xlu0 %3266
    %3268 = vrot.lane.b32.xlu0 %v3173, 96
    %v3269 = vpop.permute.xlu0 %3268
    %3270 = vrot.lane.b32.xlu0 %v3175, 96
    %v3271 = vpop.permute.xlu0 %3270
    %3272 = vrot.lane.b32.xlu0 %v3177, 96
    %v3273 = vpop.permute.xlu0 %3272
    %3274 = vrot.lane.b32.xlu0 %v3179, 96
    %v3275 = vpop.permute.xlu0 %3274
    %3276 = vrot.lane.b32.xlu0 %v3181, 96
    %v3277 = vpop.permute.xlu0 %3276
    %3278 = vrot.lane.b32.xlu0 %v3183, 96
    %v3279 = vpop.permute.xlu0 %3278
    %3280 = vrot.lane.b32.xlu0 %v3185, 96
    %v3281 = vpop.permute.xlu0 %3280
    %3282 = vrot.lane.b32.xlu0 %v3187, 96
    %v3283 = vpop.permute.xlu0 %3282
    %3284 = vrot.lane.b32.xlu0 %v3189, 96
    %v3285 = vpop.permute.xlu0 %3284
    %3286 = vrot.lane.b32.xlu0 %v3191, 96
    %v3287 = vpop.permute.xlu0 %3286
    %3288 = vrot.lane.b32.xlu0 %v3193, 96
    %v3289 = vpop.permute.xlu0 %3288
    %3290 = vrot.lane.b32.xlu0 %v3195, 96
    %v3291 = vpop.permute.xlu0 %3290
    %3292 = vrot.lane.b32.xlu0 %v3197, 96
    %v3293 = vpop.permute.xlu0 %3292
    %v3326 = vmul.f32 %v2880, %v3231
    %v3327 = vmul.f32 %v2883, %v3233
    %v3328 = vmul.f32 %v2888, %v3235
    %v3329 = vmul.f32 %v2891, %v3237
    %v3330 = vmul.f32 %v2896, %v3239
    %v3331 = vmul.f32 %v2899, %v3241
    %v3332 = vmul.f32 %v2904, %v3243
    %v3333 = vmul.f32 %v2907, %v3245
    %v3334 = vmul.f32 %v2912, %v3247
    %v3335 = vmul.f32 %v2915, %v3249
    %v3336 = vmul.f32 %v2920, %v3251
    %v3337 = vmul.f32 %v2923, %v3253
    %v3338 = vmul.f32 %v2928, %v3255
    %v3339 = vmul.f32 %v2931, %v3257
    %v3340 = vmul.f32 %v2936, %v3259
    %v3341 = vmul.f32 %v2939, %v3261
    %v3342 = vmul.f32 %v2944, %v3263
    %v3343 = vmul.f32 %v2947, %v3265
    %v3344 = vmul.f32 %v2952, %v3267
    %v3345 = vmul.f32 %v2955, %v3269
    %v3346 = vmul.f32 %v2960, %v3271
    %v3347 = vmul.f32 %v2963, %v3273
    %v3348 = vmul.f32 %v2968, %v3275
    %v3349 = vmul.f32 %v2971, %v3277
    %v3350 = vmul.f32 %v2976, %v3279
    %v3351 = vmul.f32 %v2979, %v3281
    %v3352 = vmul.f32 %v2984, %v3283
    %v3353 = vmul.f32 %v2987, %v3285
    %v3354 = vmul.f32 %v2992, %v3287
    %v3355 = vmul.f32 %v2995, %v3289
    %v3356 = vmul.f32 %v3000, %v3291
    %v3357 = vmul.f32 %v3003, %v3293
    %v3358 = vadd.f32 %v1764, %v3326
    %v3359 = vadd.f32 %v1765, %v3327
    %v3360 = vadd.f32 %v1766, %v3328
    %v3361 = vadd.f32 %v1767, %v3329
    %v3362 = vadd.f32 %v1768, %v3330
    %v3363 = vadd.f32 %v1769, %v3331
    %v3364 = vadd.f32 %v1770, %v3332
    %v3365 = vadd.f32 %v1771, %v3333
    %v3366 = vadd.f32 %v1772, %v3334
    %v3367 = vadd.f32 %v1773, %v3335
    %v3368 = vadd.f32 %v1774, %v3336
    %v3369 = vadd.f32 %v1775, %v3337
    %v3370 = vadd.f32 %v1776, %v3338
    %v3371 = vadd.f32 %v1777, %v3339
    %v3372 = vadd.f32 %v1778, %v3340
    %v3373 = vadd.f32 %v1779, %v3341
    %v3374 = vadd.f32 %v1780, %v3342
    %v3375 = vadd.f32 %v1781, %v3343
    %v3376 = vadd.f32 %v1782, %v3344
    %v3377 = vadd.f32 %v1783, %v3345
    %v3378 = vadd.f32 %v1784, %v3346
    %v3379 = vadd.f32 %v1785, %v3347
    %v3380 = vadd.f32 %v1786, %v3348
    %v3381 = vadd.f32 %v1787, %v3349
    %v3382 = vadd.f32 %v1788, %v3350
    %v3383 = vadd.f32 %v1789, %v3351
    %v3384 = vadd.f32 %v1790, %v3352
    %v3385 = vadd.f32 %v1791, %v3353
    %v3386 = vadd.f32 %v1792, %v3354
    %v3387 = vadd.f32 %v1793, %v3355
    %v3388 = vadd.f32 %v1794, %v3356
    %v3389 = vadd.f32 %v1795, %v3357
    %v3390 = vmul.f32 %v3358, 0.70710677
    %v3391 = vmul.f32 %v3359, 0.70710677
    %v3392 = vmul.f32 %v3360, 0.70710677
    %v3393 = vmul.f32 %v3361, 0.70710677
    %v3394 = vmul.f32 %v3362, 0.70710677
    %v3395 = vmul.f32 %v3363, 0.70710677
    %v3396 = vmul.f32 %v3364, 0.70710677
    %v3397 = vmul.f32 %v3365, 0.70710677
    %v3398 = vmul.f32 %v3366, 0.70710677
    %v3399 = vmul.f32 %v3367, 0.70710677
    %v3400 = vmul.f32 %v3368, 0.70710677
    %v3401 = vmul.f32 %v3369, 0.70710677
    %v3402 = vmul.f32 %v3370, 0.70710677
    %v3403 = vmul.f32 %v3371, 0.70710677
    %v3404 = vmul.f32 %v3372, 0.70710677
    %v3405 = vmul.f32 %v3373, 0.70710677
    %v3406 = vmul.f32 %v3374, 0.70710677
    %v3407 = vmul.f32 %v3375, 0.70710677
    %v3408 = vmul.f32 %v3376, 0.70710677
    %v3409 = vmul.f32 %v3377, 0.70710677
    %v3410 = vmul.f32 %v3378, 0.70710677
    %v3411 = vmul.f32 %v3379, 0.70710677
    %v3412 = vmul.f32 %v3380, 0.70710677
    %v3413 = vmul.f32 %v3381, 0.70710677
    %v3414 = vmul.f32 %v3382, 0.70710677
    %v3415 = vmul.f32 %v3383, 0.70710677
    %v3416 = vmul.f32 %v3384, 0.70710677
    %v3417 = vmul.f32 %v3385, 0.70710677
    %v3418 = vmul.f32 %v3386, 0.70710677
    %v3419 = vmul.f32 %v3387, 0.70710677
    %v3420 = vmul.f32 %v3388, 0.70710677
    %v3421 = vmul.f32 %v3389, 0.70710677
    %v3422 = vpack.c.bf16 %v3391, %v3390
    %v3423 = vpack.c.bf16 %v3393, %v3392
    %v3424 = vpack.c.bf16 %v3395, %v3394
    %v3425 = vpack.c.bf16 %v3397, %v3396
    %v3426 = vpack.c.bf16 %v3399, %v3398
    %v3427 = vpack.c.bf16 %v3401, %v3400
    %v3428 = vpack.c.bf16 %v3403, %v3402
    %v3429 = vpack.c.bf16 %v3405, %v3404
    %v3430 = vpack.c.bf16 %v3407, %v3406
    %v3431 = vpack.c.bf16 %v3409, %v3408
    %v3432 = vpack.c.bf16 %v3411, %v3410
    %v3433 = vpack.c.bf16 %v3413, %v3412
    %v3434 = vpack.c.bf16 %v3415, %v3414
    %v3435 = vpack.c.bf16 %v3417, %v3416
    %v3436 = vpack.c.bf16 %v3419, %v3418
    %v3437 = vpack.c.bf16 %v3421, %v3420
    %v3454 = vunpack.c.l.b16 %v3422
    %v3455 = vunpack.c.h.b16 %v3422
    %v3456 = vunpack.c.l.b16 %v3423
    %v3457 = vunpack.c.h.b16 %v3423
    %v3458 = vunpack.c.l.b16 %v3424
    %v3459 = vunpack.c.h.b16 %v3424
    %v3460 = vunpack.c.l.b16 %v3425
    %v3461 = vunpack.c.h.b16 %v3425
    %v3462 = vunpack.c.l.b16 %v3426
    %v3463 = vunpack.c.h.b16 %v3426
    %v3464 = vunpack.c.l.b16 %v3427
    %v3465 = vunpack.c.h.b16 %v3427
    %v3466 = vunpack.c.l.b16 %v3428
    %v3467 = vunpack.c.h.b16 %v3428
    %v3468 = vunpack.c.l.b16 %v3429
    %v3469 = vunpack.c.h.b16 %v3429
    %v3470 = vunpack.c.l.b16 %v3430
    %v3471 = vunpack.c.h.b16 %v3430
    %v3472 = vunpack.c.l.b16 %v3431
    %v3473 = vunpack.c.h.b16 %v3431
    %v3474 = vunpack.c.l.b16 %v3432
    %v3475 = vunpack.c.h.b16 %v3432
    %v3476 = vunpack.c.l.b16 %v3433
    %v3477 = vunpack.c.h.b16 %v3433
    %v3478 = vunpack.c.l.b16 %v3434
    %v3479 = vunpack.c.h.b16 %v3434
    %v3480 = vunpack.c.l.b16 %v3435
    %v3481 = vunpack.c.h.b16 %v3435
    %v3482 = vunpack.c.l.b16 %v3436
    %v3483 = vunpack.c.h.b16 %v3436
    %v3484 = vunpack.c.l.b16 %v3437
    %v3485 = vunpack.c.h.b16 %v3437
    %v3486 = vpack.c.b16 %v3454, %v3454
    %v3487 = vpack.c.b16 %v3455, %v3455
    %v3488 = vpack.c.b16 %v3456, %v3456
    %v3489 = vpack.c.b16 %v3457, %v3457
    %v3490 = vpack.c.b16 %v3458, %v3458
    %v3491 = vpack.c.b16 %v3459, %v3459
    %v3492 = vpack.c.b16 %v3460, %v3460
    %v3493 = vpack.c.b16 %v3461, %v3461
    %v3494 = vpack.c.b16 %v3462, %v3462
    %v3495 = vpack.c.b16 %v3463, %v3463
    %v3496 = vpack.c.b16 %v3464, %v3464
    %v3497 = vpack.c.b16 %v3465, %v3465
    %v3498 = vpack.c.b16 %v3466, %v3466
    %v3499 = vpack.c.b16 %v3467, %v3467
    %v3500 = vpack.c.b16 %v3468, %v3468
    %v3501 = vpack.c.b16 %v3469, %v3469
    %v3502 = vpack.c.b16 %v3470, %v3470
    %v3503 = vpack.c.b16 %v3471, %v3471
    %v3504 = vpack.c.b16 %v3472, %v3472
    %v3505 = vpack.c.b16 %v3473, %v3473
    %v3506 = vpack.c.b16 %v3474, %v3474
    %v3507 = vpack.c.b16 %v3475, %v3475
    %v3508 = vpack.c.b16 %v3476, %v3476
    %v3509 = vpack.c.b16 %v3477, %v3477
    %v3510 = vpack.c.b16 %v3478, %v3478
    %v3511 = vpack.c.b16 %v3479, %v3479
    %v3512 = vpack.c.b16 %v3480, %v3480
    %v3513 = vpack.c.b16 %v3481, %v3481
    %v3514 = vpack.c.b16 %v3482, %v3482
    %v3515 = vpack.c.b16 %v3483, %v3483
    %v3516 = vpack.c.b16 %v3484, %v3484
    %v3517 = vpack.c.b16 %v3485, %v3485
    %v3519 = vshrl.u32 %v3486, 16
    %v3521 = vrot.slane %v3519, 7
    %v3522 = vshll.u32 %v3486, 16
    %v3524 = vor.u32 %v3521, %v3522
    %v3525 = vrot.slane %v3521, 4
    %v3527 = vshrl.u32 %v3487, 16
    %v3529 = vrot.slane %v3527, 7
    %v3530 = vshll.u32 %v3487, 16
    %v3532 = vor.u32 %v3529, %v3530
    %v3533 = vsel %vm260, %v3525, %v3532
    %v3534 = vrot.slane %v3529, 4
    %v3536 = vshrl.u32 %v3488, 16
    %v3538 = vrot.slane %v3536, 7
    %v3539 = vshll.u32 %v3488, 16
    %v3541 = vor.u32 %v3538, %v3539
    %v3542 = vrot.slane %v3538, 4
    %v3544 = vshrl.u32 %v3489, 16
    %v3546 = vrot.slane %v3544, 7
    %v3547 = vshll.u32 %v3489, 16
    %v3549 = vor.u32 %v3546, %v3547
    %v3550 = vsel %vm260, %v3542, %v3549
    %v3551 = vrot.slane %v3546, 4
    %v3553 = vshrl.u32 %v3490, 16
    %v3555 = vrot.slane %v3553, 7
    %v3556 = vshll.u32 %v3490, 16
    %v3558 = vor.u32 %v3555, %v3556
    %v3559 = vrot.slane %v3555, 4
    %v3561 = vshrl.u32 %v3491, 16
    %v3563 = vrot.slane %v3561, 7
    %v3564 = vshll.u32 %v3491, 16
    %v3566 = vor.u32 %v3563, %v3564
    %v3567 = vsel %vm260, %v3559, %v3566
    %v3568 = vrot.slane %v3563, 4
    %v3570 = vshrl.u32 %v3492, 16
    %v3572 = vrot.slane %v3570, 7
    %v3573 = vshll.u32 %v3492, 16
    %v3575 = vor.u32 %v3572, %v3573
    %v3576 = vrot.slane %v3572, 4
    %v3578 = vshrl.u32 %v3493, 16
    %v3580 = vrot.slane %v3578, 7
    %v3581 = vshll.u32 %v3493, 16
    %v3583 = vor.u32 %v3580, %v3581
    %v3584 = vsel %vm260, %v3576, %v3583
    %v3585 = vrot.slane %v3580, 4
    %v3587 = vshrl.u32 %v3494, 16
    %v3589 = vrot.slane %v3587, 7
    %v3590 = vshll.u32 %v3494, 16
    %v3592 = vor.u32 %v3589, %v3590
    %v3593 = vrot.slane %v3589, 4
    %v3595 = vshrl.u32 %v3495, 16
    %v3597 = vrot.slane %v3595, 7
    %v3598 = vshll.u32 %v3495, 16
    %v3600 = vor.u32 %v3597, %v3598
    %v3601 = vsel %vm260, %v3593, %v3600
    %v3602 = vrot.slane %v3597, 4
    %v3604 = vshrl.u32 %v3496, 16
    %v3606 = vrot.slane %v3604, 7
    %v3607 = vshll.u32 %v3496, 16
    %v3609 = vor.u32 %v3606, %v3607
    %v3610 = vrot.slane %v3606, 4
    %v3612 = vshrl.u32 %v3497, 16
    %v3614 = vrot.slane %v3612, 7
    %v3615 = vshll.u32 %v3497, 16
    %v3617 = vor.u32 %v3614, %v3615
    %v3618 = vsel %vm260, %v3610, %v3617
    %v3619 = vrot.slane %v3614, 4
    %v3621 = vshrl.u32 %v3498, 16
    %v3623 = vrot.slane %v3621, 7
    %v3624 = vshll.u32 %v3498, 16
    %v3626 = vor.u32 %v3623, %v3624
    %v3627 = vrot.slane %v3623, 4
    %v3629 = vshrl.u32 %v3499, 16
    %v3631 = vrot.slane %v3629, 7
    %v3632 = vshll.u32 %v3499, 16
    %v3634 = vor.u32 %v3631, %v3632
    %v3635 = vsel %vm260, %v3627, %v3634
    %v3636 = vrot.slane %v3631, 4
    %v3638 = vshrl.u32 %v3500, 16
    %v3640 = vrot.slane %v3638, 7
    %v3641 = vshll.u32 %v3500, 16
    %v3643 = vor.u32 %v3640, %v3641
    %v3644 = vrot.slane %v3640, 4
    %v3646 = vshrl.u32 %v3501, 16
    %v3648 = vrot.slane %v3646, 7
    %v3649 = vshll.u32 %v3501, 16
    %v3651 = vor.u32 %v3648, %v3649
    %v3652 = vsel %vm260, %v3644, %v3651
    %v3653 = vrot.slane %v3648, 4
    %v3655 = vshrl.u32 %v3502, 16
    %v3657 = vrot.slane %v3655, 7
    %v3658 = vshll.u32 %v3502, 16
    %v3660 = vor.u32 %v3657, %v3658
    %v3661 = vrot.slane %v3657, 4
    %v3663 = vshrl.u32 %v3503, 16
    %v3665 = vrot.slane %v3663, 7
    %v3666 = vshll.u32 %v3503, 16
    %v3668 = vor.u32 %v3665, %v3666
    %v3669 = vsel %vm260, %v3661, %v3668
    %v3670 = vrot.slane %v3665, 4
    %v3672 = vshrl.u32 %v3504, 16
    %v3674 = vrot.slane %v3672, 7
    %v3675 = vshll.u32 %v3504, 16
    %v3677 = vor.u32 %v3674, %v3675
    %v3678 = vrot.slane %v3674, 4
    %v3680 = vshrl.u32 %v3505, 16
    %v3682 = vrot.slane %v3680, 7
    %v3683 = vshll.u32 %v3505, 16
    %v3685 = vor.u32 %v3682, %v3683
    %v3686 = vsel %vm260, %v3678, %v3685
    %v3687 = vrot.slane %v3682, 4
    %v3689 = vshrl.u32 %v3506, 16
    %v3691 = vrot.slane %v3689, 7
    %v3692 = vshll.u32 %v3506, 16
    %v3694 = vor.u32 %v3691, %v3692
    %v3695 = vrot.slane %v3691, 4
    %v3697 = vshrl.u32 %v3507, 16
    %v3699 = vrot.slane %v3697, 7
    %v3700 = vshll.u32 %v3507, 16
    %v3702 = vor.u32 %v3699, %v3700
    %v3703 = vsel %vm260, %v3695, %v3702
    %v3704 = vrot.slane %v3699, 4
    %v3706 = vshrl.u32 %v3508, 16
    %v3708 = vrot.slane %v3706, 7
    %v3709 = vshll.u32 %v3508, 16
    %v3711 = vor.u32 %v3708, %v3709
    %v3712 = vrot.slane %v3708, 4
    %v3714 = vshrl.u32 %v3509, 16
    %v3716 = vrot.slane %v3714, 7
    %v3717 = vshll.u32 %v3509, 16
    %v3719 = vor.u32 %v3716, %v3717
    %v3720 = vsel %vm260, %v3712, %v3719
    %v3721 = vrot.slane %v3716, 4
    %v3723 = vshrl.u32 %v3510, 16
    %v3725 = vrot.slane %v3723, 7
    %v3726 = vshll.u32 %v3510, 16
    %v3728 = vor.u32 %v3725, %v3726
    %v3729 = vrot.slane %v3725, 4
    %v3731 = vshrl.u32 %v3511, 16
    %v3733 = vrot.slane %v3731, 7
    %v3734 = vshll.u32 %v3511, 16
    %v3736 = vor.u32 %v3733, %v3734
    %v3737 = vsel %vm260, %v3729, %v3736
    %v3738 = vrot.slane %v3733, 4
    %v3740 = vshrl.u32 %v3512, 16
    %v3742 = vrot.slane %v3740, 7
    %v3743 = vshll.u32 %v3512, 16
    %v3745 = vor.u32 %v3742, %v3743
    %v3746 = vrot.slane %v3742, 4
    %v3748 = vshrl.u32 %v3513, 16
    %v3750 = vrot.slane %v3748, 7
    %v3751 = vshll.u32 %v3513, 16
    %v3753 = vor.u32 %v3750, %v3751
    %v3754 = vsel %vm260, %v3746, %v3753
    %v3755 = vrot.slane %v3750, 4
    %v3757 = vshrl.u32 %v3514, 16
    %v3759 = vrot.slane %v3757, 7
    %v3760 = vshll.u32 %v3514, 16
    %v3762 = vor.u32 %v3759, %v3760
    %v3763 = vrot.slane %v3759, 4
    %v3765 = vshrl.u32 %v3515, 16
    %v3767 = vrot.slane %v3765, 7
    %v3768 = vshll.u32 %v3515, 16
    %v3770 = vor.u32 %v3767, %v3768
    %v3771 = vsel %vm260, %v3763, %v3770
    %v3772 = vrot.slane %v3767, 4
    %v3774 = vshrl.u32 %v3516, 16
    %v3776 = vrot.slane %v3774, 7
    %v3777 = vshll.u32 %v3516, 16
    %v3779 = vor.u32 %v3776, %v3777
    %v3780 = vrot.slane %v3776, 4
    %v3782 = vshrl.u32 %v3517, 16
    %v3784 = vrot.slane %v3782, 7
    %v3785 = vshll.u32 %v3517, 16
    %v3787 = vor.u32 %v3784, %v3785
    %v3788 = vsel %vm260, %v3780, %v3787
    %v3789 = vrot.slane %v3784, 4
    %v3838 = vld [vmem:[#allocation2] sm:$0xf]
    %v3839 = vsel %vm582, %v3524, %v3838
    %3840 = vst [vmem:[#allocation2] sm:$0xf] %v3839
    %3841 = vst.msk [vmem:[#allocation2 + $0x4] sm:$0xf] %vm586, %v3533
    %v3842 = vld [vmem:[#allocation2 + $0x8] sm:$0x1]
    %v3843 = vsel %vm32, %v3534, %v3842
    %3844 = vst [vmem:[#allocation2 + $0x8] sm:$0x1] %v3843
    %v3845 = vld [vmem:[#allocation2 + $0xc] sm:$0xf]
    %v3846 = vsel %vm582, %v3541, %v3845
    %3847 = vst [vmem:[#allocation2 + $0xc] sm:$0xf] %v3846
    %3848 = vst.msk [vmem:[#allocation2 + $0x10] sm:$0xf] %vm586, %v3550
    %v3849 = vld [vmem:[#allocation2 + $0x14] sm:$0x1]
    %v3850 = vsel %vm32, %v3551, %v3849
    %3851 = vst [vmem:[#allocation2 + $0x14] sm:$0x1] %v3850
    %v3852 = vld [vmem:[#allocation2 + $0x18] sm:$0xf]
    %v3853 = vsel %vm582, %v3558, %v3852
    %3854 = vst [vmem:[#allocation2 + $0x18] sm:$0xf] %v3853
    %3855 = vst.msk [vmem:[#allocation2 + $0x1c] sm:$0xf] %vm586, %v3567
    %v3856 = vld [vmem:[#allocation2 + $0x20] sm:$0x1]
    %v3857 = vsel %vm32, %v3568, %v3856
    %3858 = vst [vmem:[#allocation2 + $0x20] sm:$0x1] %v3857
    %v3859 = vld [vmem:[#allocation2 + $0x24] sm:$0xf]
    %v3860 = vsel %vm582, %v3575, %v3859
    %3861 = vst [vmem:[#allocation2 + $0x24] sm:$0xf] %v3860
    %3862 = vst.msk [vmem:[#allocation2 + $0x28] sm:$0xf] %vm586, %v3584
    %v3863 = vld [vmem:[#allocation2 + $0x2c] sm:$0x1]
    %v3864 = vsel %vm32, %v3585, %v3863
    %3865 = vst [vmem:[#allocation2 + $0x2c] sm:$0x1] %v3864
    %v3866 = vld [vmem:[#allocation2 + $0x30] sm:$0xf]
    %v3867 = vsel %vm582, %v3592, %v3866
    %3868 = vst [vmem:[#allocation2 + $0x30] sm:$0xf] %v3867
    %3869 = vst.msk [vmem:[#allocation2 + $0x34] sm:$0xf] %vm586, %v3601
    %v3870 = vld [vmem:[#allocation2 + $0x38] sm:$0x1]
    %v3871 = vsel %vm32, %v3602, %v3870
    %3872 = vst [vmem:[#allocation2 + $0x38] sm:$0x1] %v3871
    %v3873 = vld [vmem:[#allocation2 + $0x3c] sm:$0xf]
    %v3874 = vsel %vm582, %v3609, %v3873
    %3875 = vst [vmem:[#allocation2 + $0x3c] sm:$0xf] %v3874
    %3876 = vst.msk [vmem:[#allocation2 + $0x40] sm:$0xf] %vm586, %v3618
    %v3877 = vld [vmem:[#allocation2 + $0x44] sm:$0x1]
    %v3878 = vsel %vm32, %v3619, %v3877
    %3879 = vst [vmem:[#allocation2 + $0x44] sm:$0x1] %v3878
    %v3880 = vld [vmem:[#allocation2 + $0x48] sm:$0xf]
    %v3881 = vsel %vm582, %v3626, %v3880
    %3882 = vst [vmem:[#allocation2 + $0x48] sm:$0xf] %v3881
    %3883 = vst.msk [vmem:[#allocation2 + $0x4c] sm:$0xf] %vm586, %v3635
    %v3884 = vld [vmem:[#allocation2 + $0x50] sm:$0x1]
    %v3885 = vsel %vm32, %v3636, %v3884
    %3886 = vst [vmem:[#allocation2 + $0x50] sm:$0x1] %v3885
    %v3887 = vld [vmem:[#allocation2 + $0x54] sm:$0xf]
    %v3888 = vsel %vm582, %v3643, %v3887
    %3889 = vst [vmem:[#allocation2 + $0x54] sm:$0xf] %v3888
    %3890 = vst.msk [vmem:[#allocation2 + $0x58] sm:$0xf] %vm586, %v3652
    %v3891 = vld [vmem:[#allocation2 + $0x5c] sm:$0x1]
    %v3892 = vsel %vm32, %v3653, %v3891
    %3893 = vst [vmem:[#allocation2 + $0x5c] sm:$0x1] %v3892
    %v3894 = vld [vmem:[#allocation2 + $0x60] sm:$0xf]
    %v3895 = vsel %vm582, %v3660, %v3894
    %3896 = vst [vmem:[#allocation2 + $0x60] sm:$0xf] %v3895
    %3897 = vst.msk [vmem:[#allocation2 + $0x64] sm:$0xf] %vm586, %v3669
    %v3898 = vld [vmem:[#allocation2 + $0x68] sm:$0x1]
    %v3899 = vsel %vm32, %v3670, %v3898
    %3900 = vst [vmem:[#allocation2 + $0x68] sm:$0x1] %v3899
    %v3901 = vld [vmem:[#allocation2 + $0x6c] sm:$0xf]
    %v3902 = vsel %vm582, %v3677, %v3901
    %3903 = vst [vmem:[#allocation2 + $0x6c] sm:$0xf] %v3902
    %3904 = vst.msk [vmem:[#allocation2 + $0x70] sm:$0xf] %vm586, %v3686
    %v3905 = vld [vmem:[#allocation2 + $0x74] sm:$0x1]
    %v3906 = vsel %vm32, %v3687, %v3905
    %3907 = vst [vmem:[#allocation2 + $0x74] sm:$0x1] %v3906
    %v3908 = vld [vmem:[#allocation2 + $0x78] sm:$0xf]
    %v3909 = vsel %vm582, %v3694, %v3908
    %3910 = vst [vmem:[#allocation2 + $0x78] sm:$0xf] %v3909
    %3911 = vst.msk [vmem:[#allocation2 + $0x7c] sm:$0xf] %vm586, %v3703
    %v3912 = vld [vmem:[#allocation2 + $0x80] sm:$0x1]
    %v3913 = vsel %vm32, %v3704, %v3912
    %3914 = vst [vmem:[#allocation2 + $0x80] sm:$0x1] %v3913
    %v3915 = vld [vmem:[#allocation2 + $0x84] sm:$0xf]
    %v3916 = vsel %vm582, %v3711, %v3915
    %3917 = vst [vmem:[#allocation2 + $0x84] sm:$0xf] %v3916
    %3918 = vst.msk [vmem:[#allocation2 + $0x88] sm:$0xf] %vm586, %v3720
    %v3919 = vld [vmem:[#allocation2 + $0x8c] sm:$0x1]
    %v3920 = vsel %vm32, %v3721, %v3919
    %3921 = vst [vmem:[#allocation2 + $0x8c] sm:$0x1] %v3920
    %v3922 = vld [vmem:[#allocation2 + $0x90] sm:$0xf]
    %v3923 = vsel %vm582, %v3728, %v3922
    %3924 = vst [vmem:[#allocation2 + $0x90] sm:$0xf] %v3923
    %3925 = vst.msk [vmem:[#allocation2 + $0x94] sm:$0xf] %vm586, %v3737
    %v3926 = vld [vmem:[#allocation2 + $0x98] sm:$0x1]
    %v3927 = vsel %vm32, %v3738, %v3926
    %3928 = vst [vmem:[#allocation2 + $0x98] sm:$0x1] %v3927
    %v3929 = vld [vmem:[#allocation2 + $0x9c] sm:$0xf]
    %v3930 = vsel %vm582, %v3745, %v3929
    %3931 = vst [vmem:[#allocation2 + $0x9c] sm:$0xf] %v3930
    %3932 = vst.msk [vmem:[#allocation2 + $0xa0] sm:$0xf] %vm586, %v3754
    %v3933 = vld [vmem:[#allocation2 + $0xa4] sm:$0x1]
    %v3934 = vsel %vm32, %v3755, %v3933
    %3935 = vst [vmem:[#allocation2 + $0xa4] sm:$0x1] %v3934
    %v3936 = vld [vmem:[#allocation2 + $0xa8] sm:$0xf]
    %v3937 = vsel %vm582, %v3762, %v3936
    %3938 = vst [vmem:[#allocation2 + $0xa8] sm:$0xf] %v3937
    %3939 = vst.msk [vmem:[#allocation2 + $0xac] sm:$0xf] %vm586, %v3771
    %v3940 = vld [vmem:[#allocation2 + $0xb0] sm:$0x1]
    %v3941 = vsel %vm32, %v3772, %v3940
    %3942 = vst [vmem:[#allocation2 + $0xb0] sm:$0x1] %v3941
    %v3943 = vld [vmem:[#allocation2 + $0xb4] sm:$0xf]
    %v3944 = vsel %vm582, %v3779, %v3943
    %3945 = vst [vmem:[#allocation2 + $0xb4] sm:$0xf] %v3944
    %3946 = vst.msk [vmem:[#allocation2 + $0xb8] sm:$0xf] %vm586, %v3788
    %v3947 = vld [vmem:[#allocation2 + $0xbc] sm:$0x1]
    %v3948 = vsel %vm32, %v3789, %v3947
    %3949 = vst [vmem:[#allocation2 + $0xbc] sm:$0x1] %v3948
    %v3950 = vld [vmem:[#allocation2] sm:$0xf]
    %v3951 = vld [vmem:[#allocation2 + $0x4] sm:$0xf]
    %v3952 = vld [vmem:[#allocation2 + $0xc] sm:$0xf]
    %v3953 = vld [vmem:[#allocation2 + $0x10] sm:$0xf]
    %v3954 = vld [vmem:[#allocation2 + $0x18] sm:$0xf]
    %v3955 = vld [vmem:[#allocation2 + $0x1c] sm:$0xf]
    %v3956 = vld [vmem:[#allocation2 + $0x24] sm:$0xf]
    %v3957 = vld [vmem:[#allocation2 + $0x28] sm:$0xf]
    %v3958 = vld [vmem:[#allocation2 + $0x30] sm:$0xf]
    %v3959 = vld [vmem:[#allocation2 + $0x34] sm:$0xf]
    %v3960 = vld [vmem:[#allocation2 + $0x3c] sm:$0xf]
    %v3961 = vld [vmem:[#allocation2 + $0x40] sm:$0xf]
    %v3962 = vld [vmem:[#allocation2 + $0x48] sm:$0xf]
    %v3963 = vld [vmem:[#allocation2 + $0x4c] sm:$0xf]
    %v3964 = vld [vmem:[#allocation2 + $0x54] sm:$0xf]
    %v3965 = vld [vmem:[#allocation2 + $0x58] sm:$0xf]
    %v3966 = vld [vmem:[#allocation2 + $0x60] sm:$0xf]
    %v3967 = vld [vmem:[#allocation2 + $0x64] sm:$0xf]
    %v3968 = vld [vmem:[#allocation2 + $0x6c] sm:$0xf]
    %v3969 = vld [vmem:[#allocation2 + $0x70] sm:$0xf]
    %v3970 = vld [vmem:[#allocation2 + $0x78] sm:$0xf]
    %v3971 = vld [vmem:[#allocation2 + $0x7c] sm:$0xf]
    %v3972 = vld [vmem:[#allocation2 + $0x84] sm:$0xf]
    %v3973 = vld [vmem:[#allocation2 + $0x88] sm:$0xf]
    %v3974 = vld [vmem:[#allocation2 + $0x90] sm:$0xf]
    %v3975 = vld [vmem:[#allocation2 + $0x94] sm:$0xf]
    %v3976 = vld [vmem:[#allocation2 + $0x9c] sm:$0xf]
    %v3977 = vld [vmem:[#allocation2 + $0xa0] sm:$0xf]
    %v3978 = vld [vmem:[#allocation2 + $0xa8] sm:$0xf]
    %v3979 = vld [vmem:[#allocation2 + $0xac] sm:$0xf]
    %v3980 = vld [vmem:[#allocation2 + $0xb4] sm:$0xf]
    %v3981 = vld [vmem:[#allocation2 + $0xb8] sm:$0xf]
    %v3982 = vld [vmem:[#allocation2] sm:$0xe]
    %v3983 = vld [vmem:[#allocation2 + $0x8] sm:$0x1]
    %v3984 = vld [vmem:[#allocation2 + $0xc] sm:$0xe]
    %v3985 = vld [vmem:[#allocation2 + $0x14] sm:$0x1]
    %v3986 = vld [vmem:[#allocation2 + $0x18] sm:$0xe]
    %v3987 = vld [vmem:[#allocation2 + $0x20] sm:$0x1]
    %v3988 = vld [vmem:[#allocation2 + $0x24] sm:$0xe]
    %v3989 = vld [vmem:[#allocation2 + $0x2c] sm:$0x1]
    %v3990 = vld [vmem:[#allocation2 + $0x30] sm:$0xe]
    %v3991 = vld [vmem:[#allocation2 + $0x38] sm:$0x1]
    %v3992 = vld [vmem:[#allocation2 + $0x3c] sm:$0xe]
    %v3993 = vld [vmem:[#allocation2 + $0x44] sm:$0x1]
    %v3994 = vld [vmem:[#allocation2 + $0x48] sm:$0xe]
    %v3995 = vld [vmem:[#allocation2 + $0x50] sm:$0x1]
    %v3996 = vld [vmem:[#allocation2 + $0x54] sm:$0xe]
    %v3997 = vld [vmem:[#allocation2 + $0x5c] sm:$0x1]
    %v3998 = vld [vmem:[#allocation2 + $0x60] sm:$0xe]
    %v3999 = vld [vmem:[#allocation2 + $0x68] sm:$0x1]
    %v4000 = vld [vmem:[#allocation2 + $0x6c] sm:$0xe]
    %v4001 = vld [vmem:[#allocation2 + $0x74] sm:$0x1]
    %v4002 = vld [vmem:[#allocation2 + $0x78] sm:$0xe]
    %v4003 = vld [vmem:[#allocation2 + $0x80] sm:$0x1]
    %v4004 = vld [vmem:[#allocation2 + $0x84] sm:$0xe]
    %v4005 = vld [vmem:[#allocation2 + $0x8c] sm:$0x1]
    %v4006 = vld [vmem:[#allocation2 + $0x90] sm:$0xe]
    %v4007 = vld [vmem:[#allocation2 + $0x98] sm:$0x1]
    %v4008 = vld [vmem:[#allocation2 + $0x9c] sm:$0xe]
    %v4009 = vld [vmem:[#allocation2 + $0xa4] sm:$0x1]
    %v4010 = vld [vmem:[#allocation2 + $0xa8] sm:$0xe]
    %v4011 = vld [vmem:[#allocation2 + $0xb0] sm:$0x1]
    %v4012 = vld [vmem:[#allocation2 + $0xb4] sm:$0xe]
    %v4013 = vld [vmem:[#allocation2 + $0xbc] sm:$0x1]
    %v4046 = vunpack.c.l.b16 %v3950
    %v4047 = vunpack.c.l.b16 %v3951
    %v4048 = vunpack.c.l.b16 %v3952
    %v4049 = vunpack.c.l.b16 %v3953
    %v4050 = vunpack.c.l.b16 %v3954
    %v4051 = vunpack.c.l.b16 %v3955
    %v4052 = vunpack.c.l.b16 %v3956
    %v4053 = vunpack.c.l.b16 %v3957
    %v4054 = vunpack.c.l.b16 %v3958
    %v4055 = vunpack.c.l.b16 %v3959
    %v4056 = vunpack.c.l.b16 %v3960
    %v4057 = vunpack.c.l.b16 %v3961
    %v4058 = vunpack.c.l.b16 %v3962
    %v4059 = vunpack.c.l.b16 %v3963
    %v4060 = vunpack.c.l.b16 %v3964
    %v4061 = vunpack.c.l.b16 %v3965
    %v4062 = vunpack.c.l.b16 %v3966
    %v4063 = vunpack.c.l.b16 %v3967
    %v4064 = vunpack.c.l.b16 %v3968
    %v4065 = vunpack.c.l.b16 %v3969
    %v4066 = vunpack.c.l.b16 %v3970
    %v4067 = vunpack.c.l.b16 %v3971
    %v4068 = vunpack.c.l.b16 %v3972
    %v4069 = vunpack.c.l.b16 %v3973
    %v4070 = vunpack.c.l.b16 %v3974
    %v4071 = vunpack.c.l.b16 %v3975
    %v4072 = vunpack.c.l.b16 %v3976
    %v4073 = vunpack.c.l.b16 %v3977
    %v4074 = vunpack.c.l.b16 %v3978
    %v4075 = vunpack.c.l.b16 %v3979
    %v4076 = vunpack.c.l.b16 %v3980
    %v4077 = vunpack.c.l.b16 %v3981
    %v4078 = vpack.c.b16 %v4047, %v4046
    %v4079 = vpack.c.b16 %v4049, %v4048
    %v4080 = vpack.c.b16 %v4051, %v4050
    %v4081 = vpack.c.b16 %v4053, %v4052
    %v4082 = vpack.c.b16 %v4055, %v4054
    %v4083 = vpack.c.b16 %v4057, %v4056
    %v4084 = vpack.c.b16 %v4059, %v4058
    %v4085 = vpack.c.b16 %v4061, %v4060
    %v4086 = vpack.c.b16 %v4063, %v4062
    %v4087 = vpack.c.b16 %v4065, %v4064
    %v4088 = vpack.c.b16 %v4067, %v4066
    %v4089 = vpack.c.b16 %v4069, %v4068
    %v4090 = vpack.c.b16 %v4071, %v4070
    %v4091 = vpack.c.b16 %v4073, %v4072
    %v4092 = vpack.c.b16 %v4075, %v4074
    %v4093 = vpack.c.b16 %v4077, %v4076
    %4094 = vrot.lane.b32.xlu0 %v3422, 32
    %v4095 = vpop.permute.xlu0 %4094
    %4096 = vrot.lane.b32.xlu0 %v3423, 32
    %v4097 = vpop.permute.xlu0 %4096
    %4098 = vrot.lane.b32.xlu0 %v3424, 32
    %v4099 = vpop.permute.xlu0 %4098
    %4100 = vrot.lane.b32.xlu0 %v3425, 32
    %v4101 = vpop.permute.xlu0 %4100
    %4102 = vrot.lane.b32.xlu0 %v3426, 32
    %v4103 = vpop.permute.xlu0 %4102
    %4104 = vrot.lane.b32.xlu0 %v3427, 32
    %v4105 = vpop.permute.xlu0 %4104
    %4106 = vrot.lane.b32.xlu0 %v3428, 32
    %v4107 = vpop.permute.xlu0 %4106
    %4108 = vrot.lane.b32.xlu0 %v3429, 32
    %v4109 = vpop.permute.xlu0 %4108
    %4110 = vrot.lane.b32.xlu0 %v3430, 32
    %v4111 = vpop.permute.xlu0 %4110
    %4112 = vrot.lane.b32.xlu0 %v3431, 32
    %v4113 = vpop.permute.xlu0 %4112
    %4114 = vrot.lane.b32.xlu0 %v3432, 32
    %v4115 = vpop.permute.xlu0 %4114
    %4116 = vrot.lane.b32.xlu0 %v3433, 32
    %v4117 = vpop.permute.xlu0 %4116
    %4118 = vrot.lane.b32.xlu0 %v3434, 32
    %v4119 = vpop.permute.xlu0 %4118
    %4120 = vrot.lane.b32.xlu0 %v3435, 32
    %v4121 = vpop.permute.xlu0 %4120
    %4122 = vrot.lane.b32.xlu0 %v3436, 32
    %v4123 = vpop.permute.xlu0 %4122
    %4124 = vrot.lane.b32.xlu0 %v3437, 32
    %v4125 = vpop.permute.xlu0 %4124
    %v4158 = vunpack.c.l.b16 %v3982
    %v4159 = vunpack.c.l.b16 %v3983
    %v4160 = vunpack.c.l.b16 %v3984
    %v4161 = vunpack.c.l.b16 %v3985
    %v4162 = vunpack.c.l.b16 %v3986
    %v4163 = vunpack.c.l.b16 %v3987
    %v4164 = vunpack.c.l.b16 %v3988
    %v4165 = vunpack.c.l.b16 %v3989
    %v4166 = vunpack.c.l.b16 %v3990
    %v4167 = vunpack.c.l.b16 %v3991
    %v4168 = vunpack.c.l.b16 %v3992
    %v4169 = vunpack.c.l.b16 %v3993
    %v4170 = vunpack.c.l.b16 %v3994
    %v4171 = vunpack.c.l.b16 %v3995
    %v4172 = vunpack.c.l.b16 %v3996
    %v4173 = vunpack.c.l.b16 %v3997
    %v4174 = vunpack.c.l.b16 %v3998
    %v4175 = vunpack.c.l.b16 %v3999
    %v4176 = vunpack.c.l.b16 %v4000
    %v4177 = vunpack.c.l.b16 %v4001
    %v4178 = vunpack.c.l.b16 %v4002
    %v4179 = vunpack.c.l.b16 %v4003
    %v4180 = vunpack.c.l.b16 %v4004
    %v4181 = vunpack.c.l.b16 %v4005
    %v4182 = vunpack.c.l.b16 %v4006
    %v4183 = vunpack.c.l.b16 %v4007
    %v4184 = vunpack.c.l.b16 %v4008
    %v4185 = vunpack.c.l.b16 %v4009
    %v4186 = vunpack.c.l.b16 %v4010
    %v4187 = vunpack.c.l.b16 %v4011
    %v4188 = vunpack.c.l.b16 %v4012
    %v4189 = vunpack.c.l.b16 %v4013
    %v4190 = vpack.c.b16 %v4047, %v4158
    %v4191 = vpack.c.b16 %v4159, %v4159
    %v4192 = vpack.c.b16 %v4049, %v4160
    %v4193 = vpack.c.b16 %v4161, %v4161
    %v4194 = vpack.c.b16 %v4051, %v4162
    %v4195 = vpack.c.b16 %v4163, %v4163
    %v4196 = vpack.c.b16 %v4053, %v4164
    %v4197 = vpack.c.b16 %v4165, %v4165
    %v4198 = vpack.c.b16 %v4055, %v4166
    %v4199 = vpack.c.b16 %v4167, %v4167
    %v4200 = vpack.c.b16 %v4057, %v4168
    %v4201 = vpack.c.b16 %v4169, %v4169
    %v4202 = vpack.c.b16 %v4059, %v4170
    %v4203 = vpack.c.b16 %v4171, %v4171
    %v4204 = vpack.c.b16 %v4061, %v4172
    %v4205 = vpack.c.b16 %v4173, %v4173
    %v4206 = vpack.c.b16 %v4063, %v4174
    %v4207 = vpack.c.b16 %v4175, %v4175
    %v4208 = vpack.c.b16 %v4065, %v4176
    %v4209 = vpack.c.b16 %v4177, %v4177
    %v4210 = vpack.c.b16 %v4067, %v4178
    %v4211 = vpack.c.b16 %v4179, %v4179
    %v4212 = vpack.c.b16 %v4069, %v4180
    %v4213 = vpack.c.b16 %v4181, %v4181
    %v4214 = vpack.c.b16 %v4071, %v4182
    %v4215 = vpack.c.b16 %v4183, %v4183
    %v4216 = vpack.c.b16 %v4073, %v4184
    %v4217 = vpack.c.b16 %v4185, %v4185
    %v4218 = vpack.c.b16 %v4075, %v4186
    %v4219 = vpack.c.b16 %v4187, %v4187
    %v4220 = vpack.c.b16 %v4077, %v4188
    %v4221 = vpack.c.b16 %v4189, %v4189
    %v4222 = vrot.slane %v4190, 1
    %v4223 = vrot.slane %v4191, 1
    %v4224 = vsel %vm968, %v4222, %v4223
    %v4225 = vrot.slane %v4192, 1
    %v4226 = vrot.slane %v4193, 1
    %v4227 = vsel %vm968, %v4225, %v4226
    %v4228 = vrot.slane %v4194, 1
    %v4229 = vrot.slane %v4195, 1
    %v4230 = vsel %vm968, %v4228, %v4229
    %v4231 = vrot.slane %v4196, 1
    %v4232 = vrot.slane %v4197, 1
    %v4233 = vsel %vm968, %v4231, %v4232
    %v4234 = vrot.slane %v4198, 1
    %v4235 = vrot.slane %v4199, 1
    %v4236 = vsel %vm968, %v4234, %v4235
    %v4237 = vrot.slane %v4200, 1
    %v4238 = vrot.slane %v4201, 1
    %v4239 = vsel %vm968, %v4237, %v4238
    %v4240 = vrot.slane %v4202, 1
    %v4241 = vrot.slane %v4203, 1
    %v4242 = vsel %vm968, %v4240, %v4241
    %v4243 = vrot.slane %v4204, 1
    %v4244 = vrot.slane %v4205, 1
    %v4245 = vsel %vm968, %v4243, %v4244
    %v4246 = vrot.slane %v4206, 1
    %v4247 = vrot.slane %v4207, 1
    %v4248 = vsel %vm968, %v4246, %v4247
    %v4249 = vrot.slane %v4208, 1
    %v4250 = vrot.slane %v4209, 1
    %v4251 = vsel %vm968, %v4249, %v4250
    %v4252 = vrot.slane %v4210, 1
    %v4253 = vrot.slane %v4211, 1
    %v4254 = vsel %vm968, %v4252, %v4253
    %v4255 = vrot.slane %v4212, 1
    %v4256 = vrot.slane %v4213, 1
    %v4257 = vsel %vm968, %v4255, %v4256
    %v4258 = vrot.slane %v4214, 1
    %v4259 = vrot.slane %v4215, 1
    %v4260 = vsel %vm968, %v4258, %v4259
    %v4261 = vrot.slane %v4216, 1
    %v4262 = vrot.slane %v4217, 1
    %v4263 = vsel %vm968, %v4261, %v4262
    %v4264 = vrot.slane %v4218, 1
    %v4265 = vrot.slane %v4219, 1
    %v4266 = vsel %vm968, %v4264, %v4265
    %v4267 = vrot.slane %v4220, 1
    %v4268 = vrot.slane %v4221, 1
    %v4269 = vsel %vm968, %v4267, %v4268
    %4270 = vrot.lane.b32.xlu0 %v4224, 64
    %v4271 = vpop.permute.xlu0 %4270
    %4272 = vrot.lane.b32.xlu0 %v4227, 64
    %v4273 = vpop.permute.xlu0 %4272
    %4274 = vrot.lane.b32.xlu0 %v4230, 64
    %v4275 = vpop.permute.xlu0 %4274
    %4276 = vrot.lane.b32.xlu0 %v4233, 64
    %v4277 = vpop.permute.xlu0 %4276
    %4278 = vrot.lane.b32.xlu0 %v4236, 64
    %v4279 = vpop.permute.xlu0 %4278
    %4280 = vrot.lane.b32.xlu0 %v4239, 64
    %v4281 = vpop.permute.xlu0 %4280
    %4282 = vrot.lane.b32.xlu0 %v4242, 64
    %v4283 = vpop.permute.xlu0 %4282
    %4284 = vrot.lane.b32.xlu0 %v4245, 64
    %v4285 = vpop.permute.xlu0 %4284
    %4286 = vrot.lane.b32.xlu0 %v4248, 64
    %v4287 = vpop.permute.xlu0 %4286
    %4288 = vrot.lane.b32.xlu0 %v4251, 64
    %v4289 = vpop.permute.xlu0 %4288
    %4290 = vrot.lane.b32.xlu0 %v4254, 64
    %v4291 = vpop.permute.xlu0 %4290
    %4292 = vrot.lane.b32.xlu0 %v4257, 64
    %v4293 = vpop.permute.xlu0 %4292
    %4294 = vrot.lane.b32.xlu0 %v4260, 64
    %v4295 = vpop.permute.xlu0 %4294
    %4296 = vrot.lane.b32.xlu0 %v4263, 64
    %v4297 = vpop.permute.xlu0 %4296
    %4298 = vrot.lane.b32.xlu0 %v4266, 64
    %v4299 = vpop.permute.xlu0 %4298
    %4300 = vrot.lane.b32.xlu0 %v4269, 64
    %v4301 = vpop.permute.xlu0 %4300
    %v4304 = vsel %vm1049, %v4078, %v4095
    %v4307 = vsel %vm1049, %v4079, %v4097
    %v4310 = vsel %vm1049, %v4080, %v4099
    %v4313 = vsel %vm1049, %v4081, %v4101
    %v4316 = vsel %vm1049, %v4082, %v4103
    %v4319 = vsel %vm1049, %v4083, %v4105
    %v4322 = vsel %vm1049, %v4084, %v4107
    %v4325 = vsel %vm1049, %v4085, %v4109
    %v4328 = vsel %vm1049, %v4086, %v4111
    %v4331 = vsel %vm1049, %v4087, %v4113
    %v4334 = vsel %vm1049, %v4088, %v4115
    %v4337 = vsel %vm1049, %v4089, %v4117
    %v4340 = vsel %vm1049, %v4090, %v4119
    %v4343 = vsel %vm1049, %v4091, %v4121
    %v4346 = vsel %vm1049, %v4092, %v4123
    %v4349 = vsel %vm1049, %v4093, %v4125
    %v4351 = vsel %vm1098, %v4304, %v4271
    %v4353 = vsel %vm1098, %v4307, %v4273
    %v4355 = vsel %vm1098, %v4310, %v4275
    %v4357 = vsel %vm1098, %v4313, %v4277
    %v4359 = vsel %vm1098, %v4316, %v4279
    %v4361 = vsel %vm1098, %v4319, %v4281
    %v4363 = vsel %vm1098, %v4322, %v4283
    %v4365 = vsel %vm1098, %v4325, %v4285
    %v4367 = vsel %vm1098, %v4328, %v4287
    %v4369 = vsel %vm1098, %v4331, %v4289
    %v4371 = vsel %vm1098, %v4334, %v4291
    %v4373 = vsel %vm1098, %v4337, %v4293
    %v4375 = vsel %vm1098, %v4340, %v4295
    %v4377 = vsel %vm1098, %v4343, %v4297
    %v4379 = vsel %vm1098, %v4346, %v4299
    %v4381 = vsel %vm1098, %v4349, %v4301
    %s4382 = scalar_lea.vmem %s1, 96
    %v4383 = vld [vmem:[%s4382] sm:$0xf]
    %v4384 = vld [vmem:[%s4382 + $0x4] sm:$0xf]
    %v4385 = vld [vmem:[%s4382 + $0x8] sm:$0xf]
    %v4386 = vld [vmem:[%s4382 + $0xc] sm:$0xf]
    %v4387 = vld [vmem:[%s4382 + $0x10] sm:$0xf]
    %v4388 = vld [vmem:[%s4382 + $0x14] sm:$0xf]
    %v4389 = vld [vmem:[%s4382 + $0x18] sm:$0xf]
    %v4390 = vld [vmem:[%s4382 + $0x1c] sm:$0xf]
    %v4391 = vld [vmem:[%s4382 + $0x20] sm:$0xf]
    %v4392 = vld [vmem:[%s4382 + $0x24] sm:$0xf]
    %v4393 = vld [vmem:[%s4382 + $0x28] sm:$0xf]
    %v4394 = vld [vmem:[%s4382 + $0x2c] sm:$0xf]
    %s4395 = scalar_lea.vmem %s2, 2
    %v4396 = vld [vmem:[%s4395] sm:$0x1]
    %v4398 = vlaneseq
    %v4399 = vshrl.u32 %v4398, 7
    %v4400 = vsub.s32 0, %v4399
    %v4401 = vrot.slane %v4396, %v4400
    %v4415 = vunpack.c.l.b16 %v4383
    %v4416 = vunpack.c.l.b16 %v4384
    %v4417 = vunpack.c.l.b16 %v4385
    %v4418 = vunpack.c.l.b16 %v4386
    %v4419 = vunpack.c.l.b16 %v4387
    %v4420 = vunpack.c.l.b16 %v4388
    %v4421 = vunpack.c.l.b16 %v4389
    %v4422 = vunpack.c.l.b16 %v4390
    %v4423 = vunpack.c.l.b16 %v4391
    %v4424 = vunpack.c.l.b16 %v4392
    %v4425 = vunpack.c.l.b16 %v4393
    %v4426 = vunpack.c.l.b16 %v4394
    %v4427 = vpack.c.b16 %v4416, %v4415
    %v4428 = vpack.c.b16 %v4418, %v4417
    %v4429 = vpack.c.b16 %v4420, %v4419
    %v4430 = vpack.c.b16 %v4422, %v4421
    %v4431 = vpack.c.b16 %v4424, %v4423
    %v4432 = vpack.c.b16 %v4426, %v4425
    %v4439 = vsel %vm1186, %v4351, 0
    %v4441 = vsel %vm1186, %v4353, 0
    %v4443 = vsel %vm1186, %v4355, 0
    %v4445 = vsel %vm1186, %v4357, 0
    %v4447 = vsel %vm1186, %v4359, 0
    %v4449 = vsel %vm1186, %v4361, 0
    %v4451 = vsel %vm1186, %v4363, 0
    %v4453 = vsel %vm1186, %v4365, 0
    %v4455 = vsel %vm1186, %v4367, 0
    %v4457 = vsel %vm1186, %v4369, 0
    %v4459 = vsel %vm1186, %v4371, 0
    %v4461 = vsel %vm1186, %v4373, 0
    %v4463 = vsel %vm1186, %v4375, 0
    %v4465 = vsel %vm1186, %v4377, 0
    %v4467 = vsel %vm1186, %v4379, 0
    %v4469 = vsel %vm1186, %v4381, 0
    %4471 = vmatprep.subr.bf16.mxu0 0
    %4472 = vmatpush1.bf16.msra.mxu0 %v4427
    %4473 = vmatprep.subr.bf16.mxu0 0
    %4474 = vmatpush1.bf16.msra.mxu0 %v4428
    %4475 = vmatprep.subr.bf16.mxu0 0
    %4476 = vmatpush1.bf16.msra.mxu0 %v4429
    %4477 = vmatprep.subr.bf16.mxu0 0
    %4478 = vmatpush1.bf16.msra.mxu0 %v4430
    %4479 = vmatprep.subr.bf16.mxu0 0
    %4480 = vmatpush1.bf16.msra.mxu0 %v4431
    %4481 = vmatprep.subr.bf16.mxu0 0
    %4482 = vmatpush1.bf16.msra.mxu0 %v4432
    %4483 = vmatprep.subr.bf16.mxu0 0
    %4484 = vmatpush1.bf16.msra.mxu0 0
    %4485 = vmatprep.subr.bf16.mxu0 0
    %4486 = vmatpush1.bf16.msra.mxu0 0
    %4487 = vmatprep.subr.bf16.mxu0 0
    %4488 = vmatpush1.bf16.msra.mxu0 0
    %4489 = vmatprep.subr.bf16.mxu0 0
    %4490 = vmatpush1.bf16.msra.mxu0 0
    %4491 = vmatprep.subr.bf16.mxu0 0
    %4492 = vmatpush1.bf16.msra.mxu0 0
    %4493 = vmatprep.subr.bf16.mxu0 0
    %4494 = vmatpush1.bf16.msra.mxu0 0
    %4495 = vmatprep.subr.bf16.mxu0 0
    %4496 = vmatpush1.bf16.msra.mxu0 0
    %4497 = vmatprep.subr.bf16.mxu0 0
    %4498 = vmatpush1.bf16.msra.mxu0 0
    %4499 = vmatprep.subr.bf16.mxu0 0
    %4500 = vmatpush1.bf16.msra.mxu0 0
    %4501 = vmatprep.subr.bf16.mxu0 0
    %4502 = vmatpush1.bf16.msra.mxu0 0
    %4503 = vmatprep.mubr.bf16.mxu0 0
    %4504 = vmatmul.mubr.bf16.gmra.mrb[0].mxu0 %v4439
    %v4505 = vpop.f32.mrb[0].mxu0
    %v4506 = vadd.f32 %v4401, %v4505
    %v4507 = vpop.f32.mrb[0].mxu0
    %v4508 = vpop.f32.mrb[0].mxu0
    %v4509 = vadd.f32 %v4401, %v4508
    %v4510 = vpop.f32.mrb[0].mxu0
    %4511 = vmatprep.mubr.bf16.mxu0 0
    %4512 = vmatmul.mubr.bf16.gmra.mrb[0].mxu0 %v4441
    %v4513 = vpop.f32.mrb[0].mxu0
    %v4514 = vadd.f32 %v4401, %v4513
    %v4515 = vpop.f32.mrb[0].mxu0
    %v4516 = vpop.f32.mrb[0].mxu0
    %v4517 = vadd.f32 %v4401, %v4516
    %v4518 = vpop.f32.mrb[0].mxu0
    %4519 = vmatprep.mubr.bf16.mxu0 0
    %4520 = vmatmul.mubr.bf16.gmra.mrb[0].mxu0 %v4443
    %v4521 = vpop.f32.mrb[0].mxu0
    %v4522 = vadd.f32 %v4401, %v4521
    %v4523 = vpop.f32.mrb[0].mxu0
    %v4524 = vpop.f32.mrb[0].mxu0
    %v4525 = vadd.f32 %v4401, %v4524
    %v4526 = vpop.f32.mrb[0].mxu0
    %4527 = vmatprep.mubr.bf16.mxu0 0
    %4528 = vmatmul.mubr.bf16.gmra.mrb[0].mxu0 %v4445
    %v4529 = vpop.f32.mrb[0].mxu0
    %v4530 = vadd.f32 %v4401, %v4529
    %v4531 = vpop.f32.mrb[0].mxu0
    %v4532 = vpop.f32.mrb[0].mxu0
    %v4533 = vadd.f32 %v4401, %v4532
    %v4534 = vpop.f32.mrb[0].mxu0
    %4535 = vmatprep.mubr.bf16.mxu0 0
    %4536 = vmatmul.mubr.bf16.gmra.mrb[0].mxu0 %v4447
    %v4537 = vpop.f32.mrb[0].mxu0
    %v4538 = vadd.f32 %v4401, %v4537
    %v4539 = vpop.f32.mrb[0].mxu0
    %v4540 = vpop.f32.mrb[0].mxu0
    %v4541 = vadd.f32 %v4401, %v4540
    %v4542 = vpop.f32.mrb[0].mxu0
    %4543 = vmatprep.mubr.bf16.mxu0 0
    %4544 = vmatmul.mubr.bf16.gmra.mrb[0].mxu0 %v4449
    %v4545 = vpop.f32.mrb[0].mxu0
    %v4546 = vadd.f32 %v4401, %v4545
    %v4547 = vpop.f32.mrb[0].mxu0
    %v4548 = vpop.f32.mrb[0].mxu0
    %v4549 = vadd.f32 %v4401, %v4548
    %v4550 = vpop.f32.mrb[0].mxu0
    %4551 = vmatprep.mubr.bf16.mxu0 0
    %4552 = vmatmul.mubr.bf16.gmra.mrb[0].mxu0 %v4451
    %v4553 = vpop.f32.mrb[0].mxu0
    %v4554 = vadd.f32 %v4401, %v4553
    %v4555 = vpop.f32.mrb[0].mxu0
    %v4556 = vpop.f32.mrb[0].mxu0
    %v4557 = vadd.f32 %v4401, %v4556
    %v4558 = vpop.f32.mrb[0].mxu0
    %4559 = vmatprep.mubr.bf16.mxu0 0
    %4560 = vmatmul.mubr.bf16.gmra.mrb[0].mxu0 %v4453
    %v4561 = vpop.f32.mrb[0].mxu0
    %v4562 = vadd.f32 %v4401, %v4561
    %v4563 = vpop.f32.mrb[0].mxu0
    %v4564 = vpop.f32.mrb[0].mxu0
    %v4565 = vadd.f32 %v4401, %v4564
    %v4566 = vpop.f32.mrb[0].mxu0
    %4567 = vmatprep.mubr.bf16.mxu0 0
    %4568 = vmatmul.mubr.bf16.gmra.mrb[0].mxu0 %v4455
    %v4569 = vpop.f32.mrb[0].mxu0
    %v4570 = vadd.f32 %v4401, %v4569
    %v4571 = vpop.f32.mrb[0].mxu0
    %v4572 = vpop.f32.mrb[0].mxu0
    %v4573 = vadd.f32 %v4401, %v4572
    %v4574 = vpop.f32.mrb[0].mxu0
    %4575 = vmatprep.mubr.bf16.mxu0 0
    %4576 = vmatmul.mubr.bf16.gmra.mrb[0].mxu0 %v4457
    %v4577 = vpop.f32.mrb[0].mxu0
    %v4578 = vadd.f32 %v4401, %v4577
    %v4579 = vpop.f32.mrb[0].mxu0
    %v4580 = vpop.f32.mrb[0].mxu0
    %v4581 = vadd.f32 %v4401, %v4580
    %v4582 = vpop.f32.mrb[0].mxu0
    %4583 = vmatprep.mubr.bf16.mxu0 0
    %4584 = vmatmul.mubr.bf16.gmra.mrb[0].mxu0 %v4459
    %v4585 = vpop.f32.mrb[0].mxu0
    %v4586 = vadd.f32 %v4401, %v4585
    %v4587 = vpop.f32.mrb[0].mxu0
    %v4588 = vpop.f32.mrb[0].mxu0
    %v4589 = vadd.f32 %v4401, %v4588
    %v4590 = vpop.f32.mrb[0].mxu0
    %4591 = vmatprep.mubr.bf16.mxu0 0
    %4592 = vmatmul.mubr.bf16.gmra.mrb[0].mxu0 %v4461
    %v4593 = vpop.f32.mrb[0].mxu0
    %v4594 = vadd.f32 %v4401, %v4593
    %v4595 = vpop.f32.mrb[0].mxu0
    %v4596 = vpop.f32.mrb[0].mxu0
    %v4597 = vadd.f32 %v4401, %v4596
    %v4598 = vpop.f32.mrb[0].mxu0
    %4599 = vmatprep.mubr.bf16.mxu0 0
    %4600 = vmatmul.mubr.bf16.gmra.mrb[0].mxu0 %v4463
    %v4601 = vpop.f32.mrb[0].mxu0
    %v4602 = vadd.f32 %v4401, %v4601
    %v4603 = vpop.f32.mrb[0].mxu0
    %v4604 = vpop.f32.mrb[0].mxu0
    %v4605 = vadd.f32 %v4401, %v4604
    %v4606 = vpop.f32.mrb[0].mxu0
    %4607 = vmatprep.mubr.bf16.mxu0 0
    %4608 = vmatmul.mubr.bf16.gmra.mrb[0].mxu0 %v4465
    %v4609 = vpop.f32.mrb[0].mxu0
    %v4610 = vadd.f32 %v4401, %v4609
    %v4611 = vpop.f32.mrb[0].mxu0
    %v4612 = vpop.f32.mrb[0].mxu0
    %v4613 = vadd.f32 %v4401, %v4612
    %v4614 = vpop.f32.mrb[0].mxu0
    %4615 = vmatprep.mubr.bf16.mxu0 0
    %4616 = vmatmul.mubr.bf16.gmra.mrb[0].mxu0 %v4467
    %v4617 = vpop.f32.mrb[0].mxu0
    %v4618 = vadd.f32 %v4401, %v4617
    %v4619 = vpop.f32.mrb[0].mxu0
    %v4620 = vpop.f32.mrb[0].mxu0
    %v4621 = vadd.f32 %v4401, %v4620
    %v4622 = vpop.f32.mrb[0].mxu0
    %4623 = vmatprep.mubr.bf16.mxu0 0
    %4624 = vmatmul.mubr.bf16.gmra.mrb[0].mxu0 %v4469
    %v4625 = vpop.f32.mrb[0].mxu0
    %v4626 = vadd.f32 %v4401, %v4625
    %v4627 = vpop.f32.mrb[0].mxu0
    %v4628 = vpop.f32.mrb[0].mxu0
    %v4629 = vadd.f32 %v4401, %v4628
    %v4630 = vpop.f32.mrb[0].mxu0
    %4631 = vdwg.mxu0
    %v4632 = vxor.u32 %v4506, 2147483648
    %v4633 = vxor.u32 %v4509, 2147483648
    %v4634 = vxor.u32 %v4514, 2147483648
    %v4635 = vxor.u32 %v4517, 2147483648
    %v4636 = vxor.u32 %v4522, 2147483648
    %v4637 = vxor.u32 %v4525, 2147483648
    %v4638 = vxor.u32 %v4530, 2147483648
    %v4639 = vxor.u32 %v4533, 2147483648
    %v4640 = vxor.u32 %v4538, 2147483648
    %v4641 = vxor.u32 %v4541, 2147483648
    %v4642 = vxor.u32 %v4546, 2147483648
    %v4643 = vxor.u32 %v4549, 2147483648
    %v4644 = vxor.u32 %v4554, 2147483648
    %v4645 = vxor.u32 %v4557, 2147483648
    %v4646 = vxor.u32 %v4562, 2147483648
    %v4647 = vxor.u32 %v4565, 2147483648
    %v4648 = vxor.u32 %v4570, 2147483648
    %v4649 = vxor.u32 %v4573, 2147483648
    %v4650 = vxor.u32 %v4578, 2147483648
    %v4651 = vxor.u32 %v4581, 2147483648
    %v4652 = vxor.u32 %v4586, 2147483648
    %v4653 = vxor.u32 %v4589, 2147483648
    %v4654 = vxor.u32 %v4594, 2147483648
    %v4655 = vxor.u32 %v4597, 2147483648
    %v4656 = vxor.u32 %v4602, 2147483648
    %v4657 = vxor.u32 %v4605, 2147483648
    %v4658 = vxor.u32 %v4610, 2147483648
    %v4659 = vxor.u32 %v4613, 2147483648
    %v4660 = vxor.u32 %v4618, 2147483648
    %v4661 = vxor.u32 %v4621, 2147483648
    %v4662 = vxor.u32 %v4626, 2147483648
    %v4663 = vxor.u32 %v4629, 2147483648
    %v4664 = vmul.f32 %v4632, 1.442695
    %v4665 = vpow.pop %v4664
    %v4666 = vmul.f32 %v4633, 1.442695
    %v4667 = vpow.pop %v4666
    %v4668 = vmul.f32 %v4634, 1.442695
    %v4669 = vpow.pop %v4668
    %v4670 = vmul.f32 %v4635, 1.442695
    %v4671 = vpow.pop %v4670
    %v4672 = vmul.f32 %v4636, 1.442695
    %v4673 = vpow.pop %v4672
    %v4674 = vmul.f32 %v4637, 1.442695
    %v4675 = vpow.pop %v4674
    %v4676 = vmul.f32 %v4638, 1.442695
    %v4677 = vpow.pop %v4676
    %v4678 = vmul.f32 %v4639, 1.442695
    %v4679 = vpow.pop %v4678
    %v4680 = vmul.f32 %v4640, 1.442695
    %v4681 = vpow.pop %v4680
    %v4682 = vmul.f32 %v4641, 1.442695
    %v4683 = vpow.pop %v4682
    %v4684 = vmul.f32 %v4642, 1.442695
    %v4685 = vpow.pop %v4684
    %v4686 = vmul.f32 %v4643, 1.442695
    %v4687 = vpow.pop %v4686
    %v4688 = vmul.f32 %v4644, 1.442695
    %v4689 = vpow.pop %v4688
    %v4690 = vmul.f32 %v4645, 1.442695
    %v4691 = vpow.pop %v4690
    %v4692 = vmul.f32 %v4646, 1.442695
    %v4693 = vpow.pop %v4692
    %v4694 = vmul.f32 %v4647, 1.442695
    %v4695 = vpow.pop %v4694
    %v4696 = vmul.f32 %v4648, 1.442695
    %v4697 = vpow.pop %v4696
    %v4698 = vmul.f32 %v4649, 1.442695
    %v4699 = vpow.pop %v4698
    %v4700 = vmul.f32 %v4650, 1.442695
    %v4701 = vpow.pop %v4700
    %v4702 = vmul.f32 %v4651, 1.442695
    %v4703 = vpow.pop %v4702
    %v4704 = vmul.f32 %v4652, 1.442695
    %v4705 = vpow.pop %v4704
    %v4706 = vmul.f32 %v4653, 1.442695
    %v4707 = vpow.pop %v4706
    %v4708 = vmul.f32 %v4654, 1.442695
    %v4709 = vpow.pop %v4708
    %v4710 = vmul.f32 %v4655, 1.442695
    %v4711 = vpow.pop %v4710
    %v4712 = vmul.f32 %v4656, 1.442695
    %v4713 = vpow.pop %v4712
    %v4714 = vmul.f32 %v4657, 1.442695
    %v4715 = vpow.pop %v4714
    %v4716 = vmul.f32 %v4658, 1.442695
    %v4717 = vpow.pop %v4716
    %v4718 = vmul.f32 %v4659, 1.442695
    %v4719 = vpow.pop %v4718
    %v4720 = vmul.f32 %v4660, 1.442695
    %v4721 = vpow.pop %v4720
    %v4722 = vmul.f32 %v4661, 1.442695
    %v4723 = vpow.pop %v4722
    %v4724 = vmul.f32 %v4662, 1.442695
    %v4725 = vpow.pop %v4724
    %v4726 = vmul.f32 %v4663, 1.442695
    %v4727 = vpow.pop %v4726
    %v4728 = vadd.f32 %v4665, 1.0
    %v4729 = vadd.f32 %v4667, 1.0
    %v4730 = vadd.f32 %v4669, 1.0
    %v4731 = vadd.f32 %v4671, 1.0
    %v4732 = vadd.f32 %v4673, 1.0
    %v4733 = vadd.f32 %v4675, 1.0
    %v4734 = vadd.f32 %v4677, 1.0
    %v4735 = vadd.f32 %v4679, 1.0
    %v4736 = vadd.f32 %v4681, 1.0
    %v4737 = vadd.f32 %v4683, 1.0
    %v4738 = vadd.f32 %v4685, 1.0
    %v4739 = vadd.f32 %v4687, 1.0
    %v4740 = vadd.f32 %v4689, 1.0
    %v4741 = vadd.f32 %v4691, 1.0
    %v4742 = vadd.f32 %v4693, 1.0
    %v4743 = vadd.f32 %v4695, 1.0
    %v4744 = vadd.f32 %v4697, 1.0
    %v4745 = vadd.f32 %v4699, 1.0
    %v4746 = vadd.f32 %v4701, 1.0
    %v4747 = vadd.f32 %v4703, 1.0
    %v4748 = vadd.f32 %v4705, 1.0
    %v4749 = vadd.f32 %v4707, 1.0
    %v4750 = vadd.f32 %v4709, 1.0
    %v4751 = vadd.f32 %v4711, 1.0
    %v4752 = vadd.f32 %v4713, 1.0
    %v4753 = vadd.f32 %v4715, 1.0
    %v4754 = vadd.f32 %v4717, 1.0
    %v4755 = vadd.f32 %v4719, 1.0
    %v4756 = vadd.f32 %v4721, 1.0
    %v4757 = vadd.f32 %v4723, 1.0
    %v4758 = vadd.f32 %v4725, 1.0
    %v4759 = vadd.f32 %v4727, 1.0
    %v4760 = vrcp.pop %v4728
    %v4761 = vmul.f32 1.0, %v4760
    %v4762 = vrcp.pop %v4729
    %v4763 = vmul.f32 1.0, %v4762
    %v4764 = vrcp.pop %v4730
    %v4765 = vmul.f32 1.0, %v4764
    %v4766 = vrcp.pop %v4731
    %v4767 = vmul.f32 1.0, %v4766
    %v4768 = vrcp.pop %v4732
    %v4769 = vmul.f32 1.0, %v4768
    %v4770 = vrcp.pop %v4733
    %v4771 = vmul.f32 1.0, %v4770
    %v4772 = vrcp.pop %v4734
    %v4773 = vmul.f32 1.0, %v4772
    %v4774 = vrcp.pop %v4735
    %v4775 = vmul.f32 1.0, %v4774
    %v4776 = vrcp.pop %v4736
    %v4777 = vmul.f32 1.0, %v4776
    %v4778 = vrcp.pop %v4737
    %v4779 = vmul.f32 1.0, %v4778
    %v4780 = vrcp.pop %v4738
    %v4781 = vmul.f32 1.0, %v4780
    %v4782 = vrcp.pop %v4739
    %v4783 = vmul.f32 1.0, %v4782
    %v4784 = vrcp.pop %v4740
    %v4785 = vmul.f32 1.0, %v4784
    %v4786 = vrcp.pop %v4741
    %v4787 = vmul.f32 1.0, %v4786
    %v4788 = vrcp.pop %v4742
    %v4789 = vmul.f32 1.0, %v4788
    %v4790 = vrcp.pop %v4743
    %v4791 = vmul.f32 1.0, %v4790
    %v4792 = vrcp.pop %v4744
    %v4793 = vmul.f32 1.0, %v4792
    %v4794 = vrcp.pop %v4745
    %v4795 = vmul.f32 1.0, %v4794
    %v4796 = vrcp.pop %v4746
    %v4797 = vmul.f32 1.0, %v4796
    %v4798 = vrcp.pop %v4747
    %v4799 = vmul.f32 1.0, %v4798
    %v4800 = vrcp.pop %v4748
    %v4801 = vmul.f32 1.0, %v4800
    %v4802 = vrcp.pop %v4749
    %v4803 = vmul.f32 1.0, %v4802
    %v4804 = vrcp.pop %v4750
    %v4805 = vmul.f32 1.0, %v4804
    %v4806 = vrcp.pop %v4751
    %v4807 = vmul.f32 1.0, %v4806
    %v4808 = vrcp.pop %v4752
    %v4809 = vmul.f32 1.0, %v4808
    %v4810 = vrcp.pop %v4753
    %v4811 = vmul.f32 1.0, %v4810
    %v4812 = vrcp.pop %v4754
    %v4813 = vmul.f32 1.0, %v4812
    %v4814 = vrcp.pop %v4755
    %v4815 = vmul.f32 1.0, %v4814
    %v4816 = vrcp.pop %v4756
    %v4817 = vmul.f32 1.0, %v4816
    %v4818 = vrcp.pop %v4757
    %v4819 = vmul.f32 1.0, %v4818
    %v4820 = vrcp.pop %v4758
    %v4821 = vmul.f32 1.0, %v4820
    %v4822 = vrcp.pop %v4759
    %v4823 = vmul.f32 1.0, %v4822
    %4856 = vrot.lane.b32.xlu0 %v4761, 96
    %v4857 = vpop.permute.xlu0 %4856
    %4858 = vrot.lane.b32.xlu0 %v4763, 96
    %v4859 = vpop.permute.xlu0 %4858
    %4860 = vrot.lane.b32.xlu0 %v4765, 96
    %v4861 = vpop.permute.xlu0 %4860
    %4862 = vrot.lane.b32.xlu0 %v4767, 96
    %v4863 = vpop.permute.xlu0 %4862
    %4864 = vrot.lane.b32.xlu0 %v4769, 96
    %v4865 = vpop.permute.xlu0 %4864
    %4866 = vrot.lane.b32.xlu0 %v4771, 96
    %v4867 = vpop.permute.xlu0 %4866
    %4868 = vrot.lane.b32.xlu0 %v4773, 96
    %v4869 = vpop.permute.xlu0 %4868
    %4870 = vrot.lane.b32.xlu0 %v4775, 96
    %v4871 = vpop.permute.xlu0 %4870
    %4872 = vrot.lane.b32.xlu0 %v4777, 96
    %v4873 = vpop.permute.xlu0 %4872
    %4874 = vrot.lane.b32.xlu0 %v4779, 96
    %v4875 = vpop.permute.xlu0 %4874
    %4876 = vrot.lane.b32.xlu0 %v4781, 96
    %v4877 = vpop.permute.xlu0 %4876
    %4878 = vrot.lane.b32.xlu0 %v4783, 96
    %v4879 = vpop.permute.xlu0 %4878
    %4880 = vrot.lane.b32.xlu0 %v4785, 96
    %v4881 = vpop.permute.xlu0 %4880
    %4882 = vrot.lane.b32.xlu0 %v4787, 96
    %v4883 = vpop.permute.xlu0 %4882
    %4884 = vrot.lane.b32.xlu0 %v4789, 96
    %v4885 = vpop.permute.xlu0 %4884
    %4886 = vrot.lane.b32.xlu0 %v4791, 96
    %v4887 = vpop.permute.xlu0 %4886
    %4888 = vrot.lane.b32.xlu0 %v4793, 96
    %v4889 = vpop.permute.xlu0 %4888
    %4890 = vrot.lane.b32.xlu0 %v4795, 96
    %v4891 = vpop.permute.xlu0 %4890
    %4892 = vrot.lane.b32.xlu0 %v4797, 96
    %v4893 = vpop.permute.xlu0 %4892
    %4894 = vrot.lane.b32.xlu0 %v4799, 96
    %v4895 = vpop.permute.xlu0 %4894
    %4896 = vrot.lane.b32.xlu0 %v4801, 96
    %v4897 = vpop.permute.xlu0 %4896
    %4898 = vrot.lane.b32.xlu0 %v4803, 96
    %v4899 = vpop.permute.xlu0 %4898
    %4900 = vrot.lane.b32.xlu0 %v4805, 96
    %v4901 = vpop.permute.xlu0 %4900
    %4902 = vrot.lane.b32.xlu0 %v4807, 96
    %v4903 = vpop.permute.xlu0 %4902
    %4904 = vrot.lane.b32.xlu0 %v4809, 96
    %v4905 = vpop.permute.xlu0 %4904
    %4906 = vrot.lane.b32.xlu0 %v4811, 96
    %v4907 = vpop.permute.xlu0 %4906
    %4908 = vrot.lane.b32.xlu0 %v4813, 96
    %v4909 = vpop.permute.xlu0 %4908
    %4910 = vrot.lane.b32.xlu0 %v4815, 96
    %v4911 = vpop.permute.xlu0 %4910
    %4912 = vrot.lane.b32.xlu0 %v4817, 96
    %v4913 = vpop.permute.xlu0 %4912
    %4914 = vrot.lane.b32.xlu0 %v4819, 96
    %v4915 = vpop.permute.xlu0 %4914
    %4916 = vrot.lane.b32.xlu0 %v4821, 96
    %v4917 = vpop.permute.xlu0 %4916
    %4918 = vrot.lane.b32.xlu0 %v4823, 96
    %v4919 = vpop.permute.xlu0 %4918
    %v4952 = vmul.f32 %v4506, %v4857
    %v4953 = vmul.f32 %v4509, %v4859
    %v4954 = vmul.f32 %v4514, %v4861
    %v4955 = vmul.f32 %v4517, %v4863
    %v4956 = vmul.f32 %v4522, %v4865
    %v4957 = vmul.f32 %v4525, %v4867
    %v4958 = vmul.f32 %v4530, %v4869
    %v4959 = vmul.f32 %v4533, %v4871
    %v4960 = vmul.f32 %v4538, %v4873
    %v4961 = vmul.f32 %v4541, %v4875
    %v4962 = vmul.f32 %v4546, %v4877
    %v4963 = vmul.f32 %v4549, %v4879
    %v4964 = vmul.f32 %v4554, %v4881
    %v4965 = vmul.f32 %v4557, %v4883
    %v4966 = vmul.f32 %v4562, %v4885
    %v4967 = vmul.f32 %v4565, %v4887
    %v4968 = vmul.f32 %v4570, %v4889
    %v4969 = vmul.f32 %v4573, %v4891
    %v4970 = vmul.f32 %v4578, %v4893
    %v4971 = vmul.f32 %v4581, %v4895
    %v4972 = vmul.f32 %v4586, %v4897
    %v4973 = vmul.f32 %v4589, %v4899
    %v4974 = vmul.f32 %v4594, %v4901
    %v4975 = vmul.f32 %v4597, %v4903
    %v4976 = vmul.f32 %v4602, %v4905
    %v4977 = vmul.f32 %v4605, %v4907
    %v4978 = vmul.f32 %v4610, %v4909
    %v4979 = vmul.f32 %v4613, %v4911
    %v4980 = vmul.f32 %v4618, %v4913
    %v4981 = vmul.f32 %v4621, %v4915
    %v4982 = vmul.f32 %v4626, %v4917
    %v4983 = vmul.f32 %v4629, %v4919
    %v4984 = vadd.f32 %v3390, %v4952
    %v4985 = vadd.f32 %v3391, %v4953
    %v4986 = vadd.f32 %v3392, %v4954
    %v4987 = vadd.f32 %v3393, %v4955
    %v4988 = vadd.f32 %v3394, %v4956
    %v4989 = vadd.f32 %v3395, %v4957
    %v4990 = vadd.f32 %v3396, %v4958
    %v4991 = vadd.f32 %v3397, %v4959
    %v4992 = vadd.f32 %v3398, %v4960
    %v4993 = vadd.f32 %v3399, %v4961
    %v4994 = vadd.f32 %v3400, %v4962
    %v4995 = vadd.f32 %v3401, %v4963
    %v4996 = vadd.f32 %v3402, %v4964
    %v4997 = vadd.f32 %v3403, %v4965
    %v4998 = vadd.f32 %v3404, %v4966
    %v4999 = vadd.f32 %v3405, %v4967
    %v5000 = vadd.f32 %v3406, %v4968
    %v5001 = vadd.f32 %v3407, %v4969
    %v5002 = vadd.f32 %v3408, %v4970
    %v5003 = vadd.f32 %v3409, %v4971
    %v5004 = vadd.f32 %v3410, %v4972
    %v5005 = vadd.f32 %v3411, %v4973
    %v5006 = vadd.f32 %v3412, %v4974
    %v5007 = vadd.f32 %v3413, %v4975
    %v5008 = vadd.f32 %v3414, %v4976
    %v5009 = vadd.f32 %v3415, %v4977
    %v5010 = vadd.f32 %v3416, %v4978
    %v5011 = vadd.f32 %v3417, %v4979
    %v5012 = vadd.f32 %v3418, %v4980
    %v5013 = vadd.f32 %v3419, %v4981
    %v5014 = vadd.f32 %v3420, %v4982
    %v5015 = vadd.f32 %v3421, %v4983
    %v5016 = vmul.f32 %v4984, 0.70710677
    %v5017 = vmul.f32 %v4985, 0.70710677
    %v5018 = vmul.f32 %v4986, 0.70710677
    %v5019 = vmul.f32 %v4987, 0.70710677
    %v5020 = vmul.f32 %v4988, 0.70710677
    %v5021 = vmul.f32 %v4989, 0.70710677
    %v5022 = vmul.f32 %v4990, 0.70710677
    %v5023 = vmul.f32 %v4991, 0.70710677
    %v5024 = vmul.f32 %v4992, 0.70710677
    %v5025 = vmul.f32 %v4993, 0.70710677
    %v5026 = vmul.f32 %v4994, 0.70710677
    %v5027 = vmul.f32 %v4995, 0.70710677
    %v5028 = vmul.f32 %v4996, 0.70710677
    %v5029 = vmul.f32 %v4997, 0.70710677
    %v5030 = vmul.f32 %v4998, 0.70710677
    %v5031 = vmul.f32 %v4999, 0.70710677
    %v5032 = vmul.f32 %v5000, 0.70710677
    %v5033 = vmul.f32 %v5001, 0.70710677
    %v5034 = vmul.f32 %v5002, 0.70710677
    %v5035 = vmul.f32 %v5003, 0.70710677
    %v5036 = vmul.f32 %v5004, 0.70710677
    %v5037 = vmul.f32 %v5005, 0.70710677
    %v5038 = vmul.f32 %v5006, 0.70710677
    %v5039 = vmul.f32 %v5007, 0.70710677
    %v5040 = vmul.f32 %v5008, 0.70710677
    %v5041 = vmul.f32 %v5009, 0.70710677
    %v5042 = vmul.f32 %v5010, 0.70710677
    %v5043 = vmul.f32 %v5011, 0.70710677
    %v5044 = vmul.f32 %v5012, 0.70710677
    %v5045 = vmul.f32 %v5013, 0.70710677
    %v5046 = vmul.f32 %v5014, 0.70710677
    %v5047 = vmul.f32 %v5015, 0.70710677
    %5048 = vst.msk [vmem:[#allocation6] sm:$0xff] %vm1049, %v5016
    %5049 = vst.msk [vmem:[#allocation6 + $0x8] sm:$0xff] %vm1049, %v5017
    %5050 = vst.msk [vmem:[#allocation6 + $0x10] sm:$0xff] %vm1049, %v5018
    %5051 = vst.msk [vmem:[#allocation6 + $0x18] sm:$0xff] %vm1049, %v5019
    %5052 = vst.msk [vmem:[#allocation6 + $0x20] sm:$0xff] %vm1049, %v5020
    %5053 = vst.msk [vmem:[#allocation6 + $0x28] sm:$0xff] %vm1049, %v5021
    %5054 = vst.msk [vmem:[#allocation6 + $0x30] sm:$0xff] %vm1049, %v5022
    %5055 = vst.msk [vmem:[#allocation6 + $0x38] sm:$0xff] %vm1049, %v5023
    %5056 = vst.msk [vmem:[#allocation6 + $0x40] sm:$0xff] %vm1049, %v5024
    %5057 = vst.msk [vmem:[#allocation6 + $0x48] sm:$0xff] %vm1049, %v5025
    %5058 = vst.msk [vmem:[#allocation6 + $0x50] sm:$0xff] %vm1049, %v5026
    %5059 = vst.msk [vmem:[#allocation6 + $0x58] sm:$0xff] %vm1049, %v5027
    %5060 = vst.msk [vmem:[#allocation6 + $0x60] sm:$0xff] %vm1049, %v5028
    %5061 = vst.msk [vmem:[#allocation6 + $0x68] sm:$0xff] %vm1049, %v5029
    %5062 = vst.msk [vmem:[#allocation6 + $0x70] sm:$0xff] %vm1049, %v5030
    %5063 = vst.msk [vmem:[#allocation6 + $0x78] sm:$0xff] %vm1049, %v5031
    %5064 = vst.msk [vmem:[#allocation6 + $0x80] sm:$0xff] %vm1049, %v5032
    %5065 = vst.msk [vmem:[#allocation6 + $0x88] sm:$0xff] %vm1049, %v5033
    %5066 = vst.msk [vmem:[#allocation6 + $0x90] sm:$0xff] %vm1049, %v5034
    %5067 = vst.msk [vmem:[#allocation6 + $0x98] sm:$0xff] %vm1049, %v5035
    %5068 = vst.msk [vmem:[#allocation6 + $0xa0] sm:$0xff] %vm1049, %v5036
    %5069 = vst.msk [vmem:[#allocation6 + $0xa8] sm:$0xff] %vm1049, %v5037
    %5070 = vst.msk [vmem:[#allocation6 + $0xb0] sm:$0xff] %vm1049, %v5038
    %5071 = vst.msk [vmem:[#allocation6 + $0xb8] sm:$0xff] %vm1049, %v5039
    %5072 = vst.msk [vmem:[#allocation6 + $0xc0] sm:$0xff] %vm1049, %v5040
    %5073 = vst.msk [vmem:[#allocation6 + $0xc8] sm:$0xff] %vm1049, %v5041
    %5074 = vst.msk [vmem:[#allocation6 + $0xd0] sm:$0xff] %vm1049, %v5042
    %5075 = vst.msk [vmem:[#allocation6 + $0xd8] sm:$0xff] %vm1049, %v5043
    %5076 = vst.msk [vmem:[#allocation6 + $0xe0] sm:$0xff] %vm1049, %v5044
    %5077 = vst.msk [vmem:[#allocation6 + $0xe8] sm:$0xff] %vm1049, %v5045
    %5078 = vst.msk [vmem:[#allocation6 + $0xf0] sm:$0xff] %vm1049, %v5046
    %5079 = vst.msk [vmem:[#allocation6 + $0xf8] sm:$0xff] %vm1049, %v5047
    // Predicated region
    $region18: #{tpu_custom_call.1} parent=1 // pred_check
      _
    $region19: #{tpu_custom_call.1} parent=1 // pred_check_branch
      %5081 = sbr.rel (0) target = $region21
    $region20: #{tpu_custom_call.1} parent=1 // pred_region
      %s5083 = ssub.s32 4096, 4096
      %5084 = vsyncadd [#allocation5], %s5083
      %s5085 = sshll.u32 [#allocation6], 4
      %s5086 = int_to_ptr.vmem [resolvable:$true] %s5085
      %5091 = dma.vmem_to_hbm [thread:$0]  %s5086, 4096, %s3, [#allocation5], 128, 128, 8
    $region21: #{tpu_custom_call.1} parent=1 // pred_fallthru
      _
    // Predicated region
    $region22: #{tpu_custom_call.1} parent=1 // pred_check
      _
    $region23: #{tpu_custom_call.1} parent=1 // pred_check_branch
      %5093 = sbr.rel (0) target = $region25
    $region24: #{tpu_custom_call.1} parent=1 // pred_region
      %5094 = dma.done [#allocation5], 4096
    $region25: #{tpu_custom_call.1} parent=1 // pred_fallthru
      _
    %5095 = vsyncpa [#allocation4], 1
    %5096 = vsyncpa [#allocation5], 1

</llo_original>
